<compile_context>
chip_gen: v7x
topology: tpu7x:2x2x1
jax: 0.10.0
libtpu: 0.0.40
codegen_flags: <defaults>
</compile_context>

<pallas_src>
import functools

import jax
import jax.numpy as jnp
import numpy as np
from jax import lax
from jax.experimental import pallas as pl
from jax.experimental.pallas import tpu as pltpu


# ----------------------------------------------------------------------------
# Fused kernel: posenc + linear colours + lambda/softmax weights + knn combine
#               + grouped per-cluster refinement MLP (Lin-ReLU-Lin-ReLU-Lin-Tanh)
# ----------------------------------------------------------------------------
def _fused_kernel(c_lo_ref, c_hi_ref,                       # scalar prefetch (SMEM)
                  x_ref, dist_ref, cid_ref, near_ref, lam_ref, scale_ref,
                  wlin_ref, w0_ref, w1_ref, w2_ref,
                  out_ref,
                  *, num_freqs, knn, num_clusters):
    # x_ref    : (D, T)       raw points, sorted by nearest cluster (points on lanes)
    # dist_ref : (C, T)       distance to every cluster centroid (sorted order)
    # cid_ref  : (knn, T)     knn cluster ids (int32, sorted order)
    # near_ref : (1, T)       nearest cluster id per point (int32, sorted order)
    # lam_ref  : (1, T)       lambdas[nearest] per point (f32)
    # scale_ref: (FD, 1)      2**f scale for angle row f*D+d
    # wlin_ref : (3C, 2FD)    channel-major linear weights [sin cols | cos cols], bf16
    # w0_ref   : (C, H, 3+2FD)  bf16
    # w1_ref   : (C, H, H)      bf16
    # w2_ref   : (C, 3, H)      bf16
    # out_ref  : (3, T)       final refined colours (f32)
    C = num_clusters
    i = pl.program_id(0)

    x = x_ref[...]
    dist = dist_ref[...]
    cid = cid_ref[...]
    near = near_ref[...]
    lam = lam_ref[...]
    scale = scale_ref[...]
    T = x.shape[1]

    # --- fused positional encoding (never materialized in HBM) ---------------
    ang = scale * jnp.concatenate([x] * num_freqs, axis=0)          # (FD, T)
    feat = jnp.concatenate([jnp.sin(ang), jnp.cos(ang)], axis=0)    # (2FD, T) f32
    feat_b = feat.astype(jnp.bfloat16)

    # --- all-cluster linear colours: one merged bf16 matmul ------------------
    # lin[k*C + c, n] = colour channel k of cluster c for point n
    lin = jnp.dot(wlin_ref[...], feat_b,
                  preferred_element_type=jnp.float32)               # (3C, T)

    # --- softmax cluster weights: softmax_c( lam * exp(-lam * dist) ) --------
    raw = lam * jnp.exp(-lam * dist)                                 # (C, T)
    m = jnp.max(raw, axis=0, keepdims=True)
    e = jnp.exp(raw - m)
    w = e * pl.reciprocal(jnp.sum(e, axis=0, keepdims=True), approx=True)

    # --- knn combine: rgb[k,n] = sum_j w[j,n] * lin[k*C + cid[j,n], n] -------
    iota_c = lax.broadcasted_iota(jnp.int32, (C, T), 0)
    a = jnp.zeros((C, T), jnp.float32)
    for j in range(knn):                                             # static unroll
        a = a + jnp.where(iota_c == cid[j:j + 1, :], w[j:j + 1, :], 0.0)
    rgb = jnp.concatenate(
        [jnp.sum(a * lin[k * C:(k + 1) * C, :], axis=0, keepdims=True)
         for k in range(3)], axis=0)                                 # (3, T)

    not_masked = jnp.logical_not((x[0:1, :] == -1.0) &
                                 (x[1:2, :] == -1.0) &
                                 (x[2:3, :] == -1.0))                # (1, T)

    # --- grouped refinement MLP: only clusters present in this (sorted) tile -
    inp = jnp.concatenate([rgb, feat], axis=0).astype(jnp.bfloat16)  # (3+2FD, T)
    out_ref[...] = jnp.zeros_like(out_ref)

    lo = c_lo_ref[i]
    hi = c_hi_ref[i]

    def body(c, carry):
        h = jnp.maximum(jnp.dot(w0_ref[c], inp,
                                preferred_element_type=jnp.float32), 0.0)
        h = h.astype(jnp.bfloat16)
        h = jnp.maximum(jnp.dot(w1_ref[c], h,
                                preferred_element_type=jnp.float32), 0.0)
        h = h.astype(jnp.bfloat16)
        oc = jnp.tanh(jnp.dot(w2_ref[c], h,
                              preferred_element_type=jnp.float32))   # (3, T)
        sel = jnp.logical_and(near == c, not_masked)                 # (1, T)
        out_ref[...] = jnp.where(sel, oc, out_ref[...])
        return carry

    lax.fori_loop(lo, hi + 1, body, 0)                               # 1-2 iters typ.


# ----------------------------------------------------------------------------
# Wrapper
# ----------------------------------------------------------------------------
@functools.partial(jax.jit, static_argnames=("num_freqs", "knn_clusters", "tile_n"))
def clusterised_linear_network_forward(X, cluster_ids, dist, linear_mappings,
                                       lambdas, mlp_w0, mlp_w1, mlp_w2,
                                       num_freqs=4, knn_clusters=3, tile_n=512):
    # X:               (N, D)      first 3 dims are xyz, (-1,-1,-1) rows are masked
    # cluster_ids:     (N, knn)    int, knn nearest cluster ids
    # dist:            (C, N)      distance to every cluster centroid
    # linear_mappings: (C, 3, E)   frozen linear colour maps, E = 2*D*num_freqs
    # lambdas:         (C,)
    # mlp_w0/w1/w2:    (C, H, 3+E), (C, H, H), (C, 3, H)  refinement MLP weights
    f32 = jnp.float32
    bf16 = jnp.bfloat16
    N, D = X.shape
    C = linear_mappings.shape[0]
    E = linear_mappings.shape[-1]
    FD = D * num_freqs
    assert E == 2 * FD

    X = X.astype(f32)
    dist = dist.astype(f32)

    # cheap XLA pre-pass: nearest cluster, per-point lambda, sort by cluster ---
    nearest = jnp.argmin(dist, axis=0).astype(jnp.int32)             # (N,)
    order = jnp.argsort(nearest)                                     # (N,)
    near_s = nearest[order]                                          # (N,)
    Xs = X.T[:, order]                                               # (D, N)  lane-dense
    dist_s = dist[:, order]                                          # (C, N)
    cid_s = cluster_ids.astype(jnp.int32).T[:, order]                # (knn, N)
    lam_s = lambdas.astype(f32)[near_s][None, :]                     # (1, N)
    near_s2 = near_s[None, :]                                        # (1, N)

    n_tiles = pl.cdiv(N, tile_n)
    starts = jnp.arange(n_tiles, dtype=jnp.int32) * tile_n
    ends = jnp.minimum(starts + (tile_n - 1), N - 1)
    c_lo = near_s[starts]                                            # (n_tiles,)
    c_hi = near_s[ends]                                              # (n_tiles,)

    scale_col = (2.0 ** (jnp.arange(FD) // D)).astype(f32).reshape(FD, 1)
    # channel-major merged linear weights: row k*C + c = linear_mappings[c, k]
    W_cm = jnp.transpose(linear_mappings.astype(f32), (1, 0, 2)).reshape(3 * C, E)
    W_cm = W_cm.astype(bf16)

    H = mlp_w0.shape[1]
    IN = mlp_w0.shape[2]

    out_sorted = pl.pallas_call(
        functools.partial(_fused_kernel, num_freqs=num_freqs, knn=knn_clusters,
                          num_clusters=C),
        out_shape=jax.ShapeDtypeStruct((3, N), f32),
        grid_spec=pltpu.PrefetchScalarGridSpec(
            num_scalar_prefetch=2,
            grid=(n_tiles,),
            in_specs=[
                pl.BlockSpec((D, tile_n), lambda i, lo, hi: (0, i)),
                pl.BlockSpec((C, tile_n), lambda i, lo, hi: (0, i)),
                pl.BlockSpec((knn_clusters, tile_n), lambda i, lo, hi: (0, i)),
                pl.BlockSpec((1, tile_n), lambda i, lo, hi: (0, i)),
                pl.BlockSpec((1, tile_n), lambda i, lo, hi: (0, i)),
                pl.BlockSpec((FD, 1), lambda i, lo, hi: (0, 0)),
                pl.BlockSpec((3 * C, E), lambda i, lo, hi: (0, 0)),
                pl.BlockSpec((C, H, IN), lambda i, lo, hi: (0, 0, 0)),
                pl.BlockSpec((C, H, H), lambda i, lo, hi: (0, 0, 0)),
                pl.BlockSpec((C, 3, H), lambda i, lo, hi: (0, 0, 0)),
            ],
            out_specs=pl.BlockSpec((3, tile_n), lambda i, lo, hi: (0, i)),
        ),
        compiler_params=pltpu.CompilerParams(
            dimension_semantics=("parallel",),
            vmem_limit_bytes=32 * 1024 * 1024),
    )(c_lo, c_hi, Xs, dist_s, cid_s, near_s2, lam_s, scale_col,
      W_cm, mlp_w0.astype(bf16), mlp_w1.astype(bf16), mlp_w2.astype(bf16))

    # un-permute back to the original point order; final shape (N, 3)
    return jnp.zeros((N, 3), f32).at[order].set(out_sorted.T)


# ----------------------------------------------------------------------------
# Pure-JAX reference mirroring the PyTorch forward (batch_size >= N), not jitted
# ----------------------------------------------------------------------------
def posenc_ref(x, num_freqs):
    # (N, D) -> (N, 2*D*F): columns [sin(2^f x_d)] (f-major) then [cos(2^f x_d)]
    scales = 2.0 ** jnp.arange(num_freqs, dtype=x.dtype)
    ang = (scales[None, :, None] * x[:, None, :]).reshape(x.shape[0], -1)
    return jnp.concatenate([jnp.sin(ang), jnp.cos(ang)], axis=-1)


def reference_forward(X, cluster_ids, dist, linear_mappings, lambdas,
                      mlp_w0, mlp_w1, mlp_w2, num_freqs, knn_clusters):
    N = X.shape[0]
    C = linear_mappings.shape[0]
    mask = (X[:, 0] == -1.0) & (X[:, 1] == -1.0) & (X[:, 2] == -1.0)
    keep = ~mask
    Xk = X[keep]
    enc = posenc_ref(Xk, num_freqs)                              # (Nk, E)
    cid = cluster_ids[keep]                                      # (Nk, knn)
    d = dist[:, keep]                                            # (C, Nk)
    nearest = jnp.argmin(d, axis=0)                              # (Nk,)
    lam = lambdas[nearest]                                       # (Nk,)
    w = jax.nn.softmax(lam[None, :] * jnp.exp(-lam[None, :] * d), axis=0)  # (C, Nk)

    Wlin = linear_mappings.reshape(-1, linear_mappings.shape[-1])          # (3C, E)
    rgb_tmp = (enc @ Wlin.T).reshape(enc.shape[0], C, 3)                   # (Nk, C, 3)
    rows = jnp.arange(enc.shape[0])
    rgb = jnp.zeros((enc.shape[0], 3), X.dtype)
    for j in range(knn_clusters):
        rgb = rgb + rgb_tmp[rows, cid[:, j]] * w[j][:, None]

    inp = jnp.concatenate([rgb, enc], axis=1)                    # (Nk, 3+E)
    out = jnp.zeros_like(rgb)
    for c in range(C):
        h = jax.nn.relu(inp @ mlp_w0[c].T)
        h = jax.nn.relu(h @ mlp_w1[c].T)
        oc = jnp.tanh(h @ mlp_w2[c].T)
        out = jnp.where((nearest == c)[:, None], oc, out)

    full = jnp.zeros((N, 3), X.dtype)
    full = full.at[jnp.nonzero(keep)[0]].set(out)
    return full


if __name__ == "__main__":
    # Small deterministic setup consistent with the module:
    #   D=3 coords, num_freqs=4 -> E=24, C=8 clusters, knn=3, MLP hidden 256
    N, D, F, C, knn, H = 4096, 3, 4, 8, 3, 256
    E = 2 * D * F
    IN = 3 + E

    key = jax.random.PRNGKey(0)
    kx, kc, kw, kl, k0, k1, k2 = jax.random.split(key, 7)
    X = jax.random.normal(kx, (N, D), dtype=jnp.float32)
    X = X.at[::37].set(-1.0)                                     # masked rows

    centroids = jax.random.normal(kc, (C, D), dtype=jnp.float32)
    dist = jnp.sqrt(jnp.sum((centroids[:, None, :] - X[None, :, :]) ** 2, axis=-1))  # (C, N)
    cluster_ids = jnp.argsort(dist, axis=0)[:knn].T.astype(jnp.int32)                # (N, knn)

    linear_mappings = jax.random.normal(kw, (C, 3, E), dtype=jnp.float32) * 0.1
    lambdas = 15.0 + jax.random.normal(kl, (C,), dtype=jnp.float32)
    mlp_w0 = jax.random.normal(k0, (C, H, IN), dtype=jnp.float32) / np.sqrt(IN)
    mlp_w1 = jax.random.normal(k1, (C, H, H), dtype=jnp.float32) / np.sqrt(H)
    mlp_w2 = jax.random.normal(k2, (C, 3, H), dtype=jnp.float32) / np.sqrt(H)

    out = clusterised_linear_network_forward(
        X, cluster_ids, dist, linear_mappings, lambdas,
        mlp_w0, mlp_w1, mlp_w2,
        num_freqs=F, knn_clusters=knn, tile_n=512)
    out = jax.block_until_ready(out)

    ref = reference_forward(X, cluster_ids, dist, linear_mappings, lambdas,
                            mlp_w0, mlp_w1, mlp_w2,
                            num_freqs=F, knn_clusters=knn)
    # tolerance accounts for bf16 MXU matmuls (f32 accumulation) and the
    # approx (EUP) reciprocal in the softmax vs the plain-f32 JAX reference.
    np.testing.assert_allclose(np.asarray(out), np.asarray(ref),
                               rtol=5e-2, atol=5e-2)
    print("KERNEL_OK")
</pallas_src>

<mosaic_0001>
module attributes {stable_mosaic.version = 11 : i64} {
  func.func private @main(%arg0: i32) attributes {dimension_semantics = [#tpu.dimension_semantics<core_parallel>], iteration_bounds = array<i64: 2>, tpu.core_type = #tpu.core_type<sc_scalar_subcore>, window_params = []} {
    return
  }
}

module attributes {stable_mosaic.version = 11 : i64} {
  func.func private @main(%arg0: i32) attributes {dimension_semantics = [#tpu.dimension_semantics<core_parallel>], iteration_bounds = array<i64: 2>, tpu.core_type = #tpu.core_type<sc_scalar_subcore>, window_params = []} {
    return
  }
}

module attributes {stable_mosaic.version = 11 : i64} {
  func.func @_fused_kernel(%arg0: i32, %arg1: memref<8xi32, #tpu.memory_space<smem>>, %arg2: memref<8xi32, #tpu.memory_space<smem>>, %arg3: memref<3x512xf32, #tpu.memory_space<vmem>>, %arg4: memref<8x512xf32, #tpu.memory_space<vmem>>, %arg5: memref<3x512xi32, #tpu.memory_space<vmem>>, %arg6: memref<1x512xi32, #tpu.memory_space<vmem>>, %arg7: memref<1x512xf32, #tpu.memory_space<vmem>>, %arg8: memref<12x1xf32, #tpu.memory_space<vmem>>, %arg9: memref<24x24xbf16, #tpu.memory_space<vmem>>, %arg10: memref<8x256x27xbf16, #tpu.memory_space<vmem>>, %arg11: memref<8x256x256xbf16, #tpu.memory_space<vmem>>, %arg12: memref<8x3x256xbf16, #tpu.memory_space<vmem>>, %arg13: memref<3x512xf32, #tpu.memory_space<vmem>>) attributes {dimension_semantics = [#tpu.dimension_semantics<parallel>], iteration_bounds = array<i64: 8>, scalar_prefetch = 2 : i64, scratch_operands = 0 : i64, tpu.core_type = #tpu.core_type<tc>, window_params = [{transform_indices = @transform_0, window_bounds = array<i64: 3, 512>}, {transform_indices = @transform_1, window_bounds = array<i64: 8, 512>}, {transform_indices = @transform_2, window_bounds = array<i64: 3, 512>}, {transform_indices = @transform_3, window_bounds = array<i64: 1, 512>}, {transform_indices = @transform_4, window_bounds = array<i64: 1, 512>}, {pipeline_mode = #tpu.pipeline_mode<synchronous>, transform_indices = @transform_5, window_bounds = array<i64: 12, 1>}, {pipeline_mode = #tpu.pipeline_mode<synchronous>, transform_indices = @transform_6, window_bounds = array<i64: 24, 24>}, {pipeline_mode = #tpu.pipeline_mode<synchronous>, transform_indices = @transform_7, window_bounds = array<i64: 8, 256, 27>}, {pipeline_mode = #tpu.pipeline_mode<synchronous>, transform_indices = @transform_8, window_bounds = array<i64: 8, 256, 256>}, {pipeline_mode = #tpu.pipeline_mode<synchronous>, transform_indices = @transform_9, window_bounds = array<i64: 8, 3, 256>}, {transform_indices = @transform_10, window_bounds = array<i64: 3, 512>}]} {
    %c0 = arith.constant 0 : index
    %c0_0 = arith.constant 0 : index
    %0 = vector.load %arg3[%c0, %c0_0] : memref<3x512xf32, #tpu.memory_space<vmem>>, vector<3x512xf32>
    %c0_1 = arith.constant 0 : index
    %c0_2 = arith.constant 0 : index
    %1 = vector.load %arg4[%c0_1, %c0_2] : memref<8x512xf32, #tpu.memory_space<vmem>>, vector<8x512xf32>
    %c0_3 = arith.constant 0 : index
    %c0_4 = arith.constant 0 : index
    %2 = vector.load %arg5[%c0_3, %c0_4] : memref<3x512xi32, #tpu.memory_space<vmem>>, vector<3x512xi32>
    %c0_5 = arith.constant 0 : index
    %c0_6 = arith.constant 0 : index
    %3 = vector.load %arg6[%c0_5, %c0_6] : memref<1x512xi32, #tpu.memory_space<vmem>>, vector<1x512xi32>
    %c0_7 = arith.constant 0 : index
    %c0_8 = arith.constant 0 : index
    %4 = vector.load %arg7[%c0_7, %c0_8] : memref<1x512xf32, #tpu.memory_space<vmem>>, vector<1x512xf32>
    %c0_9 = arith.constant 0 : index
    %c0_10 = arith.constant 0 : index
    %5 = vector.load %arg8[%c0_9, %c0_10] : memref<12x1xf32, #tpu.memory_space<vmem>>, vector<12x1xf32>
    %6 = tpu.concatenate %0, %0, %0, %0 in 0 : vector<3x512xf32>, vector<3x512xf32>, vector<3x512xf32>, vector<3x512xf32> -> vector<12x512xf32>
    %7 = vector.broadcast %5 : vector<12x1xf32> to vector<12x512xf32>
    %8 = arith.mulf %7, %6 : vector<12x512xf32>
    %9 = math.sin %8 : vector<12x512xf32>
    %10 = math.cos %8 : vector<12x512xf32>
    %11 = tpu.concatenate %9, %10 in 0 : vector<12x512xf32>, vector<12x512xf32> -> vector<24x512xf32>
    %12 = arith.truncf %11 : vector<24x512xf32> to vector<24x512xbf16>
    %c0_11 = arith.constant 0 : index
    %c0_12 = arith.constant 0 : index
    %13 = vector.load %arg9[%c0_11, %c0_12] : memref<24x24xbf16, #tpu.memory_space<vmem>>, vector<24x24xbf16>
    %cst = arith.constant dense<0.000000e+00> : vector<24x512xf32>
    %14 = tpu.matmul %13, %12, %cst {dimension_numbers = #tpu.dot_dimension_numbers<[1], [0], [0], [1], [0, 0, 1, 1], [], []>} : vector<24x24xbf16>, vector<24x512xbf16>, vector<24x512xf32> -> vector<24x512xf32>
    %cst_13 = arith.constant 0.000000e+00 : f32
    %15 = vector.broadcast %cst_13 : f32 to vector<1x512xf32>
    %16 = arith.subf %15, %4 : vector<1x512xf32>
    %17 = vector.broadcast %16 : vector<1x512xf32> to vector<8x512xf32>
    %18 = arith.mulf %17, %1 : vector<8x512xf32>
    %19 = math.exp %18 : vector<8x512xf32>
    %20 = vector.broadcast %4 : vector<1x512xf32> to vector<8x512xf32>
    %21 = arith.mulf %20, %19 : vector<8x512xf32>
    %cst_14 = arith.constant dense<0xFF800000> : vector<512xf32>
    %22 = vector.multi_reduction <maximumf>, %21, %cst_14 [0] : vector<8x512xf32> to vector<512xf32>
    %23 = vector.shape_cast %22 : vector<512xf32> to vector<1x512xf32>
    %24 = vector.broadcast %23 : vector<1x512xf32> to vector<8x512xf32>
    %25 = arith.subf %21, %24 : vector<8x512xf32>
    %26 = math.exp %25 : vector<8x512xf32>
    %cst_15 = arith.constant dense<0.000000e+00> : vector<512xf32>
    %27 = vector.multi_reduction <add>, %26, %cst_15 [0] : vector<8x512xf32> to vector<512xf32>
    %28 = vector.shape_cast %27 : vector<512xf32> to vector<1x512xf32>
    %29 = tpu.reciprocal %28 {approx = true} : vector<1x512xf32> -> vector<1x512xf32>
    %30 = vector.broadcast %29 : vector<1x512xf32> to vector<8x512xf32>
    %31 = arith.mulf %26, %30 : vector<8x512xf32>
    %32 = tpu.iota {dimensions = array<i32: 0>} : vector<8x512xi32>
    %cst_16 = arith.constant 0.000000e+00 : f32
    %33 = vector.broadcast %cst_16 : f32 to vector<8x512xf32>
    %34 = vector.extract_strided_slice %2 {offsets = [0, 0], sizes = [1, 512], strides = [1, 1]} : vector<3x512xi32> to vector<1x512xi32>
    %35 = vector.broadcast %34 : vector<1x512xi32> to vector<8x512xi32>
    %36 = arith.cmpi eq, %32, %35 : vector<8x512xi32>
    %37 = vector.extract_strided_slice %31 {offsets = [0, 0], sizes = [1, 512], strides = [1, 1]} : vector<8x512xf32> to vector<1x512xf32>
    %cst_17 = arith.constant 0.000000e+00 : f32
    %38 = vector.shape_cast %37 : vector<1x512xf32> to vector<1x512xf32>
    %39 = vector.broadcast %38 : vector<1x512xf32> to vector<8x512xf32>
    %40 = vector.broadcast %cst_17 : f32 to vector<8x512xf32>
    %41 = arith.select %36, %39, %40 : vector<8x512xi1>, vector<8x512xf32>
    %42 = arith.addf %33, %41 : vector<8x512xf32>
    %43 = vector.extract_strided_slice %2 {offsets = [1, 0], sizes = [1, 512], strides = [1, 1]} : vector<3x512xi32> to vector<1x512xi32>
    %44 = vector.broadcast %43 : vector<1x512xi32> to vector<8x512xi32>
    %45 = arith.cmpi eq, %32, %44 : vector<8x512xi32>
    %46 = vector.extract_strided_slice %31 {offsets = [1, 0], sizes = [1, 512], strides = [1, 1]} : vector<8x512xf32> to vector<1x512xf32>
    %cst_18 = arith.constant 0.000000e+00 : f32
    %47 = vector.shape_cast %46 : vector<1x512xf32> to vector<1x512xf32>
    %48 = vector.broadcast %47 : vector<1x512xf32> to vector<8x512xf32>
    %49 = vector.broadcast %cst_18 : f32 to vector<8x512xf32>
    %50 = arith.select %45, %48, %49 : vector<8x512xi1>, vector<8x512xf32>
    %51 = arith.addf %42, %50 : vector<8x512xf32>
    %52 = vector.extract_strided_slice %2 {offsets = [2, 0], sizes = [1, 512], strides = [1, 1]} : vector<3x512xi32> to vector<1x512xi32>
    %53 = vector.broadcast %52 : vector<1x512xi32> to vector<8x512xi32>
    %54 = arith.cmpi eq, %32, %53 : vector<8x512xi32>
    %55 = vector.extract_strided_slice %31 {offsets = [2, 0], sizes = [1, 512], strides = [1, 1]} : vector<8x512xf32> to vector<1x512xf32>
    %cst_19 = arith.constant 0.000000e+00 : f32
    %56 = vector.shape_cast %55 : vector<1x512xf32> to vector<1x512xf32>
    %57 = vector.broadcast %56 : vector<1x512xf32> to vector<8x512xf32>
    %58 = vector.broadcast %cst_19 : f32 to vector<8x512xf32>
    %59 = arith.select %54, %57, %58 : vector<8x512xi1>, vector<8x512xf32>
    %60 = arith.addf %51, %59 : vector<8x512xf32>
    %61 = vector.extract_strided_slice %14 {offsets = [0, 0], sizes = [8, 512], strides = [1, 1]} : vector<24x512xf32> to vector<8x512xf32>
    %62 = arith.mulf %60, %61 : vector<8x512xf32>
    %cst_20 = arith.constant dense<0.000000e+00> : vector<512xf32>
    %63 = vector.multi_reduction <add>, %62, %cst_20 [0] : vector<8x512xf32> to vector<512xf32>
    %64 = vector.shape_cast %63 : vector<512xf32> to vector<1x512xf32>
    %65 = vector.extract_strided_slice %14 {offsets = [8, 0], sizes = [8, 512], strides = [1, 1]} : vector<24x512xf32> to vector<8x512xf32>
    %66 = arith.mulf %60, %65 : vector<8x512xf32>
    %cst_21 = arith.constant dense<0.000000e+00> : vector<512xf32>
    %67 = vector.multi_reduction <add>, %66, %cst_21 [0] : vector<8x512xf32> to vector<512xf32>
    %68 = vector.shape_cast %67 : vector<512xf32> to vector<1x512xf32>
    %69 = vector.extract_strided_slice %14 {offsets = [16, 0], sizes = [8, 512], strides = [1, 1]} : vector<24x512xf32> to vector<8x512xf32>
    %70 = arith.mulf %60, %69 : vector<8x512xf32>
    %cst_22 = arith.constant dense<0.000000e+00> : vector<512xf32>
    %71 = vector.multi_reduction <add>, %70, %cst_22 [0] : vector<8x512xf32> to vector<512xf32>
    %72 = vector.shape_cast %71 : vector<512xf32> to vector<1x512xf32>
    %73 = tpu.concatenate %64, %68, %72 in 0 : vector<1x512xf32>, vector<1x512xf32>, vector<1x512xf32> -> vector<3x512xf32>
    %74 = vector.extract_strided_slice %0 {offsets = [0, 0], sizes = [1, 512], strides = [1, 1]} : vector<3x512xf32> to vector<1x512xf32>
    %cst_23 = arith.constant -1.000000e+00 : f32
    %75 = vector.broadcast %cst_23 : f32 to vector<1x512xf32>
    %76 = arith.cmpf oeq, %74, %75 : vector<1x512xf32>
    %77 = vector.extract_strided_slice %0 {offsets = [1, 0], sizes = [1, 512], strides = [1, 1]} : vector<3x512xf32> to vector<1x512xf32>
    %cst_24 = arith.constant -1.000000e+00 : f32
    %78 = vector.broadcast %cst_24 : f32 to vector<1x512xf32>
    %79 = arith.cmpf oeq, %77, %78 : vector<1x512xf32>
    %80 = arith.andi %76, %79 : vector<1x512xi1>
    %81 = vector.extract_strided_slice %0 {offsets = [2, 0], sizes = [1, 512], strides = [1, 1]} : vector<3x512xf32> to vector<1x512xf32>
    %cst_25 = arith.constant -1.000000e+00 : f32
    %82 = vector.broadcast %cst_25 : f32 to vector<1x512xf32>
    %83 = arith.cmpf oeq, %81, %82 : vector<1x512xf32>
    %84 = arith.andi %80, %83 : vector<1x512xi1>
    %cst_26 = arith.constant dense<true> : vector<1x512xi1>
    %85 = arith.xori %84, %cst_26 : vector<1x512xi1>
    %86 = tpu.concatenate %73, %11 in 0 : vector<3x512xf32>, vector<24x512xf32> -> vector<27x512xf32>
    %87 = arith.truncf %86 : vector<27x512xf32> to vector<27x512xbf16>
    %cst_27 = arith.constant 0.000000e+00 : f32
    %88 = vector.broadcast %cst_27 : f32 to vector<3x512xf32>
    %c0_28 = arith.constant 0 : index
    %c0_29 = arith.constant 0 : index
    %89 = vector.load %arg13[%c0_28, %c0_29] : memref<3x512xf32, #tpu.memory_space<vmem>>, vector<3x512xf32>
    tpu.vector_store %arg13[%c0_28, %c0_29], %88 {strides = array<i32>} : memref<3x512xf32, #tpu.memory_space<vmem>>, vector<3x512xf32>,
    %90 = arith.index_cast %arg0 : i32 to index
    %91 = memref.load %arg1[%90] : memref<8xi32, #tpu.memory_space<smem>>
    %92 = arith.index_cast %arg0 : i32 to index
    %93 = memref.load %arg2[%92] : memref<8xi32, #tpu.memory_space<smem>>
    %c1_i32 = arith.constant 1 : i32
    %94 = arith.addi %93, %c1_i32 : i32
    %c0_i32 = arith.constant 0 : i32
    %95 = arith.subi %94, %91 : i32
    %96 = arith.addi %91, %95 : i32
    %c1_i32_30 = arith.constant 1 : i32
    scf.for %arg14 = %91 to %96 step %c1_i32_30  : i32 {
      %97 = arith.index_cast %arg14 : i32 to index
      %c0_31 = arith.constant 0 : index
      %c0_32 = arith.constant 0 : index
      %98 = vector.load %arg10[%97, %c0_31, %c0_32] : memref<8x256x27xbf16, #tpu.memory_space<vmem>>, vector<1x256x27xbf16>
      %99 = vector.shape_cast %98 : vector<1x256x27xbf16> to vector<256x27xbf16>
      %cst_33 = arith.constant dense<0.000000e+00> : vector<256x512xf32>
      %100 = tpu.matmul %99, %87, %cst_33 {dimension_numbers = #tpu.dot_dimension_numbers<[1], [0], [0], [1], [0, 0, 1, 1], [], []>} : vector<256x27xbf16>, vector<27x512xbf16>, vector<256x512xf32> -> vector<256x512xf32>
      %cst_34 = arith.constant 0.000000e+00 : f32
      %101 = vector.broadcast %cst_34 : f32 to vector<256x512xf32>
      %102 = arith.maximumf %100, %101 : vector<256x512xf32>
      %103 = arith.truncf %102 : vector<256x512xf32> to vector<256x512xbf16>
      %104 = arith.index_cast %arg14 : i32 to index
      %c0_35 = arith.constant 0 : index
      %c0_36 = arith.constant 0 : index
      %105 = vector.load %arg11[%104, %c0_35, %c0_36] : memref<8x256x256xbf16, #tpu.memory_space<vmem>>, vector<1x256x256xbf16>
      %106 = vector.shape_cast %105 : vector<1x256x256xbf16> to vector<256x256xbf16>
      %cst_37 = arith.constant dense<0.000000e+00> : vector<256x512xf32>
      %107 = tpu.matmul %106, %103, %cst_37 {dimension_numbers = #tpu.dot_dimension_numbers<[1], [0], [0], [1], [0, 0, 1, 1], [], []>} : vector<256x256xbf16>, vector<256x512xbf16>, vector<256x512xf32> -> vector<256x512xf32>
      %cst_38 = arith.constant 0.000000e+00 : f32
      %108 = vector.broadcast %cst_38 : f32 to vector<256x512xf32>
      %109 = arith.maximumf %107, %108 : vector<256x512xf32>
      %110 = arith.truncf %109 : vector<256x512xf32> to vector<256x512xbf16>
      %111 = arith.index_cast %arg14 : i32 to index
      %c0_39 = arith.constant 0 : index
      %c0_40 = arith.constant 0 : index
      %112 = vector.load %arg12[%111, %c0_39, %c0_40] : memref<8x3x256xbf16, #tpu.memory_space<vmem>>, vector<1x3x256xbf16>
      %113 = vector.shape_cast %112 : vector<1x3x256xbf16> to vector<3x256xbf16>
      %cst_41 = arith.constant dense<0.000000e+00> : vector<3x512xf32>
      %114 = tpu.matmul %113, %110, %cst_41 {dimension_numbers = #tpu.dot_dimension_numbers<[1], [0], [0], [1], [0, 0, 1, 1], [], []>} : vector<3x256xbf16>, vector<256x512xbf16>, vector<3x512xf32> -> vector<3x512xf32>
      %115 = math.tanh %114 : vector<3x512xf32>
      %116 = vector.broadcast %arg14 : i32 to vector<1x512xi32>
      %117 = arith.cmpi eq, %3, %116 : vector<1x512xi32>
      %118 = arith.andi %117, %85 : vector<1x512xi1>
      %c0_42 = arith.constant 0 : index
      %c0_43 = arith.constant 0 : index
      %119 = vector.load %arg13[%c0_42, %c0_43] : memref<3x512xf32, #tpu.memory_space<vmem>>, vector<3x512xf32>
      %120 = vector.shape_cast %118 : vector<1x512xi1> to vector<1x512xi1>
      %121 = vector.broadcast %120 : vector<1x512xi1> to vector<3x512xi1>
      %122 = arith.select %121, %115, %119 : vector<3x512xi1>, vector<3x512xf32>
      %c0_44 = arith.constant 0 : index
      %c0_45 = arith.constant 0 : index
      %123 = vector.load %arg13[%c0_44, %c0_45] : memref<3x512xf32, #tpu.memory_space<vmem>>, vector<3x512xf32>
      tpu.vector_store %arg13[%c0_44, %c0_45], %122 {strides = array<i32>} : memref<3x512xf32, #tpu.memory_space<vmem>>, vector<3x512xf32>,
    }
    return
  }
  func.func @transform_0(%arg0: i32, %arg1: memref<8xi32, #tpu.memory_space<smem>>, %arg2: memref<8xi32, #tpu.memory_space<smem>>) -> (i32, i32) {
    %c0_i32 = arith.constant 0 : i32
    %c0_i32_0 = arith.constant 0 : i32
    return %c0_i32, %arg0 : i32, i32
  }
  func.func @transform_1(%arg0: i32, %arg1: memref<8xi32, #tpu.memory_space<smem>>, %arg2: memref<8xi32, #tpu.memory_space<smem>>) -> (i32, i32) {
    %c0_i32 = arith.constant 0 : i32
    %c0_i32_0 = arith.constant 0 : i32
    return %c0_i32, %arg0 : i32, i32
  }
  func.func @transform_2(%arg0: i32, %arg1: memref<8xi32, #tpu.memory_space<smem>>, %arg2: memref<8xi32, #tpu.memory_space<smem>>) -> (i32, i32) {
    %c0_i32 = arith.constant 0 : i32
    %c0_i32_0 = arith.constant 0 : i32
    return %c0_i32, %arg0 : i32, i32
  }
  func.func @transform_3(%arg0: i32, %arg1: memref<8xi32, #tpu.memory_space<smem>>, %arg2: memref<8xi32, #tpu.memory_space<smem>>) -> (i32, i32) {
    %c0_i32 = arith.constant 0 : i32
    %c0_i32_0 = arith.constant 0 : i32
    return %c0_i32, %arg0 : i32, i32
  }
  func.func @transform_4(%arg0: i32, %arg1: memref<8xi32, #tpu.memory_space<smem>>, %arg2: memref<8xi32, #tpu.memory_space<smem>>) -> (i32, i32) {
    %c0_i32 = arith.constant 0 : i32
    %c0_i32_0 = arith.constant 0 : i32
    return %c0_i32, %arg0 : i32, i32
  }
  func.func @transform_5(%arg0: i32, %arg1: memref<8xi32, #tpu.memory_space<smem>>, %arg2: memref<8xi32, #tpu.memory_space<smem>>) -> (i32, i32) {
    %c0_i32 = arith.constant 0 : i32
    %c0_i32_0 = arith.constant 0 : i32
    %c0_i32_1 = arith.constant 0 : i32
    return %c0_i32, %c0_i32_0 : i32, i32
  }
  func.func @transform_6(%arg0: i32, %arg1: memref<8xi32, #tpu.memory_space<smem>>, %arg2: memref<8xi32, #tpu.memory_space<smem>>) -> (i32, i32) {
    %c0_i32 = arith.constant 0 : i32
    %c0_i32_0 = arith.constant 0 : i32
    %c0_i32_1 = arith.constant 0 : i32
    return %c0_i32, %c0_i32_0 : i32, i32
  }
  func.func @transform_7(%arg0: i32, %arg1: memref<8xi32, #tpu.memory_space<smem>>, %arg2: memref<8xi32, #tpu.memory_space<smem>>) -> (i32, i32, i32) {
    %c0_i32 = arith.constant 0 : i32
    %c0_i32_0 = arith.constant 0 : i32
    %c0_i32_1 = arith.constant 0 : i32
    %c0_i32_2 = arith.constant 0 : i32
    return %c0_i32, %c0_i32_0, %c0_i32_1 : i32, i32, i32
  }
  func.func @transform_8(%arg0: i32, %arg1: memref<8xi32, #tpu.memory_space<smem>>, %arg2: memref<8xi32, #tpu.memory_space<smem>>) -> (i32, i32, i32) {
    %c0_i32 = arith.constant 0 : i32
    %c0_i32_0 = arith.constant 0 : i32
    %c0_i32_1 = arith.constant 0 : i32
    %c0_i32_2 = arith.constant 0 : i32
    return %c0_i32, %c0_i32_0, %c0_i32_1 : i32, i32, i32
  }
  func.func @transform_9(%arg0: i32, %arg1: memref<8xi32, #tpu.memory_space<smem>>, %arg2: memref<8xi32, #tpu.memory_space<smem>>) -> (i32, i32, i32) {
    %c0_i32 = arith.constant 0 : i32
    %c0_i32_0 = arith.constant 0 : i32
    %c0_i32_1 = arith.constant 0 : i32
    %c0_i32_2 = arith.constant 0 : i32
    return %c0_i32, %c0_i32_0, %c0_i32_1 : i32, i32, i32
  }
  func.func @transform_10(%arg0: i32, %arg1: memref<8xi32, #tpu.memory_space<smem>>, %arg2: memref<8xi32, #tpu.memory_space<smem>>) -> (i32, i32) {
    %c0_i32 = arith.constant 0 : i32
    %c0_i32_0 = arith.constant 0 : i32
    return %c0_i32, %arg0 : i32, i32
  }
}

</mosaic_0001>

<llo_original>
// kernel: clusterised_linear_network_forward.1
$region0: #{clusterised_linear_network_forward.1}
  #allocation0 [shape = 'u32[]', space=smem, size = 0x4, offset = 0x4, fixed_abs, tag = 'smem constant byte address 0x4 - core index']
  #allocation1 [shape = 'u32[144,128]{1,0:T(1,128)}', space=vmem, size = 0x12000, scoped, tag = 'internal scratch']
  #allocation2 [shape = 's32[1]{0}', space=sflag, size = 0x4, scoped, tag = 'scoped memory for clusterised_linear_network_forward.1']
  #allocation3 [shape = 'u8[512]{0}', space=smem, size = 0x200, scoped, tag = 'prefetched SMEM operand 0']
  #allocation4 [shape = 'u8[512]{0}', space=smem, size = 0x200, scoped, tag = 'prefetched SMEM operand 1']
  %s0 = inlined_call_operand.vmem [shape: s32[8], index: 0, kind: input, shape index: {}]
  %s1 = inlined_call_operand.vmem [shape: s32[8], index: 1, kind: input, shape index: {}]
  %s2 = inlined_call_operand.vmem [shape: f32[3,4096], index: 2, kind: input, shape index: {}]
  %s3 = inlined_call_operand.vmem [shape: f32[8,4096], index: 3, kind: input, shape index: {}]
  %s4 = inlined_call_operand.vmem [shape: s32[3,4096], index: 4, kind: input, shape index: {}]
  %s5 = inlined_call_operand.vmem [shape: s32[1,4096], index: 5, kind: input, shape index: {}]
  %s6 = inlined_call_operand.vmem [shape: f32[1,4096], index: 6, kind: input, shape index: {}]
  %s7 = inlined_call_operand.vmem [shape: f32[12,1], index: 7, kind: input, shape index: {}]
  %s8 = inlined_call_operand.vmem [shape: bf16[24,24], index: 8, kind: input, shape index: {}]
  %s9 = inlined_call_operand.vmem [shape: bf16[8,256,27], index: 9, kind: input, shape index: {}]
  %s10 = inlined_call_operand.vmem [shape: bf16[8,256,256], index: 10, kind: input, shape index: {}]
  %s11 = inlined_call_operand.vmem [shape: bf16[8,3,256], index: 11, kind: input, shape index: {}]
  %s12 = inlined_call_operand.vmem [shape: f32[3,4096], index: 12, kind: output, shape index: {}]
  %s13 = sld [smem:[#allocation0]]
  $region80: #{clusterised_linear_network_forward.1} parent=0
    _
  %s15 = ssub.s32 1, %s13
  %s16 = scalar_select 0, %s15, %s13
  %s17 = sshll.u32 %s0, 4
  %s18 = int_to_ptr.vmem [resolvable:$true] %s17
  %20 = dma.vmem_to_smem %s18, 16, [#allocation3], [#allocation2]
  %s21 = sshll.u32 %s1, 4
  %s22 = int_to_ptr.vmem [resolvable:$true] %s21
  %24 = dma.vmem_to_smem %s22, 16, [#allocation4], [#allocation2]
  %25 = dma.done [#allocation2], 32
  %26 = sfence
  loop: start=0, step=1, limit=10
  $region2: #{clusterised_linear_network_forward.1} parent=0 // loop_pre_header
    _
  $region3: #{clusterised_linear_network_forward.1} parent=0 // loop_header
    %s28 = sphi 0, %s32
    %p29 = scmp.ge.s32.totalorder %s28, 10
    %s38 = sphi 0, %s40
    %s41 = sphi 0, %s38
    %s42 = sphi 0, %s41
    %s58 = sphi 0, %s42
    %s64 = sphi 0, %s66
    %s67 = sphi 0, %s64
    %s68 = sphi 0, %s67
    %s84 = sphi 0, %s68
    %s90 = sphi 0, %s92
    %s93 = sphi 0, %s90
    %s94 = sphi 0, %s93
    %s110 = sphi 0, %s94
    %s116 = sphi 0, %s118
    %s119 = sphi 0, %s116
    %s120 = sphi 0, %s119
    %s136 = sphi 0, %s120
    %s142 = sphi 0, %s144
    %s145 = sphi 0, %s142
    %s146 = sphi 0, %s145
    %s162 = sphi 0, %s146
    %s166 = sphi 0, %s166
    %s168 = sphi 0, %s166
    %s169 = sphi 0, %s168
    %s183 = sphi 0, %s169
    %s187 = sphi 0, %s187
    %s189 = sphi 0, %s187
    %s190 = sphi 0, %s189
    %s204 = sphi 0, %s190
    %s208 = sphi 0, %s208
    %s210 = sphi 0, %s208
    %s211 = sphi 0, %s210
    %s225 = sphi 0, %s211
    %s229 = sphi 0, %s229
    %s231 = sphi 0, %s229
    %s232 = sphi 0, %s231
    %s246 = sphi 0, %s232
    %s250 = sphi 0, %s250
    %s252 = sphi 0, %s250
    %s253 = sphi 0, %s252
    %s267 = sphi 0, %s253
    %s273 = sphi 0, %s275
    %s276 = sphi 0, %s273
    %s277 = sphi 0, %s276
    %s293 = sphi 0, %s277
  $region4: #{clusterised_linear_network_forward.1} parent=0 // loop_header_branch
    %31 = sbr.rel (%p29) target = $region8
  $region5: #{clusterised_linear_network_forward.1} parent=0 // loop_body
    %s33 = ssub.s32 %s28, 1
    %s34 = ssub.s32 %s28, 2
    %s35 = sadd.s32 %s28, 1
    %s36 = ssub.s32 %s28, %s35
    %p37 = scmp.eq.s32.totalorder %s36, 0
    %s39 = sadd.s32 %s38, 1
    %s40 = scalar_select %p37, %s38, %s39
    %p43 = pneg %p37
    %p44 = scmp.eq.s32.totalorder %s28, 7
    %p45 = por %p43, %p44
    %p46 = scmp.ne.s32.totalorder %s38, %s41
    %p47 = scmp.eq.s32.totalorder %s28, 0
    %p48 = por %p46, %p47
    %p49 = scmp.ne.s32.totalorder %s38, %s41
    %p50 = scmp.eq.s32.totalorder %s33, 7
    %p51 = por %p49, %p50
    %p52 = scmp.ne.s32.totalorder %s41, %s42
    %p53 = scmp.eq.s32.totalorder %s33, 0
    %p54 = por %p52, %p53
    %p55 = scmp.ne.s32.totalorder %s41, %s42
    %p56 = scmp.eq.s32.totalorder %s34, 7
    %p57 = por %p55, %p56
    %p59 = scmp.ne.s32.totalorder %s42, %s58
    %p60 = scmp.eq.s32.totalorder %s34, 0
    %p61 = por %p59, %p60
    %s62 = ssub.s32 %s28, %s35
    %p63 = scmp.eq.s32.totalorder %s62, 0
    %s65 = sadd.s32 %s64, 1
    %s66 = scalar_select %p63, %s64, %s65
    %p69 = pneg %p63
    %p70 = scmp.eq.s32.totalorder %s28, 7
    %p71 = por %p69, %p70
    %p72 = scmp.ne.s32.totalorder %s64, %s67
    %p73 = scmp.eq.s32.totalorder %s28, 0
    %p74 = por %p72, %p73
    %p75 = scmp.ne.s32.totalorder %s64, %s67
    %p76 = scmp.eq.s32.totalorder %s33, 7
    %p77 = por %p75, %p76
    %p78 = scmp.ne.s32.totalorder %s67, %s68
    %p79 = scmp.eq.s32.totalorder %s33, 0
    %p80 = por %p78, %p79
    %p81 = scmp.ne.s32.totalorder %s67, %s68
    %p82 = scmp.eq.s32.totalorder %s34, 7
    %p83 = por %p81, %p82
    %p85 = scmp.ne.s32.totalorder %s68, %s84
    %p86 = scmp.eq.s32.totalorder %s34, 0
    %p87 = por %p85, %p86
    %s88 = ssub.s32 %s28, %s35
    %p89 = scmp.eq.s32.totalorder %s88, 0
    %s91 = sadd.s32 %s90, 1
    %s92 = scalar_select %p89, %s90, %s91
    %p95 = pneg %p89
    %p96 = scmp.eq.s32.totalorder %s28, 7
    %p97 = por %p95, %p96
    %p98 = scmp.ne.s32.totalorder %s90, %s93
    %p99 = scmp.eq.s32.totalorder %s28, 0
    %p100 = por %p98, %p99
    %p101 = scmp.ne.s32.totalorder %s90, %s93
    %p102 = scmp.eq.s32.totalorder %s33, 7
    %p103 = por %p101, %p102
    %p104 = scmp.ne.s32.totalorder %s93, %s94
    %p105 = scmp.eq.s32.totalorder %s33, 0
    %p106 = por %p104, %p105
    %p107 = scmp.ne.s32.totalorder %s93, %s94
    %p108 = scmp.eq.s32.totalorder %s34, 7
    %p109 = por %p107, %p108
    %p111 = scmp.ne.s32.totalorder %s94, %s110
    %p112 = scmp.eq.s32.totalorder %s34, 0
    %p113 = por %p111, %p112
    %s114 = ssub.s32 %s28, %s35
    %p115 = scmp.eq.s32.totalorder %s114, 0
    %s117 = sadd.s32 %s116, 1
    %s118 = scalar_select %p115, %s116, %s117
    %p121 = pneg %p115
    %p122 = scmp.eq.s32.totalorder %s28, 7
    %p123 = por %p121, %p122
    %p124 = scmp.ne.s32.totalorder %s116, %s119
    %p125 = scmp.eq.s32.totalorder %s28, 0
    %p126 = por %p124, %p125
    %p127 = scmp.ne.s32.totalorder %s116, %s119
    %p128 = scmp.eq.s32.totalorder %s33, 7
    %p129 = por %p127, %p128
    %p130 = scmp.ne.s32.totalorder %s119, %s120
    %p131 = scmp.eq.s32.totalorder %s33, 0
    %p132 = por %p130, %p131
    %p133 = scmp.ne.s32.totalorder %s119, %s120
    %p134 = scmp.eq.s32.totalorder %s34, 7
    %p135 = por %p133, %p134
    %p137 = scmp.ne.s32.totalorder %s120, %s136
    %p138 = scmp.eq.s32.totalorder %s34, 0
    %p139 = por %p137, %p138
    %s140 = ssub.s32 %s28, %s35
    %p141 = scmp.eq.s32.totalorder %s140, 0
    %s143 = sadd.s32 %s142, 1
    %s144 = scalar_select %p141, %s142, %s143
    %p147 = pneg %p141
    %p148 = scmp.eq.s32.totalorder %s28, 7
    %p149 = por %p147, %p148
    %p150 = scmp.ne.s32.totalorder %s142, %s145
    %p151 = scmp.eq.s32.totalorder %s28, 0
    %p152 = por %p150, %p151
    %p153 = scmp.ne.s32.totalorder %s142, %s145
    %p154 = scmp.eq.s32.totalorder %s33, 7
    %p155 = por %p153, %p154
    %p156 = scmp.ne.s32.totalorder %s145, %s146
    %p157 = scmp.eq.s32.totalorder %s33, 0
    %p158 = por %p156, %p157
    %p159 = scmp.ne.s32.totalorder %s145, %s146
    %p160 = scmp.eq.s32.totalorder %s34, 7
    %p161 = por %p159, %p160
    %p163 = scmp.ne.s32.totalorder %s146, %s162
    %p164 = scmp.eq.s32.totalorder %s34, 0
    %p165 = por %p163, %p164
    %s167 = sadd.s32 %s166, 1
    %p170 = scmp.eq.s32.totalorder %s28, 7
    %p171 = scmp.ne.s32.totalorder %s166, %s168
    %p172 = scmp.eq.s32.totalorder %s28, 0
    %p173 = por %p171, %p172
    %p174 = scmp.ne.s32.totalorder %s166, %s168
    %p175 = scmp.eq.s32.totalorder %s33, 7
    %p176 = por %p174, %p175
    %p177 = scmp.ne.s32.totalorder %s168, %s169
    %p178 = scmp.eq.s32.totalorder %s33, 0
    %p179 = por %p177, %p178
    %p180 = scmp.ne.s32.totalorder %s168, %s169
    %p181 = scmp.eq.s32.totalorder %s34, 7
    %p182 = por %p180, %p181
    %p184 = scmp.ne.s32.totalorder %s169, %s183
    %p185 = scmp.eq.s32.totalorder %s34, 0
    %p186 = por %p184, %p185
    %s188 = sadd.s32 %s187, 1
    %p191 = scmp.eq.s32.totalorder %s28, 7
    %p192 = scmp.ne.s32.totalorder %s187, %s189
    %p193 = scmp.eq.s32.totalorder %s28, 0
    %p194 = por %p192, %p193
    %p195 = scmp.ne.s32.totalorder %s187, %s189
    %p196 = scmp.eq.s32.totalorder %s33, 7
    %p197 = por %p195, %p196
    %p198 = scmp.ne.s32.totalorder %s189, %s190
    %p199 = scmp.eq.s32.totalorder %s33, 0
    %p200 = por %p198, %p199
    %p201 = scmp.ne.s32.totalorder %s189, %s190
    %p202 = scmp.eq.s32.totalorder %s34, 7
    %p203 = por %p201, %p202
    %p205 = scmp.ne.s32.totalorder %s190, %s204
    %p206 = scmp.eq.s32.totalorder %s34, 0
    %p207 = por %p205, %p206
    %s209 = sadd.s32 %s208, 1
    %p212 = scmp.eq.s32.totalorder %s28, 7
    %p213 = scmp.ne.s32.totalorder %s208, %s210
    %p214 = scmp.eq.s32.totalorder %s28, 0
    %p215 = por %p213, %p214
    %p216 = scmp.ne.s32.totalorder %s208, %s210
    %p217 = scmp.eq.s32.totalorder %s33, 7
    %p218 = por %p216, %p217
    %p219 = scmp.ne.s32.totalorder %s210, %s211
    %p220 = scmp.eq.s32.totalorder %s33, 0
    %p221 = por %p219, %p220
    %p222 = scmp.ne.s32.totalorder %s210, %s211
    %p223 = scmp.eq.s32.totalorder %s34, 7
    %p224 = por %p222, %p223
    %p226 = scmp.ne.s32.totalorder %s211, %s225
    %p227 = scmp.eq.s32.totalorder %s34, 0
    %p228 = por %p226, %p227
    %s230 = sadd.s32 %s229, 1
    %p233 = scmp.eq.s32.totalorder %s28, 7
    %p234 = scmp.ne.s32.totalorder %s229, %s231
    %p235 = scmp.eq.s32.totalorder %s28, 0
    %p236 = por %p234, %p235
    %p237 = scmp.ne.s32.totalorder %s229, %s231
    %p238 = scmp.eq.s32.totalorder %s33, 7
    %p239 = por %p237, %p238
    %p240 = scmp.ne.s32.totalorder %s231, %s232
    %p241 = scmp.eq.s32.totalorder %s33, 0
    %p242 = por %p240, %p241
    %p243 = scmp.ne.s32.totalorder %s231, %s232
    %p244 = scmp.eq.s32.totalorder %s34, 7
    %p245 = por %p243, %p244
    %p247 = scmp.ne.s32.totalorder %s232, %s246
    %p248 = scmp.eq.s32.totalorder %s34, 0
    %p249 = por %p247, %p248
    %s251 = sadd.s32 %s250, 1
    %p254 = scmp.eq.s32.totalorder %s28, 7
    %p255 = scmp.ne.s32.totalorder %s250, %s252
    %p256 = scmp.eq.s32.totalorder %s28, 0
    %p257 = por %p255, %p256
    %p258 = scmp.ne.s32.totalorder %s250, %s252
    %p259 = scmp.eq.s32.totalorder %s33, 7
    %p260 = por %p258, %p259
    %p261 = scmp.ne.s32.totalorder %s252, %s253
    %p262 = scmp.eq.s32.totalorder %s33, 0
    %p263 = por %p261, %p262
    %p264 = scmp.ne.s32.totalorder %s252, %s253
    %p265 = scmp.eq.s32.totalorder %s34, 7
    %p266 = por %p264, %p265
    %p268 = scmp.ne.s32.totalorder %s253, %s267
    %p269 = scmp.eq.s32.totalorder %s34, 0
    %p270 = por %p268, %p269
    %s271 = ssub.s32 %s28, %s35
    %p272 = scmp.eq.s32.totalorder %s271, 0
    %s274 = sadd.s32 %s273, 1
    %s275 = scalar_select %p272, %s273, %s274
    %p278 = pneg %p272
    %p279 = scmp.eq.s32.totalorder %s28, 7
    %p280 = por %p278, %p279
    %p281 = scmp.ne.s32.totalorder %s273, %s276
    %p282 = scmp.eq.s32.totalorder %s28, 0
    %p283 = por %p281, %p282
    %p284 = scmp.ne.s32.totalorder %s273, %s276
    %p285 = scmp.eq.s32.totalorder %s33, 7
    %p286 = por %p284, %p285
    %p287 = scmp.ne.s32.totalorder %s276, %s277
    %p288 = scmp.eq.s32.totalorder %s33, 0
    %p289 = por %p287, %p288
    %p290 = scmp.ne.s32.totalorder %s276, %s277
    %p291 = scmp.eq.s32.totalorder %s34, 7
    %p292 = por %p290, %p291
    %p294 = scmp.ne.s32.totalorder %s277, %s293
    %p295 = scmp.eq.s32.totalorder %s34, 0
    %p296 = por %p294, %p295
    %p297 = scmp.le.s32.totalorder 1, %s28
    %p298 = scmp.lt.s32.totalorder %s28, 9
    %p299 = pnand %p297, %p298
    %p300 = pneg %p299
    // Predicated region
    $region9: #{clusterised_linear_network_forward.1} parent=5 // pred_check
      _
    $region10: #{clusterised_linear_network_forward.1} parent=5 // pred_check_branch
      %302 = sbr.rel (%p299) target = $region12
    $region11: #{clusterised_linear_network_forward.1} parent=5 // pred_region
      %s303 = ssub.s32 %s28, 1
      // Predicated region
      $region13: #{clusterised_linear_network_forward.1} parent=11 // pred_check
        %p304 = pneg %p179
      $region14: #{clusterised_linear_network_forward.1} parent=11 // pred_check_branch
        %306 = sbr.rel (%p304) target = $region16
      $region15: #{clusterised_linear_network_forward.1} parent=11 // pred_region
        _
      $region16: #{clusterised_linear_network_forward.1} parent=11 // pred_fallthru
        _
      // Predicated region
      $region17: #{clusterised_linear_network_forward.1} parent=11 // pred_check
        %p307 = pneg %p200
      $region18: #{clusterised_linear_network_forward.1} parent=11 // pred_check_branch
        %309 = sbr.rel (%p307) target = $region20
      $region19: #{clusterised_linear_network_forward.1} parent=11 // pred_region
        _
      $region20: #{clusterised_linear_network_forward.1} parent=11 // pred_fallthru
        _
      // Predicated region
      $region21: #{clusterised_linear_network_forward.1} parent=11 // pred_check
        %p310 = pneg %p221
      $region22: #{clusterised_linear_network_forward.1} parent=11 // pred_check_branch
        %312 = sbr.rel (%p310) target = $region24
      $region23: #{clusterised_linear_network_forward.1} parent=11 // pred_region
        _
      $region24: #{clusterised_linear_network_forward.1} parent=11 // pred_fallthru
        _
      // Predicated region
      $region25: #{clusterised_linear_network_forward.1} parent=11 // pred_check
        %p313 = pneg %p242
      $region26: #{clusterised_linear_network_forward.1} parent=11 // pred_check_branch
        %315 = sbr.rel (%p313) target = $region28
      $region27: #{clusterised_linear_network_forward.1} parent=11 // pred_region
        _
      $region28: #{clusterised_linear_network_forward.1} parent=11 // pred_fallthru
        _
      // Predicated region
      $region29: #{clusterised_linear_network_forward.1} parent=11 // pred_check
        %p316 = pneg %p263
      $region30: #{clusterised_linear_network_forward.1} parent=11 // pred_check_branch
        %318 = sbr.rel (%p316) target = $region32
      $region31: #{clusterised_linear_network_forward.1} parent=11 // pred_region
        _
      $region32: #{clusterised_linear_network_forward.1} parent=11 // pred_fallthru
        _
    $region12: #{clusterised_linear_network_forward.1} parent=5 // pred_fallthru
      _
    %p319 = scmp.lt.s32.totalorder %s28, 8
    // Predicated region
    $region33: #{clusterised_linear_network_forward.1} parent=5 // pred_check
      %p320 = pneg %p319
    $region34: #{clusterised_linear_network_forward.1} parent=5 // pred_check_branch
      %322 = sbr.rel (%p320) target = $region36
    $region35: #{clusterised_linear_network_forward.1} parent=5 // pred_region
      // Predicated region
      $region37: #{clusterised_linear_network_forward.1} parent=35 // pred_check
        %p323 = pneg %p48
      $region38: #{clusterised_linear_network_forward.1} parent=35 // pred_check_branch
        %325 = sbr.rel (%p323) target = $region40
      $region39: #{clusterised_linear_network_forward.1} parent=35 // pred_region
        %s326 = smul.u32 4, %s28
        %p327 = scmp.lt.s32.totalorder %s326, 31
        %s328 = scalar_select %p327, %s326, 31
        %s329 = smul.addr %s328, 4
        %s330 = scalar_lea.vmem %s2, %s329
        %s331 = smul.u32 4, %s28
      $region40: #{clusterised_linear_network_forward.1} parent=35 // pred_fallthru
        _
      // Predicated region
      $region41: #{clusterised_linear_network_forward.1} parent=35 // pred_check
        %p332 = pneg %p74
      $region42: #{clusterised_linear_network_forward.1} parent=35 // pred_check_branch
        %334 = sbr.rel (%p332) target = $region44
      $region43: #{clusterised_linear_network_forward.1} parent=35 // pred_region
        %s335 = smul.u32 4, %s28
        %p336 = scmp.lt.s32.totalorder %s335, 31
        %s337 = scalar_select %p336, %s335, 31
        %s338 = smul.addr %s337, 8
        %s339 = scalar_lea.vmem %s3, %s338
        %s340 = smul.u32 4, %s28
      $region44: #{clusterised_linear_network_forward.1} parent=35 // pred_fallthru
        _
      // Predicated region
      $region45: #{clusterised_linear_network_forward.1} parent=35 // pred_check
        %p341 = pneg %p100
      $region46: #{clusterised_linear_network_forward.1} parent=35 // pred_check_branch
        %343 = sbr.rel (%p341) target = $region48
      $region47: #{clusterised_linear_network_forward.1} parent=35 // pred_region
        %s344 = smul.u32 4, %s28
        %p345 = scmp.lt.s32.totalorder %s344, 31
        %s346 = scalar_select %p345, %s344, 31
        %s347 = smul.addr %s346, 4
        %s348 = scalar_lea.vmem %s4, %s347
        %s349 = smul.u32 4, %s28
      $region48: #{clusterised_linear_network_forward.1} parent=35 // pred_fallthru
        _
      // Predicated region
      $region49: #{clusterised_linear_network_forward.1} parent=35 // pred_check
        %p350 = pneg %p126
      $region50: #{clusterised_linear_network_forward.1} parent=35 // pred_check_branch
        %352 = sbr.rel (%p350) target = $region52
      $region51: #{clusterised_linear_network_forward.1} parent=35 // pred_region
        %s353 = smul.u32 4, %s28
        %p354 = scmp.lt.s32.totalorder %s353, 31
        %s355 = scalar_select %p354, %s353, 31
        %s356 = scalar_lea.vmem %s5, %s355
        %s357 = smul.u32 4, %s28
      $region52: #{clusterised_linear_network_forward.1} parent=35 // pred_fallthru
        _
      // Predicated region
      $region53: #{clusterised_linear_network_forward.1} parent=35 // pred_check
        %p358 = pneg %p152
      $region54: #{clusterised_linear_network_forward.1} parent=35 // pred_check_branch
        %360 = sbr.rel (%p358) target = $region56
      $region55: #{clusterised_linear_network_forward.1} parent=35 // pred_region
        %s361 = smul.u32 4, %s28
        %p362 = scmp.lt.s32.totalorder %s361, 31
        %s363 = scalar_select %p362, %s361, 31
        %s364 = scalar_lea.vmem %s6, %s363
        %s365 = smul.u32 4, %s28
      $region56: #{clusterised_linear_network_forward.1} parent=35 // pred_fallthru
        _
    $region36: #{clusterised_linear_network_forward.1} parent=5 // pred_fallthru
      _
    %p366 = scmp.le.s32.totalorder 1, %s28
    %p367 = scmp.lt.s32.totalorder %s28, 9
    %p368 = pnand %p366, %p367
    %p369 = pneg %p368
    // Predicated region
    $region57: #{clusterised_linear_network_forward.1} parent=5 // pred_check
      _
    $region58: #{clusterised_linear_network_forward.1} parent=5 // pred_check_branch
      %371 = sbr.rel (%p368) target = $region60
    $region59: #{clusterised_linear_network_forward.1} parent=5 // pred_region
      %s372 = ssub.s32 %s28, 1
      %s373 = smul.u32 4, %s33
      %p374 = scmp.lt.s32.totalorder %s373, 31
      %s375 = scalar_select %p374, %s373, 31
      %s376 = smul.addr %s375, 4
      %s377 = scalar_lea.vmem %s2, %s376
      %p378 = pneg %p54
      %p379 = pneg %p51
      %s380 = smul.u32 4, %s33
      %p381 = scmp.lt.s32.totalorder %s380, 31
      %s382 = scalar_select %p381, %s380, 31
      %s383 = smul.addr %s382, 8
      %s384 = scalar_lea.vmem %s3, %s383
      %p385 = pneg %p80
      %p386 = pneg %p77
      %s387 = smul.u32 4, %s33
      %p388 = scmp.lt.s32.totalorder %s387, 31
      %s389 = scalar_select %p388, %s387, 31
      %s390 = smul.addr %s389, 4
      %s391 = scalar_lea.vmem %s4, %s390
      %p392 = pneg %p106
      %p393 = pneg %p103
      %s394 = smul.u32 4, %s33
      %p395 = scmp.lt.s32.totalorder %s394, 31
      %s396 = scalar_select %p395, %s394, 31
      %s397 = scalar_lea.vmem %s5, %s396
      %p398 = pneg %p132
      %p399 = pneg %p129
      %s400 = smul.u32 4, %s33
      %p401 = scmp.lt.s32.totalorder %s400, 31
      %s402 = scalar_select %p401, %s400, 31
      %s403 = scalar_lea.vmem %s6, %s402
      %p404 = pneg %p158
      %p405 = pneg %p155
      %p406 = pneg %p179
      %p407 = pneg %p176
      %p408 = pneg %p200
      %p409 = pneg %p197
      %p410 = pneg %p221
      %p411 = pneg %p218
      %p412 = pneg %p242
      %p413 = pneg %p239
      %p414 = pneg %p263
      %p415 = pneg %p260
      %p416 = pneg %p289
      %p417 = pneg %p286
      %s418 = smul.u32 4, %s33
      %p419 = scmp.lt.s32.totalorder %s418, 31
      %s420 = scalar_select %p419, %s418, 31
      %s421 = smul.addr %s420, 4
      %s422 = scalar_lea.vmem %s12, %s421
      %s423 = smul.u32 4, %s33
      %p424 = scmp.lt.s32.totalorder %s423, 31
      %s425 = scalar_select %p424, %s423, 31
      %s426 = smul.addr %s425, 4
      %s427 = scalar_lea.vmem %s2, %s426
      %s428 = smul.u32 4, %s33
      %s429 = smul.u32 4, %s33
      %p430 = scmp.lt.s32.totalorder %s429, 31
      %s431 = scalar_select %p430, %s429, 31
      %s432 = smul.addr %s431, 8
      %s433 = scalar_lea.vmem %s3, %s432
      %s434 = smul.u32 4, %s33
      %s435 = smul.u32 4, %s33
      %p436 = scmp.lt.s32.totalorder %s435, 31
      %s437 = scalar_select %p436, %s435, 31
      %s438 = smul.addr %s437, 4
      %s439 = scalar_lea.vmem %s4, %s438
      %s440 = smul.u32 4, %s33
      %s441 = smul.u32 4, %s33
      %p442 = scmp.lt.s32.totalorder %s441, 31
      %s443 = scalar_select %p442, %s441, 31
      %s444 = scalar_lea.vmem %s5, %s443
      %s445 = smul.u32 4, %s33
      %s446 = smul.u32 4, %s33
      %p447 = scmp.lt.s32.totalorder %s446, 31
      %s448 = scalar_select %p447, %s446, 31
      %s449 = scalar_lea.vmem %s6, %s448
      %s450 = smul.u32 4, %s33
      %s451 = smul.u32 4, %s33
      %p452 = scmp.lt.s32.totalorder %s451, 31
      %s453 = scalar_select %p452, %s451, 31
      %s454 = smul.addr %s453, 4
      %s455 = scalar_lea.vmem %s12, %s454
      %s456 = smul.u32 4, %s33
      %v458 = vld [vmem:[%s427] sm:$0x77]
      %v459 = vld [vmem:[%s427 + $0x8] sm:$0x77]
      %v460 = vld [vmem:[%s433] sm:$0xff]
      %v461 = vld [vmem:[%s433 + $0x8] sm:$0xff]
      %v462 = vld [vmem:[%s433 + $0x10] sm:$0xff]
      %v463 = vld [vmem:[%s433 + $0x18] sm:$0xff]
      %v464 = vld [vmem:[%s439] sm:$0x77]
      %v465 = vld [vmem:[%s439 + $0x8] sm:$0x77]
      %v466 = vld [vmem:[%s444] sm:$0xf]
      %v467 = vld [vmem:[%s449] sm:$0xf]
      %v468 = vld [vmem:[%s7] sm:$0xff]
      %v469 = vld [vmem:[%s7 + $0x8] sm:$0xf]
      %v472 = vcombine.high %v458, %v458
      %v473 = vcombine.high %v459, %v459
      %v476 = vrot.slane %v458, 5
      %v477 = vrot.slane %v472, 5
      %v478 = vrot.slane %v459, 5
      %v479 = vrot.slane %v473, 5
      %v484 = vrot.slane %v458, 2
      %v485 = vrot.slane %v472, 2
      %v486 = vrot.slane %v459, 2
      %v487 = vrot.slane %v473, 2
      %v492 = vrot.slane %v458, 7
      %v493 = vrot.slane %v472, 7
      %v494 = vrot.slane %v459, 7
      %v495 = vrot.slane %v473, 7
      %vm500 = vcmask 1042432
      %v501 = vsel %vm500, %v458, %v476
      %v502 = vsel %vm500, %v472, %v477
      %v503 = vsel %vm500, %v459, %v478
      %v504 = vsel %vm500, %v473, %v479
      %vm505 = vcmask 1045504
      %v506 = vsel %vm505, %v501, %v484
      %v507 = vsel %vm505, %v502, %v485
      %v508 = vsel %vm505, %v503, %v486
      %v509 = vsel %vm505, %v504, %v487
      %vm510 = vcmask 1040384
      %v511 = vsel %vm510, %v484, %v492
      %v512 = vsel %vm510, %v485, %v493
      %v513 = vsel %vm510, %v486, %v494
      %v514 = vsel %vm510, %v487, %v495
      %516 = vset.pattern.permute.xlu0 0
      %517 = vperm.xlu0 %516, %v468
      %v518 = vpop.permute.xlu0 %517
      %521 = vset.pattern.permute.xlu0 0
      %522 = vperm.xlu0 %521, %v469
      %v523 = vpop.permute.xlu0 %522
      %v525 = vmul.f32 %v518, %v506
      %v526 = vmul.f32 %v518, %v507
      %v527 = vmul.f32 %v518, %v508
      %v528 = vmul.f32 %v518, %v509
      %v529 = vmul.f32 %v523, %v511
      %v530 = vmul.f32 %v523, %v512
      %v531 = vmul.f32 %v523, %v513
      %v532 = vmul.f32 %v523, %v514
      %v533 = vand.u32 2147483647, %v525
      %vm534 = vcmp.le.f32.partialorder %v533, 0.7853982
      %vm535 = vcmp.lt.s32.totalorder %v525, 0
      %v536 = vand.u32 %v525, 2139095040
      %v537 = vshrl.u32 %v536, 23
      %v538 = vsub.s32 %v537, 127
      %v539 = vand.u32 2147483647, %v525
      %v540 = vand.u32 %v539, 8388607
      %v541 = vor.u32 %v540, 8388608
      %v542 = vsub.s32 0, %v541
      %v543 = vadd.s32 %v538, 1
      %vm544 = vcmp.gt.s32.totalorder %v543, 0
      %v545 = vsel %vm544, %v543, 0
      %v546 = vshrl.u32 %v545, 5
      %v547 = vand.u32 %v545, 31
      %v548 = vsub.s32 32, %v547
      %v549 = vshrl.u32 683565275, %v548
      %v550 = vshll.u32 683565275, %v547
      %v551 = vshrl.u32 2475754826, %v548
      %v552 = vor.u32 %v550, %v551
      %v553 = vshll.u32 2475754826, %v547
      %v554 = vshrl.u32 2131351028, %v548
      %v555 = vor.u32 %v553, %v554
      %v556 = vshll.u32 2131351028, %v547
      %v557 = vshrl.u32 2102212464, %v548
      %v558 = vor.u32 %v556, %v557
      %v559 = vshll.u32 2102212464, %v547
      %v560 = vshrl.u32 920167782, %v548
      %v561 = vor.u32 %v559, %v560
      %v562 = vshll.u32 920167782, %v547
      %v563 = vshrl.u32 1326507024, %v548
      %v564 = vor.u32 %v562, %v563
      %vm565 = vcmp.lt.s32.totalorder %v546, 1
      %vm566 = vcmp.lt.s32.totalorder %v546, 2
      %vm567 = vcmp.lt.s32.totalorder %v546, 3
      %vm568 = vcmp.lt.s32.totalorder %v546, 4
      %v569 = vsel %vm565, %v549, %v552
      %v570 = vsel %vm568, %v558, 2102212464
      %v571 = vsel %vm567, %v555, %v570
      %v572 = vsel %vm566, %v569, %v571
      %v573 = vsel %vm565, %v552, %v555
      %v574 = vsel %vm568, %v561, 920167782
      %v575 = vsel %vm567, %v558, %v574
      %v576 = vsel %vm566, %v573, %v575
      %v577 = vsel %vm565, %v555, %v558
      %v578 = vsel %vm568, %v564, 1326507024
      %v579 = vsel %vm567, %v561, %v578
      %v580 = vsel %vm566, %v577, %v579
      %v581 = vshll.u32 %v541, 8
      %v582 = vmul.u32.u64.compose %v581, %v580
      %v583 = vextract.low.u32 %v582
      %v584 = vextract.high.u32 %v582
      %v585 = vmul.u32.u64.compose %v581, %v576
      %v586 = vextract.low.u32 %v585
      %v587 = vextract.high.u32 %v585
      %v588 = vmul.u32 %v581, %v572
      %v589 = vadd.s32 %v584, %v586
      %vm590 = vc.u32 %v584, %v586
      %v591 = vadd.s32 %v587, 1
      %v592 = vsel %vm590, %v591, %v587
      %v593 = vadd.s32 %v588, %v592
      %v594 = vadd.s32 %v593, 536870912
      %v595 = vshrl.u32 %v594, 30
      %v596 = vshll.u32 %v595, 30
      %v597 = vsub.s32 %v593, %v596
      %vm598 = vcmp.lt.s32.totalorder %v597, 0
      %v599 = vsub.s32 0, %v597
      %v600 = vsel %vm598, %v599, %v597
      %v601 = vclz %v600
      %v602 = vsub.s32 %v601, 2
      %vm603 = vcmp.gt.s32.totalorder 0, %v602
      %v604 = vsel %vm603, 0, %v602
      %v605 = vsub.s32 32, %v604
      %v606 = vshll.u32 %v597, %v604
      %v607 = vshrl.u32 %v589, %v605
      %v608 = vor.u32 %v606, %v607
      %v609 = vsub.s32 4294967266, %v604
      %v610 = vadd.s32 %v609, 127
      %v611 = vshll.u32 %v610, 23
      %v612 = vor.u32 4788187, %v611
      %v613 = vand.u32 2147483647, %v612
      %v615 = vcvt.s32.f32 %v608
      %v616 = vmul.f32 %v615, %v613
      %v617 = vxor.u32 %v616, 2147483648
      %v618 = vsel %vm535, %v617, %v616
      %v619 = vsub.s32 4, %v595
      %v620 = vsel %vm535, %v619, %v595
      %v621 = vsel %vm534, %v525, %v618
      %v622 = vsel %vm534, 0, %v620
      %v623 = vcosq.f32.pop %v621
      %v624 = vsinq.f32.pop %v621
      %vm625 = vweird.f32 %v525
      %v626 = vadd.s32 %v622, 3
      %v627 = vand.u32 %v626, 3
      %vm628 = vcmp.lt.s32.totalorder %v627, 2
      %vm629 = vcmp.eq.s32.totalorder %v627, 0
      %v630 = vxor.u32 %v624, 2147483648
      %v631 = vsel %vm629, %v623, %v630
      %vm632 = vcmp.eq.s32.totalorder %v627, 2
      %v633 = vxor.u32 %v623, 2147483648
      %v634 = vsel %vm632, %v633, %v624
      %v635 = vsel %vm628, %v631, %v634
      %v636 = vsel %vm625, nan, %v635
      %v637 = vand.u32 2147483647, %v526
      %vm638 = vcmp.le.f32.partialorder %v637, 0.7853982
      %vm639 = vcmp.lt.s32.totalorder %v526, 0
      %v640 = vand.u32 %v526, 2139095040
      %v641 = vshrl.u32 %v640, 23
      %v642 = vsub.s32 %v641, 127
      %v643 = vand.u32 2147483647, %v526
      %v644 = vand.u32 %v643, 8388607
      %v645 = vor.u32 %v644, 8388608
      %v646 = vsub.s32 0, %v645
      %v647 = vadd.s32 %v642, 1
      %vm648 = vcmp.gt.s32.totalorder %v647, 0
      %v649 = vsel %vm648, %v647, 0
      %v650 = vshrl.u32 %v649, 5
      %v651 = vand.u32 %v649, 31
      %v652 = vsub.s32 32, %v651
      %v653 = vshrl.u32 683565275, %v652
      %v654 = vshll.u32 683565275, %v651
      %v655 = vshrl.u32 2475754826, %v652
      %v656 = vor.u32 %v654, %v655
      %v657 = vshll.u32 2475754826, %v651
      %v658 = vshrl.u32 2131351028, %v652
      %v659 = vor.u32 %v657, %v658
      %v660 = vshll.u32 2131351028, %v651
      %v661 = vshrl.u32 2102212464, %v652
      %v662 = vor.u32 %v660, %v661
      %v663 = vshll.u32 2102212464, %v651
      %v664 = vshrl.u32 920167782, %v652
      %v665 = vor.u32 %v663, %v664
      %v666 = vshll.u32 920167782, %v651
      %v667 = vshrl.u32 1326507024, %v652
      %v668 = vor.u32 %v666, %v667
      %vm669 = vcmp.lt.s32.totalorder %v650, 1
      %vm670 = vcmp.lt.s32.totalorder %v650, 2
      %vm671 = vcmp.lt.s32.totalorder %v650, 3
      %vm672 = vcmp.lt.s32.totalorder %v650, 4
      %v673 = vsel %vm669, %v653, %v656
      %v674 = vsel %vm672, %v662, 2102212464
      %v675 = vsel %vm671, %v659, %v674
      %v676 = vsel %vm670, %v673, %v675
      %v677 = vsel %vm669, %v656, %v659
      %v678 = vsel %vm672, %v665, 920167782
      %v679 = vsel %vm671, %v662, %v678
      %v680 = vsel %vm670, %v677, %v679
      %v681 = vsel %vm669, %v659, %v662
      %v682 = vsel %vm672, %v668, 1326507024
      %v683 = vsel %vm671, %v665, %v682
      %v684 = vsel %vm670, %v681, %v683
      %v685 = vshll.u32 %v645, 8
      %v686 = vmul.u32.u64.compose %v685, %v684
      %v687 = vextract.low.u32 %v686
      %v688 = vextract.high.u32 %v686
      %v689 = vmul.u32.u64.compose %v685, %v680
      %v690 = vextract.low.u32 %v689
      %v691 = vextract.high.u32 %v689
      %v692 = vmul.u32 %v685, %v676
      %v693 = vadd.s32 %v688, %v690
      %vm694 = vc.u32 %v688, %v690
      %v695 = vadd.s32 %v691, 1
      %v696 = vsel %vm694, %v695, %v691
      %v697 = vadd.s32 %v692, %v696
      %v698 = vadd.s32 %v697, 536870912
      %v699 = vshrl.u32 %v698, 30
      %v700 = vshll.u32 %v699, 30
      %v701 = vsub.s32 %v697, %v700
      %vm702 = vcmp.lt.s32.totalorder %v701, 0
      %v703 = vsub.s32 0, %v701
      %v704 = vsel %vm702, %v703, %v701
      %v705 = vclz %v704
      %v706 = vsub.s32 %v705, 2
      %vm707 = vcmp.gt.s32.totalorder 0, %v706
      %v708 = vsel %vm707, 0, %v706
      %v709 = vsub.s32 32, %v708
      %v710 = vshll.u32 %v701, %v708
      %v711 = vshrl.u32 %v693, %v709
      %v712 = vor.u32 %v710, %v711
      %v713 = vsub.s32 4294967266, %v708
      %v714 = vadd.s32 %v713, 127
      %v715 = vshll.u32 %v714, 23
      %v716 = vor.u32 4788187, %v715
      %v717 = vand.u32 2147483647, %v716
      %v719 = vcvt.s32.f32 %v712
      %v720 = vmul.f32 %v719, %v717
      %v721 = vxor.u32 %v720, 2147483648
      %v722 = vsel %vm639, %v721, %v720
      %v723 = vsub.s32 4, %v699
      %v724 = vsel %vm639, %v723, %v699
      %v725 = vsel %vm638, %v526, %v722
      %v726 = vsel %vm638, 0, %v724
      %v727 = vcosq.f32.pop %v725
      %v728 = vsinq.f32.pop %v725
      %vm729 = vweird.f32 %v526
      %v730 = vadd.s32 %v726, 3
      %v731 = vand.u32 %v730, 3
      %vm732 = vcmp.lt.s32.totalorder %v731, 2
      %vm733 = vcmp.eq.s32.totalorder %v731, 0
      %v734 = vxor.u32 %v728, 2147483648
      %v735 = vsel %vm733, %v727, %v734
      %vm736 = vcmp.eq.s32.totalorder %v731, 2
      %v737 = vxor.u32 %v727, 2147483648
      %v738 = vsel %vm736, %v737, %v728
      %v739 = vsel %vm732, %v735, %v738
      %v740 = vsel %vm729, nan, %v739
      %v741 = vand.u32 2147483647, %v527
      %vm742 = vcmp.le.f32.partialorder %v741, 0.7853982
      %vm743 = vcmp.lt.s32.totalorder %v527, 0
      %v744 = vand.u32 %v527, 2139095040
      %v745 = vshrl.u32 %v744, 23
      %v746 = vsub.s32 %v745, 127
      %v747 = vand.u32 2147483647, %v527
      %v748 = vand.u32 %v747, 8388607
      %v749 = vor.u32 %v748, 8388608
      %v750 = vsub.s32 0, %v749
      %v751 = vadd.s32 %v746, 1
      %vm752 = vcmp.gt.s32.totalorder %v751, 0
      %v753 = vsel %vm752, %v751, 0
      %v754 = vshrl.u32 %v753, 5
      %v755 = vand.u32 %v753, 31
      %v756 = vsub.s32 32, %v755
      %v757 = vshrl.u32 683565275, %v756
      %v758 = vshll.u32 683565275, %v755
      %v759 = vshrl.u32 2475754826, %v756
      %v760 = vor.u32 %v758, %v759
      %v761 = vshll.u32 2475754826, %v755
      %v762 = vshrl.u32 2131351028, %v756
      %v763 = vor.u32 %v761, %v762
      %v764 = vshll.u32 2131351028, %v755
      %v765 = vshrl.u32 2102212464, %v756
      %v766 = vor.u32 %v764, %v765
      %v767 = vshll.u32 2102212464, %v755
      %v768 = vshrl.u32 920167782, %v756
      %v769 = vor.u32 %v767, %v768
      %v770 = vshll.u32 920167782, %v755
      %v771 = vshrl.u32 1326507024, %v756
      %v772 = vor.u32 %v770, %v771
      %vm773 = vcmp.lt.s32.totalorder %v754, 1
      %vm774 = vcmp.lt.s32.totalorder %v754, 2
      %vm775 = vcmp.lt.s32.totalorder %v754, 3
      %vm776 = vcmp.lt.s32.totalorder %v754, 4
      %v777 = vsel %vm773, %v757, %v760
      %v778 = vsel %vm776, %v766, 2102212464
      %v779 = vsel %vm775, %v763, %v778
      %v780 = vsel %vm774, %v777, %v779
      %v781 = vsel %vm773, %v760, %v763
      %v782 = vsel %vm776, %v769, 920167782
      %v783 = vsel %vm775, %v766, %v782
      %v784 = vsel %vm774, %v781, %v783
      %v785 = vsel %vm773, %v763, %v766
      %v786 = vsel %vm776, %v772, 1326507024
      %v787 = vsel %vm775, %v769, %v786
      %v788 = vsel %vm774, %v785, %v787
      %v789 = vshll.u32 %v749, 8
      %v790 = vmul.u32.u64.compose %v789, %v788
      %v791 = vextract.low.u32 %v790
      %v792 = vextract.high.u32 %v790
      %v793 = vmul.u32.u64.compose %v789, %v784
      %v794 = vextract.low.u32 %v793
      %v795 = vextract.high.u32 %v793
      %v796 = vmul.u32 %v789, %v780
      %v797 = vadd.s32 %v792, %v794
      %vm798 = vc.u32 %v792, %v794
      %v799 = vadd.s32 %v795, 1
      %v800 = vsel %vm798, %v799, %v795
      %v801 = vadd.s32 %v796, %v800
      %v802 = vadd.s32 %v801, 536870912
      %v803 = vshrl.u32 %v802, 30
      %v804 = vshll.u32 %v803, 30
      %v805 = vsub.s32 %v801, %v804
      %vm806 = vcmp.lt.s32.totalorder %v805, 0
      %v807 = vsub.s32 0, %v805
      %v808 = vsel %vm806, %v807, %v805
      %v809 = vclz %v808
      %v810 = vsub.s32 %v809, 2
      %vm811 = vcmp.gt.s32.totalorder 0, %v810
      %v812 = vsel %vm811, 0, %v810
      %v813 = vsub.s32 32, %v812
      %v814 = vshll.u32 %v805, %v812
      %v815 = vshrl.u32 %v797, %v813
      %v816 = vor.u32 %v814, %v815
      %v817 = vsub.s32 4294967266, %v812
      %v818 = vadd.s32 %v817, 127
      %v819 = vshll.u32 %v818, 23
      %v820 = vor.u32 4788187, %v819
      %v821 = vand.u32 2147483647, %v820
      %v823 = vcvt.s32.f32 %v816
      %v824 = vmul.f32 %v823, %v821
      %v825 = vxor.u32 %v824, 2147483648
      %v826 = vsel %vm743, %v825, %v824
      %v827 = vsub.s32 4, %v803
      %v828 = vsel %vm743, %v827, %v803
      %v829 = vsel %vm742, %v527, %v826
      %v830 = vsel %vm742, 0, %v828
      %v831 = vcosq.f32.pop %v829
      %v832 = vsinq.f32.pop %v829
      %vm833 = vweird.f32 %v527
      %v834 = vadd.s32 %v830, 3
      %v835 = vand.u32 %v834, 3
      %vm836 = vcmp.lt.s32.totalorder %v835, 2
      %vm837 = vcmp.eq.s32.totalorder %v835, 0
      %v838 = vxor.u32 %v832, 2147483648
      %v839 = vsel %vm837, %v831, %v838
      %vm840 = vcmp.eq.s32.totalorder %v835, 2
      %v841 = vxor.u32 %v831, 2147483648
      %v842 = vsel %vm840, %v841, %v832
      %v843 = vsel %vm836, %v839, %v842
      %v844 = vsel %vm833, nan, %v843
      %v845 = vand.u32 2147483647, %v528
      %vm846 = vcmp.le.f32.partialorder %v845, 0.7853982
      %vm847 = vcmp.lt.s32.totalorder %v528, 0
      %v848 = vand.u32 %v528, 2139095040
      %v849 = vshrl.u32 %v848, 23
      %v850 = vsub.s32 %v849, 127
      %v851 = vand.u32 2147483647, %v528
      %v852 = vand.u32 %v851, 8388607
      %v853 = vor.u32 %v852, 8388608
      %v854 = vsub.s32 0, %v853
      %v855 = vadd.s32 %v850, 1
      %vm856 = vcmp.gt.s32.totalorder %v855, 0
      %v857 = vsel %vm856, %v855, 0
      %v858 = vshrl.u32 %v857, 5
      %v859 = vand.u32 %v857, 31
      %v860 = vsub.s32 32, %v859
      %v861 = vshrl.u32 683565275, %v860
      %v862 = vshll.u32 683565275, %v859
      %v863 = vshrl.u32 2475754826, %v860
      %v864 = vor.u32 %v862, %v863
      %v865 = vshll.u32 2475754826, %v859
      %v866 = vshrl.u32 2131351028, %v860
      %v867 = vor.u32 %v865, %v866
      %v868 = vshll.u32 2131351028, %v859
      %v869 = vshrl.u32 2102212464, %v860
      %v870 = vor.u32 %v868, %v869
      %v871 = vshll.u32 2102212464, %v859
      %v872 = vshrl.u32 920167782, %v860
      %v873 = vor.u32 %v871, %v872
      %v874 = vshll.u32 920167782, %v859
      %v875 = vshrl.u32 1326507024, %v860
      %v876 = vor.u32 %v874, %v875
      %vm877 = vcmp.lt.s32.totalorder %v858, 1
      %vm878 = vcmp.lt.s32.totalorder %v858, 2
      %vm879 = vcmp.lt.s32.totalorder %v858, 3
      %vm880 = vcmp.lt.s32.totalorder %v858, 4
      %v881 = vsel %vm877, %v861, %v864
      %v882 = vsel %vm880, %v870, 2102212464
      %v883 = vsel %vm879, %v867, %v882
      %v884 = vsel %vm878, %v881, %v883
      %v885 = vsel %vm877, %v864, %v867
      %v886 = vsel %vm880, %v873, 920167782
      %v887 = vsel %vm879, %v870, %v886
      %v888 = vsel %vm878, %v885, %v887
      %v889 = vsel %vm877, %v867, %v870
      %v890 = vsel %vm880, %v876, 1326507024
      %v891 = vsel %vm879, %v873, %v890
      %v892 = vsel %vm878, %v889, %v891
      %v893 = vshll.u32 %v853, 8
      %v894 = vmul.u32.u64.compose %v893, %v892
      %v895 = vextract.low.u32 %v894
      %v896 = vextract.high.u32 %v894
      %v897 = vmul.u32.u64.compose %v893, %v888
      %v898 = vextract.low.u32 %v897
      %v899 = vextract.high.u32 %v897
      %v900 = vmul.u32 %v893, %v884
      %v901 = vadd.s32 %v896, %v898
      %vm902 = vc.u32 %v896, %v898
      %v903 = vadd.s32 %v899, 1
      %v904 = vsel %vm902, %v903, %v899
      %v905 = vadd.s32 %v900, %v904
      %v906 = vadd.s32 %v905, 536870912
      %v907 = vshrl.u32 %v906, 30
      %v908 = vshll.u32 %v907, 30
      %v909 = vsub.s32 %v905, %v908
      %vm910 = vcmp.lt.s32.totalorder %v909, 0
      %v911 = vsub.s32 0, %v909
      %v912 = vsel %vm910, %v911, %v909
      %v913 = vclz %v912
      %v914 = vsub.s32 %v913, 2
      %vm915 = vcmp.gt.s32.totalorder 0, %v914
      %v916 = vsel %vm915, 0, %v914
      %v917 = vsub.s32 32, %v916
      %v918 = vshll.u32 %v909, %v916
      %v919 = vshrl.u32 %v901, %v917
      %v920 = vor.u32 %v918, %v919
      %v921 = vsub.s32 4294967266, %v916
      %v922 = vadd.s32 %v921, 127
      %v923 = vshll.u32 %v922, 23
      %v924 = vor.u32 4788187, %v923
      %v925 = vand.u32 2147483647, %v924
      %v927 = vcvt.s32.f32 %v920
      %v928 = vmul.f32 %v927, %v925
      %v929 = vxor.u32 %v928, 2147483648
      %v930 = vsel %vm847, %v929, %v928
      %v931 = vsub.s32 4, %v907
      %v932 = vsel %vm847, %v931, %v907
      %v933 = vsel %vm846, %v528, %v930
      %v934 = vsel %vm846, 0, %v932
      %v935 = vcosq.f32.pop %v933
      %v936 = vsinq.f32.pop %v933
      %vm937 = vweird.f32 %v528
      %v938 = vadd.s32 %v934, 3
      %v939 = vand.u32 %v938, 3
      %vm940 = vcmp.lt.s32.totalorder %v939, 2
      %vm941 = vcmp.eq.s32.totalorder %v939, 0
      %v942 = vxor.u32 %v936, 2147483648
      %v943 = vsel %vm941, %v935, %v942
      %vm944 = vcmp.eq.s32.totalorder %v939, 2
      %v945 = vxor.u32 %v935, 2147483648
      %v946 = vsel %vm944, %v945, %v936
      %v947 = vsel %vm940, %v943, %v946
      %v948 = vsel %vm937, nan, %v947
      %v949 = vand.u32 2147483647, %v529
      %vm950 = vcmp.le.f32.partialorder %v949, 0.7853982
      %vm951 = vcmp.lt.s32.totalorder %v529, 0
      %v952 = vand.u32 %v529, 2139095040
      %v953 = vshrl.u32 %v952, 23
      %v954 = vsub.s32 %v953, 127
      %v955 = vand.u32 2147483647, %v529
      %v956 = vand.u32 %v955, 8388607
      %v957 = vor.u32 %v956, 8388608
      %v958 = vsub.s32 0, %v957
      %v959 = vadd.s32 %v954, 1
      %vm960 = vcmp.gt.s32.totalorder %v959, 0
      %v961 = vsel %vm960, %v959, 0
      %v962 = vshrl.u32 %v961, 5
      %v963 = vand.u32 %v961, 31
      %v964 = vsub.s32 32, %v963
      %v965 = vshrl.u32 683565275, %v964
      %v966 = vshll.u32 683565275, %v963
      %v967 = vshrl.u32 2475754826, %v964
      %v968 = vor.u32 %v966, %v967
      %v969 = vshll.u32 2475754826, %v963
      %v970 = vshrl.u32 2131351028, %v964
      %v971 = vor.u32 %v969, %v970
      %v972 = vshll.u32 2131351028, %v963
      %v973 = vshrl.u32 2102212464, %v964
      %v974 = vor.u32 %v972, %v973
      %v975 = vshll.u32 2102212464, %v963
      %v976 = vshrl.u32 920167782, %v964
      %v977 = vor.u32 %v975, %v976
      %v978 = vshll.u32 920167782, %v963
      %v979 = vshrl.u32 1326507024, %v964
      %v980 = vor.u32 %v978, %v979
      %vm981 = vcmp.lt.s32.totalorder %v962, 1
      %vm982 = vcmp.lt.s32.totalorder %v962, 2
      %vm983 = vcmp.lt.s32.totalorder %v962, 3
      %vm984 = vcmp.lt.s32.totalorder %v962, 4
      %v985 = vsel %vm981, %v965, %v968
      %v986 = vsel %vm984, %v974, 2102212464
      %v987 = vsel %vm983, %v971, %v986
      %v988 = vsel %vm982, %v985, %v987
      %v989 = vsel %vm981, %v968, %v971
      %v990 = vsel %vm984, %v977, 920167782
      %v991 = vsel %vm983, %v974, %v990
      %v992 = vsel %vm982, %v989, %v991
      %v993 = vsel %vm981, %v971, %v974
      %v994 = vsel %vm984, %v980, 1326507024
      %v995 = vsel %vm983, %v977, %v994
      %v996 = vsel %vm982, %v993, %v995
      %v997 = vshll.u32 %v957, 8
      %v998 = vmul.u32.u64.compose %v997, %v996
      %v999 = vextract.low.u32 %v998
      %v1000 = vextract.high.u32 %v998
      %v1001 = vmul.u32.u64.compose %v997, %v992
      %v1002 = vextract.low.u32 %v1001
      %v1003 = vextract.high.u32 %v1001
      %v1004 = vmul.u32 %v997, %v988
      %v1005 = vadd.s32 %v1000, %v1002
      %vm1006 = vc.u32 %v1000, %v1002
      %v1007 = vadd.s32 %v1003, 1
      %v1008 = vsel %vm1006, %v1007, %v1003
      %v1009 = vadd.s32 %v1004, %v1008
      %v1010 = vadd.s32 %v1009, 536870912
      %v1011 = vshrl.u32 %v1010, 30
      %v1012 = vshll.u32 %v1011, 30
      %v1013 = vsub.s32 %v1009, %v1012
      %vm1014 = vcmp.lt.s32.totalorder %v1013, 0
      %v1015 = vsub.s32 0, %v1013
      %v1016 = vsel %vm1014, %v1015, %v1013
      %v1017 = vclz %v1016
      %v1018 = vsub.s32 %v1017, 2
      %vm1019 = vcmp.gt.s32.totalorder 0, %v1018
      %v1020 = vsel %vm1019, 0, %v1018
      %v1021 = vsub.s32 32, %v1020
      %v1022 = vshll.u32 %v1013, %v1020
      %v1023 = vshrl.u32 %v1005, %v1021
      %v1024 = vor.u32 %v1022, %v1023
      %v1025 = vsub.s32 4294967266, %v1020
      %v1026 = vadd.s32 %v1025, 127
      %v1027 = vshll.u32 %v1026, 23
      %v1028 = vor.u32 4788187, %v1027
      %v1029 = vand.u32 2147483647, %v1028
      %v1031 = vcvt.s32.f32 %v1024
      %v1032 = vmul.f32 %v1031, %v1029
      %v1033 = vxor.u32 %v1032, 2147483648
      %v1034 = vsel %vm951, %v1033, %v1032
      %v1035 = vsub.s32 4, %v1011
      %v1036 = vsel %vm951, %v1035, %v1011
      %v1037 = vsel %vm950, %v529, %v1034
      %v1038 = vsel %vm950, 0, %v1036
      %v1039 = vcosq.f32.pop %v1037
      %v1040 = vsinq.f32.pop %v1037
      %vm1041 = vweird.f32 %v529
      %v1042 = vadd.s32 %v1038, 3
      %v1043 = vand.u32 %v1042, 3
      %vm1044 = vcmp.lt.s32.totalorder %v1043, 2
      %vm1045 = vcmp.eq.s32.totalorder %v1043, 0
      %v1046 = vxor.u32 %v1040, 2147483648
      %v1047 = vsel %vm1045, %v1039, %v1046
      %vm1048 = vcmp.eq.s32.totalorder %v1043, 2
      %v1049 = vxor.u32 %v1039, 2147483648
      %v1050 = vsel %vm1048, %v1049, %v1040
      %v1051 = vsel %vm1044, %v1047, %v1050
      %v1052 = vsel %vm1041, nan, %v1051
      %v1053 = vand.u32 2147483647, %v530
      %vm1054 = vcmp.le.f32.partialorder %v1053, 0.7853982
      %vm1055 = vcmp.lt.s32.totalorder %v530, 0
      %v1056 = vand.u32 %v530, 2139095040
      %v1057 = vshrl.u32 %v1056, 23
      %v1058 = vsub.s32 %v1057, 127
      %v1059 = vand.u32 2147483647, %v530
      %v1060 = vand.u32 %v1059, 8388607
      %v1061 = vor.u32 %v1060, 8388608
      %v1062 = vsub.s32 0, %v1061
      %v1063 = vadd.s32 %v1058, 1
      %vm1064 = vcmp.gt.s32.totalorder %v1063, 0
      %v1065 = vsel %vm1064, %v1063, 0
      %v1066 = vshrl.u32 %v1065, 5
      %v1067 = vand.u32 %v1065, 31
      %v1068 = vsub.s32 32, %v1067
      %v1069 = vshrl.u32 683565275, %v1068
      %v1070 = vshll.u32 683565275, %v1067
      %v1071 = vshrl.u32 2475754826, %v1068
      %v1072 = vor.u32 %v1070, %v1071
      %v1073 = vshll.u32 2475754826, %v1067
      %v1074 = vshrl.u32 2131351028, %v1068
      %v1075 = vor.u32 %v1073, %v1074
      %v1076 = vshll.u32 2131351028, %v1067
      %v1077 = vshrl.u32 2102212464, %v1068
      %v1078 = vor.u32 %v1076, %v1077
      %v1079 = vshll.u32 2102212464, %v1067
      %v1080 = vshrl.u32 920167782, %v1068
      %v1081 = vor.u32 %v1079, %v1080
      %v1082 = vshll.u32 920167782, %v1067
      %v1083 = vshrl.u32 1326507024, %v1068
      %v1084 = vor.u32 %v1082, %v1083
      %vm1085 = vcmp.lt.s32.totalorder %v1066, 1
      %vm1086 = vcmp.lt.s32.totalorder %v1066, 2
      %vm1087 = vcmp.lt.s32.totalorder %v1066, 3
      %vm1088 = vcmp.lt.s32.totalorder %v1066, 4
      %v1089 = vsel %vm1085, %v1069, %v1072
      %v1090 = vsel %vm1088, %v1078, 2102212464
      %v1091 = vsel %vm1087, %v1075, %v1090
      %v1092 = vsel %vm1086, %v1089, %v1091
      %v1093 = vsel %vm1085, %v1072, %v1075
      %v1094 = vsel %vm1088, %v1081, 920167782
      %v1095 = vsel %vm1087, %v1078, %v1094
      %v1096 = vsel %vm1086, %v1093, %v1095
      %v1097 = vsel %vm1085, %v1075, %v1078
      %v1098 = vsel %vm1088, %v1084, 1326507024
      %v1099 = vsel %vm1087, %v1081, %v1098
      %v1100 = vsel %vm1086, %v1097, %v1099
      %v1101 = vshll.u32 %v1061, 8
      %v1102 = vmul.u32.u64.compose %v1101, %v1100
      %v1103 = vextract.low.u32 %v1102
      %v1104 = vextract.high.u32 %v1102
      %v1105 = vmul.u32.u64.compose %v1101, %v1096
      %v1106 = vextract.low.u32 %v1105
      %v1107 = vextract.high.u32 %v1105
      %v1108 = vmul.u32 %v1101, %v1092
      %v1109 = vadd.s32 %v1104, %v1106
      %vm1110 = vc.u32 %v1104, %v1106
      %v1111 = vadd.s32 %v1107, 1
      %v1112 = vsel %vm1110, %v1111, %v1107
      %v1113 = vadd.s32 %v1108, %v1112
      %v1114 = vadd.s32 %v1113, 536870912
      %v1115 = vshrl.u32 %v1114, 30
      %v1116 = vshll.u32 %v1115, 30
      %v1117 = vsub.s32 %v1113, %v1116
      %vm1118 = vcmp.lt.s32.totalorder %v1117, 0
      %v1119 = vsub.s32 0, %v1117
      %v1120 = vsel %vm1118, %v1119, %v1117
      %v1121 = vclz %v1120
      %v1122 = vsub.s32 %v1121, 2
      %vm1123 = vcmp.gt.s32.totalorder 0, %v1122
      %v1124 = vsel %vm1123, 0, %v1122
      %v1125 = vsub.s32 32, %v1124
      %v1126 = vshll.u32 %v1117, %v1124
      %v1127 = vshrl.u32 %v1109, %v1125
      %v1128 = vor.u32 %v1126, %v1127
      %v1129 = vsub.s32 4294967266, %v1124
      %v1130 = vadd.s32 %v1129, 127
      %v1131 = vshll.u32 %v1130, 23
      %v1132 = vor.u32 4788187, %v1131
      %v1133 = vand.u32 2147483647, %v1132
      %v1135 = vcvt.s32.f32 %v1128
      %v1136 = vmul.f32 %v1135, %v1133
      %v1137 = vxor.u32 %v1136, 2147483648
      %v1138 = vsel %vm1055, %v1137, %v1136
      %v1139 = vsub.s32 4, %v1115
      %v1140 = vsel %vm1055, %v1139, %v1115
      %v1141 = vsel %vm1054, %v530, %v1138
      %v1142 = vsel %vm1054, 0, %v1140
      %v1143 = vcosq.f32.pop %v1141
      %v1144 = vsinq.f32.pop %v1141
      %vm1145 = vweird.f32 %v530
      %v1146 = vadd.s32 %v1142, 3
      %v1147 = vand.u32 %v1146, 3
      %vm1148 = vcmp.lt.s32.totalorder %v1147, 2
      %vm1149 = vcmp.eq.s32.totalorder %v1147, 0
      %v1150 = vxor.u32 %v1144, 2147483648
      %v1151 = vsel %vm1149, %v1143, %v1150
      %vm1152 = vcmp.eq.s32.totalorder %v1147, 2
      %v1153 = vxor.u32 %v1143, 2147483648
      %v1154 = vsel %vm1152, %v1153, %v1144
      %v1155 = vsel %vm1148, %v1151, %v1154
      %v1156 = vsel %vm1145, nan, %v1155
      %v1157 = vand.u32 2147483647, %v531
      %vm1158 = vcmp.le.f32.partialorder %v1157, 0.7853982
      %vm1159 = vcmp.lt.s32.totalorder %v531, 0
      %v1160 = vand.u32 %v531, 2139095040
      %v1161 = vshrl.u32 %v1160, 23
      %v1162 = vsub.s32 %v1161, 127
      %v1163 = vand.u32 2147483647, %v531
      %v1164 = vand.u32 %v1163, 8388607
      %v1165 = vor.u32 %v1164, 8388608
      %v1166 = vsub.s32 0, %v1165
      %v1167 = vadd.s32 %v1162, 1
      %vm1168 = vcmp.gt.s32.totalorder %v1167, 0
      %v1169 = vsel %vm1168, %v1167, 0
      %v1170 = vshrl.u32 %v1169, 5
      %v1171 = vand.u32 %v1169, 31
      %v1172 = vsub.s32 32, %v1171
      %v1173 = vshrl.u32 683565275, %v1172
      %v1174 = vshll.u32 683565275, %v1171
      %v1175 = vshrl.u32 2475754826, %v1172
      %v1176 = vor.u32 %v1174, %v1175
      %v1177 = vshll.u32 2475754826, %v1171
      %v1178 = vshrl.u32 2131351028, %v1172
      %v1179 = vor.u32 %v1177, %v1178
      %v1180 = vshll.u32 2131351028, %v1171
      %v1181 = vshrl.u32 2102212464, %v1172
      %v1182 = vor.u32 %v1180, %v1181
      %v1183 = vshll.u32 2102212464, %v1171
      %v1184 = vshrl.u32 920167782, %v1172
      %v1185 = vor.u32 %v1183, %v1184
      %v1186 = vshll.u32 920167782, %v1171
      %v1187 = vshrl.u32 1326507024, %v1172
      %v1188 = vor.u32 %v1186, %v1187
      %vm1189 = vcmp.lt.s32.totalorder %v1170, 1
      %vm1190 = vcmp.lt.s32.totalorder %v1170, 2
      %vm1191 = vcmp.lt.s32.totalorder %v1170, 3
      %vm1192 = vcmp.lt.s32.totalorder %v1170, 4
      %v1193 = vsel %vm1189, %v1173, %v1176
      %v1194 = vsel %vm1192, %v1182, 2102212464
      %v1195 = vsel %vm1191, %v1179, %v1194
      %v1196 = vsel %vm1190, %v1193, %v1195
      %v1197 = vsel %vm1189, %v1176, %v1179
      %v1198 = vsel %vm1192, %v1185, 920167782
      %v1199 = vsel %vm1191, %v1182, %v1198
      %v1200 = vsel %vm1190, %v1197, %v1199
      %v1201 = vsel %vm1189, %v1179, %v1182
      %v1202 = vsel %vm1192, %v1188, 1326507024
      %v1203 = vsel %vm1191, %v1185, %v1202
      %v1204 = vsel %vm1190, %v1201, %v1203
      %v1205 = vshll.u32 %v1165, 8
      %v1206 = vmul.u32.u64.compose %v1205, %v1204
      %v1207 = vextract.low.u32 %v1206
      %v1208 = vextract.high.u32 %v1206
      %v1209 = vmul.u32.u64.compose %v1205, %v1200
      %v1210 = vextract.low.u32 %v1209
      %v1211 = vextract.high.u32 %v1209
      %v1212 = vmul.u32 %v1205, %v1196
      %v1213 = vadd.s32 %v1208, %v1210
      %vm1214 = vc.u32 %v1208, %v1210
      %v1215 = vadd.s32 %v1211, 1
      %v1216 = vsel %vm1214, %v1215, %v1211
      %v1217 = vadd.s32 %v1212, %v1216
      %v1218 = vadd.s32 %v1217, 536870912
      %v1219 = vshrl.u32 %v1218, 30
      %v1220 = vshll.u32 %v1219, 30
      %v1221 = vsub.s32 %v1217, %v1220
      %vm1222 = vcmp.lt.s32.totalorder %v1221, 0
      %v1223 = vsub.s32 0, %v1221
      %v1224 = vsel %vm1222, %v1223, %v1221
      %v1225 = vclz %v1224
      %v1226 = vsub.s32 %v1225, 2
      %vm1227 = vcmp.gt.s32.totalorder 0, %v1226
      %v1228 = vsel %vm1227, 0, %v1226
      %v1229 = vsub.s32 32, %v1228
      %v1230 = vshll.u32 %v1221, %v1228
      %v1231 = vshrl.u32 %v1213, %v1229
      %v1232 = vor.u32 %v1230, %v1231
      %v1233 = vsub.s32 4294967266, %v1228
      %v1234 = vadd.s32 %v1233, 127
      %v1235 = vshll.u32 %v1234, 23
      %v1236 = vor.u32 4788187, %v1235
      %v1237 = vand.u32 2147483647, %v1236
      %v1239 = vcvt.s32.f32 %v1232
      %v1240 = vmul.f32 %v1239, %v1237
      %v1241 = vxor.u32 %v1240, 2147483648
      %v1242 = vsel %vm1159, %v1241, %v1240
      %v1243 = vsub.s32 4, %v1219
      %v1244 = vsel %vm1159, %v1243, %v1219
      %v1245 = vsel %vm1158, %v531, %v1242
      %v1246 = vsel %vm1158, 0, %v1244
      %v1247 = vcosq.f32.pop %v1245
      %v1248 = vsinq.f32.pop %v1245
      %vm1249 = vweird.f32 %v531
      %v1250 = vadd.s32 %v1246, 3
      %v1251 = vand.u32 %v1250, 3
      %vm1252 = vcmp.lt.s32.totalorder %v1251, 2
      %vm1253 = vcmp.eq.s32.totalorder %v1251, 0
      %v1254 = vxor.u32 %v1248, 2147483648
      %v1255 = vsel %vm1253, %v1247, %v1254
      %vm1256 = vcmp.eq.s32.totalorder %v1251, 2
      %v1257 = vxor.u32 %v1247, 2147483648
      %v1258 = vsel %vm1256, %v1257, %v1248
      %v1259 = vsel %vm1252, %v1255, %v1258
      %v1260 = vsel %vm1249, nan, %v1259
      %v1261 = vand.u32 2147483647, %v532
      %vm1262 = vcmp.le.f32.partialorder %v1261, 0.7853982
      %vm1263 = vcmp.lt.s32.totalorder %v532, 0
      %v1264 = vand.u32 %v532, 2139095040
      %v1265 = vshrl.u32 %v1264, 23
      %v1266 = vsub.s32 %v1265, 127
      %v1267 = vand.u32 2147483647, %v532
      %v1268 = vand.u32 %v1267, 8388607
      %v1269 = vor.u32 %v1268, 8388608
      %v1270 = vsub.s32 0, %v1269
      %v1271 = vadd.s32 %v1266, 1
      %vm1272 = vcmp.gt.s32.totalorder %v1271, 0
      %v1273 = vsel %vm1272, %v1271, 0
      %v1274 = vshrl.u32 %v1273, 5
      %v1275 = vand.u32 %v1273, 31
      %v1276 = vsub.s32 32, %v1275
      %v1277 = vshrl.u32 683565275, %v1276
      %v1278 = vshll.u32 683565275, %v1275
      %v1279 = vshrl.u32 2475754826, %v1276
      %v1280 = vor.u32 %v1278, %v1279
      %v1281 = vshll.u32 2475754826, %v1275
      %v1282 = vshrl.u32 2131351028, %v1276
      %v1283 = vor.u32 %v1281, %v1282
      %v1284 = vshll.u32 2131351028, %v1275
      %v1285 = vshrl.u32 2102212464, %v1276
      %v1286 = vor.u32 %v1284, %v1285
      %v1287 = vshll.u32 2102212464, %v1275
      %v1288 = vshrl.u32 920167782, %v1276
      %v1289 = vor.u32 %v1287, %v1288
      %v1290 = vshll.u32 920167782, %v1275
      %v1291 = vshrl.u32 1326507024, %v1276
      %v1292 = vor.u32 %v1290, %v1291
      %vm1293 = vcmp.lt.s32.totalorder %v1274, 1
      %vm1294 = vcmp.lt.s32.totalorder %v1274, 2
      %vm1295 = vcmp.lt.s32.totalorder %v1274, 3
      %vm1296 = vcmp.lt.s32.totalorder %v1274, 4
      %v1297 = vsel %vm1293, %v1277, %v1280
      %v1298 = vsel %vm1296, %v1286, 2102212464
      %v1299 = vsel %vm1295, %v1283, %v1298
      %v1300 = vsel %vm1294, %v1297, %v1299
      %v1301 = vsel %vm1293, %v1280, %v1283
      %v1302 = vsel %vm1296, %v1289, 920167782
      %v1303 = vsel %vm1295, %v1286, %v1302
      %v1304 = vsel %vm1294, %v1301, %v1303
      %v1305 = vsel %vm1293, %v1283, %v1286
      %v1306 = vsel %vm1296, %v1292, 1326507024
      %v1307 = vsel %vm1295, %v1289, %v1306
      %v1308 = vsel %vm1294, %v1305, %v1307
      %v1309 = vshll.u32 %v1269, 8
      %v1310 = vmul.u32.u64.compose %v1309, %v1308
      %v1311 = vextract.low.u32 %v1310
      %v1312 = vextract.high.u32 %v1310
      %v1313 = vmul.u32.u64.compose %v1309, %v1304
      %v1314 = vextract.low.u32 %v1313
      %v1315 = vextract.high.u32 %v1313
      %v1316 = vmul.u32 %v1309, %v1300
      %v1317 = vadd.s32 %v1312, %v1314
      %vm1318 = vc.u32 %v1312, %v1314
      %v1319 = vadd.s32 %v1315, 1
      %v1320 = vsel %vm1318, %v1319, %v1315
      %v1321 = vadd.s32 %v1316, %v1320
      %v1322 = vadd.s32 %v1321, 536870912
      %v1323 = vshrl.u32 %v1322, 30
      %v1324 = vshll.u32 %v1323, 30
      %v1325 = vsub.s32 %v1321, %v1324
      %vm1326 = vcmp.lt.s32.totalorder %v1325, 0
      %v1327 = vsub.s32 0, %v1325
      %v1328 = vsel %vm1326, %v1327, %v1325
      %v1329 = vclz %v1328
      %v1330 = vsub.s32 %v1329, 2
      %vm1331 = vcmp.gt.s32.totalorder 0, %v1330
      %v1332 = vsel %vm1331, 0, %v1330
      %v1333 = vsub.s32 32, %v1332
      %v1334 = vshll.u32 %v1325, %v1332
      %v1335 = vshrl.u32 %v1317, %v1333
      %v1336 = vor.u32 %v1334, %v1335
      %v1337 = vsub.s32 4294967266, %v1332
      %v1338 = vadd.s32 %v1337, 127
      %v1339 = vshll.u32 %v1338, 23
      %v1340 = vor.u32 4788187, %v1339
      %v1341 = vand.u32 2147483647, %v1340
      %v1343 = vcvt.s32.f32 %v1336
      %v1344 = vmul.f32 %v1343, %v1341
      %v1345 = vxor.u32 %v1344, 2147483648
      %v1346 = vsel %vm1263, %v1345, %v1344
      %v1347 = vsub.s32 4, %v1323
      %v1348 = vsel %vm1263, %v1347, %v1323
      %v1349 = vsel %vm1262, %v532, %v1346
      %v1350 = vsel %vm1262, 0, %v1348
      %v1351 = vcosq.f32.pop %v1349
      %v1352 = vsinq.f32.pop %v1349
      %vm1353 = vweird.f32 %v532
      %v1354 = vadd.s32 %v1350, 3
      %v1355 = vand.u32 %v1354, 3
      %vm1356 = vcmp.lt.s32.totalorder %v1355, 2
      %vm1357 = vcmp.eq.s32.totalorder %v1355, 0
      %v1358 = vxor.u32 %v1352, 2147483648
      %v1359 = vsel %vm1357, %v1351, %v1358
      %vm1360 = vcmp.eq.s32.totalorder %v1355, 2
      %v1361 = vxor.u32 %v1351, 2147483648
      %v1362 = vsel %vm1360, %v1361, %v1352
      %v1363 = vsel %vm1356, %v1359, %v1362
      %v1364 = vsel %vm1353, nan, %v1363
      %v1365 = vand.u32 2147483647, %v525
      %vm1366 = vcmp.le.f32.partialorder %v1365, 0.7853982
      %vm1367 = vcmp.lt.s32.totalorder %v525, 0
      %v1368 = vand.u32 %v525, 2139095040
      %v1369 = vshrl.u32 %v1368, 23
      %v1370 = vsub.s32 %v1369, 127
      %v1371 = vand.u32 2147483647, %v525
      %v1372 = vand.u32 %v1371, 8388607
      %v1373 = vor.u32 %v1372, 8388608
      %v1374 = vsub.s32 0, %v1373
      %v1375 = vadd.s32 %v1370, 1
      %vm1376 = vcmp.gt.s32.totalorder %v1375, 0
      %v1377 = vsel %vm1376, %v1375, 0
      %v1378 = vshrl.u32 %v1377, 5
      %v1379 = vand.u32 %v1377, 31
      %v1380 = vsub.s32 32, %v1379
      %v1381 = vshrl.u32 683565275, %v1380
      %v1382 = vshll.u32 683565275, %v1379
      %v1383 = vshrl.u32 2475754826, %v1380
      %v1384 = vor.u32 %v1382, %v1383
      %v1385 = vshll.u32 2475754826, %v1379
      %v1386 = vshrl.u32 2131351028, %v1380
      %v1387 = vor.u32 %v1385, %v1386
      %v1388 = vshll.u32 2131351028, %v1379
      %v1389 = vshrl.u32 2102212464, %v1380
      %v1390 = vor.u32 %v1388, %v1389
      %v1391 = vshll.u32 2102212464, %v1379
      %v1392 = vshrl.u32 920167782, %v1380
      %v1393 = vor.u32 %v1391, %v1392
      %v1394 = vshll.u32 920167782, %v1379
      %v1395 = vshrl.u32 1326507024, %v1380
      %v1396 = vor.u32 %v1394, %v1395
      %vm1397 = vcmp.lt.s32.totalorder %v1378, 1
      %vm1398 = vcmp.lt.s32.totalorder %v1378, 2
      %vm1399 = vcmp.lt.s32.totalorder %v1378, 3
      %vm1400 = vcmp.lt.s32.totalorder %v1378, 4
      %v1401 = vsel %vm1397, %v1381, %v1384
      %v1402 = vsel %vm1400, %v1390, 2102212464
      %v1403 = vsel %vm1399, %v1387, %v1402
      %v1404 = vsel %vm1398, %v1401, %v1403
      %v1405 = vsel %vm1397, %v1384, %v1387
      %v1406 = vsel %vm1400, %v1393, 920167782
      %v1407 = vsel %vm1399, %v1390, %v1406
      %v1408 = vsel %vm1398, %v1405, %v1407
      %v1409 = vsel %vm1397, %v1387, %v1390
      %v1410 = vsel %vm1400, %v1396, 1326507024
      %v1411 = vsel %vm1399, %v1393, %v1410
      %v1412 = vsel %vm1398, %v1409, %v1411
      %v1413 = vshll.u32 %v1373, 8
      %v1414 = vmul.u32.u64.compose %v1413, %v1412
      %v1415 = vextract.low.u32 %v1414
      %v1416 = vextract.high.u32 %v1414
      %v1417 = vmul.u32.u64.compose %v1413, %v1408
      %v1418 = vextract.low.u32 %v1417
      %v1419 = vextract.high.u32 %v1417
      %v1420 = vmul.u32 %v1413, %v1404
      %v1421 = vadd.s32 %v1416, %v1418
      %vm1422 = vc.u32 %v1416, %v1418
      %v1423 = vadd.s32 %v1419, 1
      %v1424 = vsel %vm1422, %v1423, %v1419
      %v1425 = vadd.s32 %v1420, %v1424
      %v1426 = vadd.s32 %v1425, 536870912
      %v1427 = vshrl.u32 %v1426, 30
      %v1428 = vshll.u32 %v1427, 30
      %v1429 = vsub.s32 %v1425, %v1428
      %vm1430 = vcmp.lt.s32.totalorder %v1429, 0
      %v1431 = vsub.s32 0, %v1429
      %v1432 = vsel %vm1430, %v1431, %v1429
      %v1433 = vclz %v1432
      %v1434 = vsub.s32 %v1433, 2
      %vm1435 = vcmp.gt.s32.totalorder 0, %v1434
      %v1436 = vsel %vm1435, 0, %v1434
      %v1437 = vsub.s32 32, %v1436
      %v1438 = vshll.u32 %v1429, %v1436
      %v1439 = vshrl.u32 %v1421, %v1437
      %v1440 = vor.u32 %v1438, %v1439
      %v1441 = vsub.s32 4294967266, %v1436
      %v1442 = vadd.s32 %v1441, 127
      %v1443 = vshll.u32 %v1442, 23
      %v1444 = vor.u32 4788187, %v1443
      %v1445 = vand.u32 2147483647, %v1444
      %v1447 = vcvt.s32.f32 %v1440
      %v1448 = vmul.f32 %v1447, %v1445
      %v1449 = vxor.u32 %v1448, 2147483648
      %v1450 = vsel %vm1367, %v1449, %v1448
      %v1451 = vsub.s32 4, %v1427
      %v1452 = vsel %vm1367, %v1451, %v1427
      %v1453 = vsel %vm1366, %v525, %v1450
      %v1454 = vsel %vm1366, 0, %v1452
      %v1455 = vcosq.f32.pop %v1453
      %v1456 = vsinq.f32.pop %v1453
      %vm1457 = vweird.f32 %v525
      %v1458 = vand.u32 %v1454, 3
      %vm1459 = vcmp.lt.s32.totalorder %v1458, 2
      %vm1460 = vcmp.eq.s32.totalorder %v1458, 0
      %v1461 = vxor.u32 %v1456, 2147483648
      %v1462 = vsel %vm1460, %v1455, %v1461
      %vm1463 = vcmp.eq.s32.totalorder %v1458, 2
      %v1464 = vxor.u32 %v1455, 2147483648
      %v1465 = vsel %vm1463, %v1464, %v1456
      %v1466 = vsel %vm1459, %v1462, %v1465
      %v1467 = vsel %vm1457, nan, %v1466
      %v1468 = vand.u32 2147483647, %v526
      %vm1469 = vcmp.le.f32.partialorder %v1468, 0.7853982
      %vm1470 = vcmp.lt.s32.totalorder %v526, 0
      %v1471 = vand.u32 %v526, 2139095040
      %v1472 = vshrl.u32 %v1471, 23
      %v1473 = vsub.s32 %v1472, 127
      %v1474 = vand.u32 2147483647, %v526
      %v1475 = vand.u32 %v1474, 8388607
      %v1476 = vor.u32 %v1475, 8388608
      %v1477 = vsub.s32 0, %v1476
      %v1478 = vadd.s32 %v1473, 1
      %vm1479 = vcmp.gt.s32.totalorder %v1478, 0
      %v1480 = vsel %vm1479, %v1478, 0
      %v1481 = vshrl.u32 %v1480, 5
      %v1482 = vand.u32 %v1480, 31
      %v1483 = vsub.s32 32, %v1482
      %v1484 = vshrl.u32 683565275, %v1483
      %v1485 = vshll.u32 683565275, %v1482
      %v1486 = vshrl.u32 2475754826, %v1483
      %v1487 = vor.u32 %v1485, %v1486
      %v1488 = vshll.u32 2475754826, %v1482
      %v1489 = vshrl.u32 2131351028, %v1483
      %v1490 = vor.u32 %v1488, %v1489
      %v1491 = vshll.u32 2131351028, %v1482
      %v1492 = vshrl.u32 2102212464, %v1483
      %v1493 = vor.u32 %v1491, %v1492
      %v1494 = vshll.u32 2102212464, %v1482
      %v1495 = vshrl.u32 920167782, %v1483
      %v1496 = vor.u32 %v1494, %v1495
      %v1497 = vshll.u32 920167782, %v1482
      %v1498 = vshrl.u32 1326507024, %v1483
      %v1499 = vor.u32 %v1497, %v1498
      %vm1500 = vcmp.lt.s32.totalorder %v1481, 1
      %vm1501 = vcmp.lt.s32.totalorder %v1481, 2
      %vm1502 = vcmp.lt.s32.totalorder %v1481, 3
      %vm1503 = vcmp.lt.s32.totalorder %v1481, 4
      %v1504 = vsel %vm1500, %v1484, %v1487
      %v1505 = vsel %vm1503, %v1493, 2102212464
      %v1506 = vsel %vm1502, %v1490, %v1505
      %v1507 = vsel %vm1501, %v1504, %v1506
      %v1508 = vsel %vm1500, %v1487, %v1490
      %v1509 = vsel %vm1503, %v1496, 920167782
      %v1510 = vsel %vm1502, %v1493, %v1509
      %v1511 = vsel %vm1501, %v1508, %v1510
      %v1512 = vsel %vm1500, %v1490, %v1493
      %v1513 = vsel %vm1503, %v1499, 1326507024
      %v1514 = vsel %vm1502, %v1496, %v1513
      %v1515 = vsel %vm1501, %v1512, %v1514
      %v1516 = vshll.u32 %v1476, 8
      %v1517 = vmul.u32.u64.compose %v1516, %v1515
      %v1518 = vextract.low.u32 %v1517
      %v1519 = vextract.high.u32 %v1517
      %v1520 = vmul.u32.u64.compose %v1516, %v1511
      %v1521 = vextract.low.u32 %v1520
      %v1522 = vextract.high.u32 %v1520
      %v1523 = vmul.u32 %v1516, %v1507
      %v1524 = vadd.s32 %v1519, %v1521
      %vm1525 = vc.u32 %v1519, %v1521
      %v1526 = vadd.s32 %v1522, 1
      %v1527 = vsel %vm1525, %v1526, %v1522
      %v1528 = vadd.s32 %v1523, %v1527
      %v1529 = vadd.s32 %v1528, 536870912
      %v1530 = vshrl.u32 %v1529, 30
      %v1531 = vshll.u32 %v1530, 30
      %v1532 = vsub.s32 %v1528, %v1531
      %vm1533 = vcmp.lt.s32.totalorder %v1532, 0
      %v1534 = vsub.s32 0, %v1532
      %v1535 = vsel %vm1533, %v1534, %v1532
      %v1536 = vclz %v1535
      %v1537 = vsub.s32 %v1536, 2
      %vm1538 = vcmp.gt.s32.totalorder 0, %v1537
      %v1539 = vsel %vm1538, 0, %v1537
      %v1540 = vsub.s32 32, %v1539
      %v1541 = vshll.u32 %v1532, %v1539
      %v1542 = vshrl.u32 %v1524, %v1540
      %v1543 = vor.u32 %v1541, %v1542
      %v1544 = vsub.s32 4294967266, %v1539
      %v1545 = vadd.s32 %v1544, 127
      %v1546 = vshll.u32 %v1545, 23
      %v1547 = vor.u32 4788187, %v1546
      %v1548 = vand.u32 2147483647, %v1547
      %v1550 = vcvt.s32.f32 %v1543
      %v1551 = vmul.f32 %v1550, %v1548
      %v1552 = vxor.u32 %v1551, 2147483648
      %v1553 = vsel %vm1470, %v1552, %v1551
      %v1554 = vsub.s32 4, %v1530
      %v1555 = vsel %vm1470, %v1554, %v1530
      %v1556 = vsel %vm1469, %v526, %v1553
      %v1557 = vsel %vm1469, 0, %v1555
      %v1558 = vcosq.f32.pop %v1556
      %v1559 = vsinq.f32.pop %v1556
      %vm1560 = vweird.f32 %v526
      %v1561 = vand.u32 %v1557, 3
      %vm1562 = vcmp.lt.s32.totalorder %v1561, 2
      %vm1563 = vcmp.eq.s32.totalorder %v1561, 0
      %v1564 = vxor.u32 %v1559, 2147483648
      %v1565 = vsel %vm1563, %v1558, %v1564
      %vm1566 = vcmp.eq.s32.totalorder %v1561, 2
      %v1567 = vxor.u32 %v1558, 2147483648
      %v1568 = vsel %vm1566, %v1567, %v1559
      %v1569 = vsel %vm1562, %v1565, %v1568
      %v1570 = vsel %vm1560, nan, %v1569
      %v1571 = vand.u32 2147483647, %v527
      %vm1572 = vcmp.le.f32.partialorder %v1571, 0.7853982
      %vm1573 = vcmp.lt.s32.totalorder %v527, 0
      %v1574 = vand.u32 %v527, 2139095040
      %v1575 = vshrl.u32 %v1574, 23
      %v1576 = vsub.s32 %v1575, 127
      %v1577 = vand.u32 2147483647, %v527
      %v1578 = vand.u32 %v1577, 8388607
      %v1579 = vor.u32 %v1578, 8388608
      %v1580 = vsub.s32 0, %v1579
      %v1581 = vadd.s32 %v1576, 1
      %vm1582 = vcmp.gt.s32.totalorder %v1581, 0
      %v1583 = vsel %vm1582, %v1581, 0
      %v1584 = vshrl.u32 %v1583, 5
      %v1585 = vand.u32 %v1583, 31
      %v1586 = vsub.s32 32, %v1585
      %v1587 = vshrl.u32 683565275, %v1586
      %v1588 = vshll.u32 683565275, %v1585
      %v1589 = vshrl.u32 2475754826, %v1586
      %v1590 = vor.u32 %v1588, %v1589
      %v1591 = vshll.u32 2475754826, %v1585
      %v1592 = vshrl.u32 2131351028, %v1586
      %v1593 = vor.u32 %v1591, %v1592
      %v1594 = vshll.u32 2131351028, %v1585
      %v1595 = vshrl.u32 2102212464, %v1586
      %v1596 = vor.u32 %v1594, %v1595
      %v1597 = vshll.u32 2102212464, %v1585
      %v1598 = vshrl.u32 920167782, %v1586
      %v1599 = vor.u32 %v1597, %v1598
      %v1600 = vshll.u32 920167782, %v1585
      %v1601 = vshrl.u32 1326507024, %v1586
      %v1602 = vor.u32 %v1600, %v1601
      %vm1603 = vcmp.lt.s32.totalorder %v1584, 1
      %vm1604 = vcmp.lt.s32.totalorder %v1584, 2
      %vm1605 = vcmp.lt.s32.totalorder %v1584, 3
      %vm1606 = vcmp.lt.s32.totalorder %v1584, 4
      %v1607 = vsel %vm1603, %v1587, %v1590
      %v1608 = vsel %vm1606, %v1596, 2102212464
      %v1609 = vsel %vm1605, %v1593, %v1608
      %v1610 = vsel %vm1604, %v1607, %v1609
      %v1611 = vsel %vm1603, %v1590, %v1593
      %v1612 = vsel %vm1606, %v1599, 920167782
      %v1613 = vsel %vm1605, %v1596, %v1612
      %v1614 = vsel %vm1604, %v1611, %v1613
      %v1615 = vsel %vm1603, %v1593, %v1596
      %v1616 = vsel %vm1606, %v1602, 1326507024
      %v1617 = vsel %vm1605, %v1599, %v1616
      %v1618 = vsel %vm1604, %v1615, %v1617
      %v1619 = vshll.u32 %v1579, 8
      %v1620 = vmul.u32.u64.compose %v1619, %v1618
      %v1621 = vextract.low.u32 %v1620
      %v1622 = vextract.high.u32 %v1620
      %v1623 = vmul.u32.u64.compose %v1619, %v1614
      %v1624 = vextract.low.u32 %v1623
      %v1625 = vextract.high.u32 %v1623
      %v1626 = vmul.u32 %v1619, %v1610
      %v1627 = vadd.s32 %v1622, %v1624
      %vm1628 = vc.u32 %v1622, %v1624
      %v1629 = vadd.s32 %v1625, 1
      %v1630 = vsel %vm1628, %v1629, %v1625
      %v1631 = vadd.s32 %v1626, %v1630
      %v1632 = vadd.s32 %v1631, 536870912
      %v1633 = vshrl.u32 %v1632, 30
      %v1634 = vshll.u32 %v1633, 30
      %v1635 = vsub.s32 %v1631, %v1634
      %vm1636 = vcmp.lt.s32.totalorder %v1635, 0
      %v1637 = vsub.s32 0, %v1635
      %v1638 = vsel %vm1636, %v1637, %v1635
      %v1639 = vclz %v1638
      %v1640 = vsub.s32 %v1639, 2
      %vm1641 = vcmp.gt.s32.totalorder 0, %v1640
      %v1642 = vsel %vm1641, 0, %v1640
      %v1643 = vsub.s32 32, %v1642
      %v1644 = vshll.u32 %v1635, %v1642
      %v1645 = vshrl.u32 %v1627, %v1643
      %v1646 = vor.u32 %v1644, %v1645
      %v1647 = vsub.s32 4294967266, %v1642
      %v1648 = vadd.s32 %v1647, 127
      %v1649 = vshll.u32 %v1648, 23
      %v1650 = vor.u32 4788187, %v1649
      %v1651 = vand.u32 2147483647, %v1650
      %v1653 = vcvt.s32.f32 %v1646
      %v1654 = vmul.f32 %v1653, %v1651
      %v1655 = vxor.u32 %v1654, 2147483648
      %v1656 = vsel %vm1573, %v1655, %v1654
      %v1657 = vsub.s32 4, %v1633
      %v1658 = vsel %vm1573, %v1657, %v1633
      %v1659 = vsel %vm1572, %v527, %v1656
      %v1660 = vsel %vm1572, 0, %v1658
      %v1661 = vcosq.f32.pop %v1659
      %v1662 = vsinq.f32.pop %v1659
      %vm1663 = vweird.f32 %v527
      %v1664 = vand.u32 %v1660, 3
      %vm1665 = vcmp.lt.s32.totalorder %v1664, 2
      %vm1666 = vcmp.eq.s32.totalorder %v1664, 0
      %v1667 = vxor.u32 %v1662, 2147483648
      %v1668 = vsel %vm1666, %v1661, %v1667
      %vm1669 = vcmp.eq.s32.totalorder %v1664, 2
      %v1670 = vxor.u32 %v1661, 2147483648
      %v1671 = vsel %vm1669, %v1670, %v1662
      %v1672 = vsel %vm1665, %v1668, %v1671
      %v1673 = vsel %vm1663, nan, %v1672
      %v1674 = vand.u32 2147483647, %v528
      %vm1675 = vcmp.le.f32.partialorder %v1674, 0.7853982
      %vm1676 = vcmp.lt.s32.totalorder %v528, 0
      %v1677 = vand.u32 %v528, 2139095040
      %v1678 = vshrl.u32 %v1677, 23
      %v1679 = vsub.s32 %v1678, 127
      %v1680 = vand.u32 2147483647, %v528
      %v1681 = vand.u32 %v1680, 8388607
      %v1682 = vor.u32 %v1681, 8388608
      %v1683 = vsub.s32 0, %v1682
      %v1684 = vadd.s32 %v1679, 1
      %vm1685 = vcmp.gt.s32.totalorder %v1684, 0
      %v1686 = vsel %vm1685, %v1684, 0
      %v1687 = vshrl.u32 %v1686, 5
      %v1688 = vand.u32 %v1686, 31
      %v1689 = vsub.s32 32, %v1688
      %v1690 = vshrl.u32 683565275, %v1689
      %v1691 = vshll.u32 683565275, %v1688
      %v1692 = vshrl.u32 2475754826, %v1689
      %v1693 = vor.u32 %v1691, %v1692
      %v1694 = vshll.u32 2475754826, %v1688
      %v1695 = vshrl.u32 2131351028, %v1689
      %v1696 = vor.u32 %v1694, %v1695
      %v1697 = vshll.u32 2131351028, %v1688
      %v1698 = vshrl.u32 2102212464, %v1689
      %v1699 = vor.u32 %v1697, %v1698
      %v1700 = vshll.u32 2102212464, %v1688
      %v1701 = vshrl.u32 920167782, %v1689
      %v1702 = vor.u32 %v1700, %v1701
      %v1703 = vshll.u32 920167782, %v1688
      %v1704 = vshrl.u32 1326507024, %v1689
      %v1705 = vor.u32 %v1703, %v1704
      %vm1706 = vcmp.lt.s32.totalorder %v1687, 1
      %vm1707 = vcmp.lt.s32.totalorder %v1687, 2
      %vm1708 = vcmp.lt.s32.totalorder %v1687, 3
      %vm1709 = vcmp.lt.s32.totalorder %v1687, 4
      %v1710 = vsel %vm1706, %v1690, %v1693
      %v1711 = vsel %vm1709, %v1699, 2102212464
      %v1712 = vsel %vm1708, %v1696, %v1711
      %v1713 = vsel %vm1707, %v1710, %v1712
      %v1714 = vsel %vm1706, %v1693, %v1696
      %v1715 = vsel %vm1709, %v1702, 920167782
      %v1716 = vsel %vm1708, %v1699, %v1715
      %v1717 = vsel %vm1707, %v1714, %v1716
      %v1718 = vsel %vm1706, %v1696, %v1699
      %v1719 = vsel %vm1709, %v1705, 1326507024
      %v1720 = vsel %vm1708, %v1702, %v1719
      %v1721 = vsel %vm1707, %v1718, %v1720
      %v1722 = vshll.u32 %v1682, 8
      %v1723 = vmul.u32.u64.compose %v1722, %v1721
      %v1724 = vextract.low.u32 %v1723
      %v1725 = vextract.high.u32 %v1723
      %v1726 = vmul.u32.u64.compose %v1722, %v1717
      %v1727 = vextract.low.u32 %v1726
      %v1728 = vextract.high.u32 %v1726
      %v1729 = vmul.u32 %v1722, %v1713
      %v1730 = vadd.s32 %v1725, %v1727
      %vm1731 = vc.u32 %v1725, %v1727
      %v1732 = vadd.s32 %v1728, 1
      %v1733 = vsel %vm1731, %v1732, %v1728
      %v1734 = vadd.s32 %v1729, %v1733
      %v1735 = vadd.s32 %v1734, 536870912
      %v1736 = vshrl.u32 %v1735, 30
      %v1737 = vshll.u32 %v1736, 30
      %v1738 = vsub.s32 %v1734, %v1737
      %vm1739 = vcmp.lt.s32.totalorder %v1738, 0
      %v1740 = vsub.s32 0, %v1738
      %v1741 = vsel %vm1739, %v1740, %v1738
      %v1742 = vclz %v1741
      %v1743 = vsub.s32 %v1742, 2
      %vm1744 = vcmp.gt.s32.totalorder 0, %v1743
      %v1745 = vsel %vm1744, 0, %v1743
      %v1746 = vsub.s32 32, %v1745
      %v1747 = vshll.u32 %v1738, %v1745
      %v1748 = vshrl.u32 %v1730, %v1746
      %v1749 = vor.u32 %v1747, %v1748
      %v1750 = vsub.s32 4294967266, %v1745
      %v1751 = vadd.s32 %v1750, 127
      %v1752 = vshll.u32 %v1751, 23
      %v1753 = vor.u32 4788187, %v1752
      %v1754 = vand.u32 2147483647, %v1753
      %v1756 = vcvt.s32.f32 %v1749
      %v1757 = vmul.f32 %v1756, %v1754
      %v1758 = vxor.u32 %v1757, 2147483648
      %v1759 = vsel %vm1676, %v1758, %v1757
      %v1760 = vsub.s32 4, %v1736
      %v1761 = vsel %vm1676, %v1760, %v1736
      %v1762 = vsel %vm1675, %v528, %v1759
      %v1763 = vsel %vm1675, 0, %v1761
      %v1764 = vcosq.f32.pop %v1762
      %v1765 = vsinq.f32.pop %v1762
      %vm1766 = vweird.f32 %v528
      %v1767 = vand.u32 %v1763, 3
      %vm1768 = vcmp.lt.s32.totalorder %v1767, 2
      %vm1769 = vcmp.eq.s32.totalorder %v1767, 0
      %v1770 = vxor.u32 %v1765, 2147483648
      %v1771 = vsel %vm1769, %v1764, %v1770
      %vm1772 = vcmp.eq.s32.totalorder %v1767, 2
      %v1773 = vxor.u32 %v1764, 2147483648
      %v1774 = vsel %vm1772, %v1773, %v1765
      %v1775 = vsel %vm1768, %v1771, %v1774
      %v1776 = vsel %vm1766, nan, %v1775
      %v1777 = vand.u32 2147483647, %v529
      %vm1778 = vcmp.le.f32.partialorder %v1777, 0.7853982
      %vm1779 = vcmp.lt.s32.totalorder %v529, 0
      %v1780 = vand.u32 %v529, 2139095040
      %v1781 = vshrl.u32 %v1780, 23
      %v1782 = vsub.s32 %v1781, 127
      %v1783 = vand.u32 2147483647, %v529
      %v1784 = vand.u32 %v1783, 8388607
      %v1785 = vor.u32 %v1784, 8388608
      %v1786 = vsub.s32 0, %v1785
      %v1787 = vadd.s32 %v1782, 1
      %vm1788 = vcmp.gt.s32.totalorder %v1787, 0
      %v1789 = vsel %vm1788, %v1787, 0
      %v1790 = vshrl.u32 %v1789, 5
      %v1791 = vand.u32 %v1789, 31
      %v1792 = vsub.s32 32, %v1791
      %v1793 = vshrl.u32 683565275, %v1792
      %v1794 = vshll.u32 683565275, %v1791
      %v1795 = vshrl.u32 2475754826, %v1792
      %v1796 = vor.u32 %v1794, %v1795
      %v1797 = vshll.u32 2475754826, %v1791
      %v1798 = vshrl.u32 2131351028, %v1792
      %v1799 = vor.u32 %v1797, %v1798
      %v1800 = vshll.u32 2131351028, %v1791
      %v1801 = vshrl.u32 2102212464, %v1792
      %v1802 = vor.u32 %v1800, %v1801
      %v1803 = vshll.u32 2102212464, %v1791
      %v1804 = vshrl.u32 920167782, %v1792
      %v1805 = vor.u32 %v1803, %v1804
      %v1806 = vshll.u32 920167782, %v1791
      %v1807 = vshrl.u32 1326507024, %v1792
      %v1808 = vor.u32 %v1806, %v1807
      %vm1809 = vcmp.lt.s32.totalorder %v1790, 1
      %vm1810 = vcmp.lt.s32.totalorder %v1790, 2
      %vm1811 = vcmp.lt.s32.totalorder %v1790, 3
      %vm1812 = vcmp.lt.s32.totalorder %v1790, 4
      %v1813 = vsel %vm1809, %v1793, %v1796
      %v1814 = vsel %vm1812, %v1802, 2102212464
      %v1815 = vsel %vm1811, %v1799, %v1814
      %v1816 = vsel %vm1810, %v1813, %v1815
      %v1817 = vsel %vm1809, %v1796, %v1799
      %v1818 = vsel %vm1812, %v1805, 920167782
      %v1819 = vsel %vm1811, %v1802, %v1818
      %v1820 = vsel %vm1810, %v1817, %v1819
      %v1821 = vsel %vm1809, %v1799, %v1802
      %v1822 = vsel %vm1812, %v1808, 1326507024
      %v1823 = vsel %vm1811, %v1805, %v1822
      %v1824 = vsel %vm1810, %v1821, %v1823
      %v1825 = vshll.u32 %v1785, 8
      %v1826 = vmul.u32.u64.compose %v1825, %v1824
      %v1827 = vextract.low.u32 %v1826
      %v1828 = vextract.high.u32 %v1826
      %v1829 = vmul.u32.u64.compose %v1825, %v1820
      %v1830 = vextract.low.u32 %v1829
      %v1831 = vextract.high.u32 %v1829
      %v1832 = vmul.u32 %v1825, %v1816
      %v1833 = vadd.s32 %v1828, %v1830
      %vm1834 = vc.u32 %v1828, %v1830
      %v1835 = vadd.s32 %v1831, 1
      %v1836 = vsel %vm1834, %v1835, %v1831
      %v1837 = vadd.s32 %v1832, %v1836
      %v1838 = vadd.s32 %v1837, 536870912
      %v1839 = vshrl.u32 %v1838, 30
      %v1840 = vshll.u32 %v1839, 30
      %v1841 = vsub.s32 %v1837, %v1840
      %vm1842 = vcmp.lt.s32.totalorder %v1841, 0
      %v1843 = vsub.s32 0, %v1841
      %v1844 = vsel %vm1842, %v1843, %v1841
      %v1845 = vclz %v1844
      %v1846 = vsub.s32 %v1845, 2
      %vm1847 = vcmp.gt.s32.totalorder 0, %v1846
      %v1848 = vsel %vm1847, 0, %v1846
      %v1849 = vsub.s32 32, %v1848
      %v1850 = vshll.u32 %v1841, %v1848
      %v1851 = vshrl.u32 %v1833, %v1849
      %v1852 = vor.u32 %v1850, %v1851
      %v1853 = vsub.s32 4294967266, %v1848
      %v1854 = vadd.s32 %v1853, 127
      %v1855 = vshll.u32 %v1854, 23
      %v1856 = vor.u32 4788187, %v1855
      %v1857 = vand.u32 2147483647, %v1856
      %v1859 = vcvt.s32.f32 %v1852
      %v1860 = vmul.f32 %v1859, %v1857
      %v1861 = vxor.u32 %v1860, 2147483648
      %v1862 = vsel %vm1779, %v1861, %v1860
      %v1863 = vsub.s32 4, %v1839
      %v1864 = vsel %vm1779, %v1863, %v1839
      %v1865 = vsel %vm1778, %v529, %v1862
      %v1866 = vsel %vm1778, 0, %v1864
      %v1867 = vcosq.f32.pop %v1865
      %v1868 = vsinq.f32.pop %v1865
      %vm1869 = vweird.f32 %v529
      %v1870 = vand.u32 %v1866, 3
      %vm1871 = vcmp.lt.s32.totalorder %v1870, 2
      %vm1872 = vcmp.eq.s32.totalorder %v1870, 0
      %v1873 = vxor.u32 %v1868, 2147483648
      %v1874 = vsel %vm1872, %v1867, %v1873
      %vm1875 = vcmp.eq.s32.totalorder %v1870, 2
      %v1876 = vxor.u32 %v1867, 2147483648
      %v1877 = vsel %vm1875, %v1876, %v1868
      %v1878 = vsel %vm1871, %v1874, %v1877
      %v1879 = vsel %vm1869, nan, %v1878
      %v1880 = vand.u32 2147483647, %v530
      %vm1881 = vcmp.le.f32.partialorder %v1880, 0.7853982
      %vm1882 = vcmp.lt.s32.totalorder %v530, 0
      %v1883 = vand.u32 %v530, 2139095040
      %v1884 = vshrl.u32 %v1883, 23
      %v1885 = vsub.s32 %v1884, 127
      %v1886 = vand.u32 2147483647, %v530
      %v1887 = vand.u32 %v1886, 8388607
      %v1888 = vor.u32 %v1887, 8388608
      %v1889 = vsub.s32 0, %v1888
      %v1890 = vadd.s32 %v1885, 1
      %vm1891 = vcmp.gt.s32.totalorder %v1890, 0
      %v1892 = vsel %vm1891, %v1890, 0
      %v1893 = vshrl.u32 %v1892, 5
      %v1894 = vand.u32 %v1892, 31
      %v1895 = vsub.s32 32, %v1894
      %v1896 = vshrl.u32 683565275, %v1895
      %v1897 = vshll.u32 683565275, %v1894
      %v1898 = vshrl.u32 2475754826, %v1895
      %v1899 = vor.u32 %v1897, %v1898
      %v1900 = vshll.u32 2475754826, %v1894
      %v1901 = vshrl.u32 2131351028, %v1895
      %v1902 = vor.u32 %v1900, %v1901
      %v1903 = vshll.u32 2131351028, %v1894
      %v1904 = vshrl.u32 2102212464, %v1895
      %v1905 = vor.u32 %v1903, %v1904
      %v1906 = vshll.u32 2102212464, %v1894
      %v1907 = vshrl.u32 920167782, %v1895
      %v1908 = vor.u32 %v1906, %v1907
      %v1909 = vshll.u32 920167782, %v1894
      %v1910 = vshrl.u32 1326507024, %v1895
      %v1911 = vor.u32 %v1909, %v1910
      %vm1912 = vcmp.lt.s32.totalorder %v1893, 1
      %vm1913 = vcmp.lt.s32.totalorder %v1893, 2
      %vm1914 = vcmp.lt.s32.totalorder %v1893, 3
      %vm1915 = vcmp.lt.s32.totalorder %v1893, 4
      %v1916 = vsel %vm1912, %v1896, %v1899
      %v1917 = vsel %vm1915, %v1905, 2102212464
      %v1918 = vsel %vm1914, %v1902, %v1917
      %v1919 = vsel %vm1913, %v1916, %v1918
      %v1920 = vsel %vm1912, %v1899, %v1902
      %v1921 = vsel %vm1915, %v1908, 920167782
      %v1922 = vsel %vm1914, %v1905, %v1921
      %v1923 = vsel %vm1913, %v1920, %v1922
      %v1924 = vsel %vm1912, %v1902, %v1905
      %v1925 = vsel %vm1915, %v1911, 1326507024
      %v1926 = vsel %vm1914, %v1908, %v1925
      %v1927 = vsel %vm1913, %v1924, %v1926
      %v1928 = vshll.u32 %v1888, 8
      %v1929 = vmul.u32.u64.compose %v1928, %v1927
      %v1930 = vextract.low.u32 %v1929
      %v1931 = vextract.high.u32 %v1929
      %v1932 = vmul.u32.u64.compose %v1928, %v1923
      %v1933 = vextract.low.u32 %v1932
      %v1934 = vextract.high.u32 %v1932
      %v1935 = vmul.u32 %v1928, %v1919
      %v1936 = vadd.s32 %v1931, %v1933
      %vm1937 = vc.u32 %v1931, %v1933
      %v1938 = vadd.s32 %v1934, 1
      %v1939 = vsel %vm1937, %v1938, %v1934
      %v1940 = vadd.s32 %v1935, %v1939
      %v1941 = vadd.s32 %v1940, 536870912
      %v1942 = vshrl.u32 %v1941, 30
      %v1943 = vshll.u32 %v1942, 30
      %v1944 = vsub.s32 %v1940, %v1943
      %vm1945 = vcmp.lt.s32.totalorder %v1944, 0
      %v1946 = vsub.s32 0, %v1944
      %v1947 = vsel %vm1945, %v1946, %v1944
      %v1948 = vclz %v1947
      %v1949 = vsub.s32 %v1948, 2
      %vm1950 = vcmp.gt.s32.totalorder 0, %v1949
      %v1951 = vsel %vm1950, 0, %v1949
      %v1952 = vsub.s32 32, %v1951
      %v1953 = vshll.u32 %v1944, %v1951
      %v1954 = vshrl.u32 %v1936, %v1952
      %v1955 = vor.u32 %v1953, %v1954
      %v1956 = vsub.s32 4294967266, %v1951
      %v1957 = vadd.s32 %v1956, 127
      %v1958 = vshll.u32 %v1957, 23
      %v1959 = vor.u32 4788187, %v1958
      %v1960 = vand.u32 2147483647, %v1959
      %v1962 = vcvt.s32.f32 %v1955
      %v1963 = vmul.f32 %v1962, %v1960
      %v1964 = vxor.u32 %v1963, 2147483648
      %v1965 = vsel %vm1882, %v1964, %v1963
      %v1966 = vsub.s32 4, %v1942
      %v1967 = vsel %vm1882, %v1966, %v1942
      %v1968 = vsel %vm1881, %v530, %v1965
      %v1969 = vsel %vm1881, 0, %v1967
      %v1970 = vcosq.f32.pop %v1968
      %v1971 = vsinq.f32.pop %v1968
      %vm1972 = vweird.f32 %v530
      %v1973 = vand.u32 %v1969, 3
      %vm1974 = vcmp.lt.s32.totalorder %v1973, 2
      %vm1975 = vcmp.eq.s32.totalorder %v1973, 0
      %v1976 = vxor.u32 %v1971, 2147483648
      %v1977 = vsel %vm1975, %v1970, %v1976
      %vm1978 = vcmp.eq.s32.totalorder %v1973, 2
      %v1979 = vxor.u32 %v1970, 2147483648
      %v1980 = vsel %vm1978, %v1979, %v1971
      %v1981 = vsel %vm1974, %v1977, %v1980
      %v1982 = vsel %vm1972, nan, %v1981
      %v1983 = vand.u32 2147483647, %v531
      %vm1984 = vcmp.le.f32.partialorder %v1983, 0.7853982
      %vm1985 = vcmp.lt.s32.totalorder %v531, 0
      %v1986 = vand.u32 %v531, 2139095040
      %v1987 = vshrl.u32 %v1986, 23
      %v1988 = vsub.s32 %v1987, 127
      %v1989 = vand.u32 2147483647, %v531
      %v1990 = vand.u32 %v1989, 8388607
      %v1991 = vor.u32 %v1990, 8388608
      %v1992 = vsub.s32 0, %v1991
      %v1993 = vadd.s32 %v1988, 1
      %vm1994 = vcmp.gt.s32.totalorder %v1993, 0
      %v1995 = vsel %vm1994, %v1993, 0
      %v1996 = vshrl.u32 %v1995, 5
      %v1997 = vand.u32 %v1995, 31
      %v1998 = vsub.s32 32, %v1997
      %v1999 = vshrl.u32 683565275, %v1998
      %v2000 = vshll.u32 683565275, %v1997
      %v2001 = vshrl.u32 2475754826, %v1998
      %v2002 = vor.u32 %v2000, %v2001
      %v2003 = vshll.u32 2475754826, %v1997
      %v2004 = vshrl.u32 2131351028, %v1998
      %v2005 = vor.u32 %v2003, %v2004
      %v2006 = vshll.u32 2131351028, %v1997
      %v2007 = vshrl.u32 2102212464, %v1998
      %v2008 = vor.u32 %v2006, %v2007
      %v2009 = vshll.u32 2102212464, %v1997
      %v2010 = vshrl.u32 920167782, %v1998
      %v2011 = vor.u32 %v2009, %v2010
      %v2012 = vshll.u32 920167782, %v1997
      %v2013 = vshrl.u32 1326507024, %v1998
      %v2014 = vor.u32 %v2012, %v2013
      %vm2015 = vcmp.lt.s32.totalorder %v1996, 1
      %vm2016 = vcmp.lt.s32.totalorder %v1996, 2
      %vm2017 = vcmp.lt.s32.totalorder %v1996, 3
      %vm2018 = vcmp.lt.s32.totalorder %v1996, 4
      %v2019 = vsel %vm2015, %v1999, %v2002
      %v2020 = vsel %vm2018, %v2008, 2102212464
      %v2021 = vsel %vm2017, %v2005, %v2020
      %v2022 = vsel %vm2016, %v2019, %v2021
      %v2023 = vsel %vm2015, %v2002, %v2005
      %v2024 = vsel %vm2018, %v2011, 920167782
      %v2025 = vsel %vm2017, %v2008, %v2024
      %v2026 = vsel %vm2016, %v2023, %v2025
      %v2027 = vsel %vm2015, %v2005, %v2008
      %v2028 = vsel %vm2018, %v2014, 1326507024
      %v2029 = vsel %vm2017, %v2011, %v2028
      %v2030 = vsel %vm2016, %v2027, %v2029
      %v2031 = vshll.u32 %v1991, 8
      %v2032 = vmul.u32.u64.compose %v2031, %v2030
      %v2033 = vextract.low.u32 %v2032
      %v2034 = vextract.high.u32 %v2032
      %v2035 = vmul.u32.u64.compose %v2031, %v2026
      %v2036 = vextract.low.u32 %v2035
      %v2037 = vextract.high.u32 %v2035
      %v2038 = vmul.u32 %v2031, %v2022
      %v2039 = vadd.s32 %v2034, %v2036
      %vm2040 = vc.u32 %v2034, %v2036
      %v2041 = vadd.s32 %v2037, 1
      %v2042 = vsel %vm2040, %v2041, %v2037
      %v2043 = vadd.s32 %v2038, %v2042
      %v2044 = vadd.s32 %v2043, 536870912
      %v2045 = vshrl.u32 %v2044, 30
      %v2046 = vshll.u32 %v2045, 30
      %v2047 = vsub.s32 %v2043, %v2046
      %vm2048 = vcmp.lt.s32.totalorder %v2047, 0
      %v2049 = vsub.s32 0, %v2047
      %v2050 = vsel %vm2048, %v2049, %v2047
      %v2051 = vclz %v2050
      %v2052 = vsub.s32 %v2051, 2
      %vm2053 = vcmp.gt.s32.totalorder 0, %v2052
      %v2054 = vsel %vm2053, 0, %v2052
      %v2055 = vsub.s32 32, %v2054
      %v2056 = vshll.u32 %v2047, %v2054
      %v2057 = vshrl.u32 %v2039, %v2055
      %v2058 = vor.u32 %v2056, %v2057
      %v2059 = vsub.s32 4294967266, %v2054
      %v2060 = vadd.s32 %v2059, 127
      %v2061 = vshll.u32 %v2060, 23
      %v2062 = vor.u32 4788187, %v2061
      %v2063 = vand.u32 2147483647, %v2062
      %v2065 = vcvt.s32.f32 %v2058
      %v2066 = vmul.f32 %v2065, %v2063
      %v2067 = vxor.u32 %v2066, 2147483648
      %v2068 = vsel %vm1985, %v2067, %v2066
      %v2069 = vsub.s32 4, %v2045
      %v2070 = vsel %vm1985, %v2069, %v2045
      %v2071 = vsel %vm1984, %v531, %v2068
      %v2072 = vsel %vm1984, 0, %v2070
      %v2073 = vcosq.f32.pop %v2071
      %v2074 = vsinq.f32.pop %v2071
      %vm2075 = vweird.f32 %v531
      %v2076 = vand.u32 %v2072, 3
      %vm2077 = vcmp.lt.s32.totalorder %v2076, 2
      %vm2078 = vcmp.eq.s32.totalorder %v2076, 0
      %v2079 = vxor.u32 %v2074, 2147483648
      %v2080 = vsel %vm2078, %v2073, %v2079
      %vm2081 = vcmp.eq.s32.totalorder %v2076, 2
      %v2082 = vxor.u32 %v2073, 2147483648
      %v2083 = vsel %vm2081, %v2082, %v2074
      %v2084 = vsel %vm2077, %v2080, %v2083
      %v2085 = vsel %vm2075, nan, %v2084
      %v2086 = vand.u32 2147483647, %v532
      %vm2087 = vcmp.le.f32.partialorder %v2086, 0.7853982
      %vm2088 = vcmp.lt.s32.totalorder %v532, 0
      %v2089 = vand.u32 %v532, 2139095040
      %v2090 = vshrl.u32 %v2089, 23
      %v2091 = vsub.s32 %v2090, 127
      %v2092 = vand.u32 2147483647, %v532
      %v2093 = vand.u32 %v2092, 8388607
      %v2094 = vor.u32 %v2093, 8388608
      %v2095 = vsub.s32 0, %v2094
      %v2096 = vadd.s32 %v2091, 1
      %vm2097 = vcmp.gt.s32.totalorder %v2096, 0
      %v2098 = vsel %vm2097, %v2096, 0
      %v2099 = vshrl.u32 %v2098, 5
      %v2100 = vand.u32 %v2098, 31
      %v2101 = vsub.s32 32, %v2100
      %v2102 = vshrl.u32 683565275, %v2101
      %v2103 = vshll.u32 683565275, %v2100
      %v2104 = vshrl.u32 2475754826, %v2101
      %v2105 = vor.u32 %v2103, %v2104
      %v2106 = vshll.u32 2475754826, %v2100
      %v2107 = vshrl.u32 2131351028, %v2101
      %v2108 = vor.u32 %v2106, %v2107
      %v2109 = vshll.u32 2131351028, %v2100
      %v2110 = vshrl.u32 2102212464, %v2101
      %v2111 = vor.u32 %v2109, %v2110
      %v2112 = vshll.u32 2102212464, %v2100
      %v2113 = vshrl.u32 920167782, %v2101
      %v2114 = vor.u32 %v2112, %v2113
      %v2115 = vshll.u32 920167782, %v2100
      %v2116 = vshrl.u32 1326507024, %v2101
      %v2117 = vor.u32 %v2115, %v2116
      %vm2118 = vcmp.lt.s32.totalorder %v2099, 1
      %vm2119 = vcmp.lt.s32.totalorder %v2099, 2
      %vm2120 = vcmp.lt.s32.totalorder %v2099, 3
      %vm2121 = vcmp.lt.s32.totalorder %v2099, 4
      %v2122 = vsel %vm2118, %v2102, %v2105
      %v2123 = vsel %vm2121, %v2111, 2102212464
      %v2124 = vsel %vm2120, %v2108, %v2123
      %v2125 = vsel %vm2119, %v2122, %v2124
      %v2126 = vsel %vm2118, %v2105, %v2108
      %v2127 = vsel %vm2121, %v2114, 920167782
      %v2128 = vsel %vm2120, %v2111, %v2127
      %v2129 = vsel %vm2119, %v2126, %v2128
      %v2130 = vsel %vm2118, %v2108, %v2111
      %v2131 = vsel %vm2121, %v2117, 1326507024
      %v2132 = vsel %vm2120, %v2114, %v2131
      %v2133 = vsel %vm2119, %v2130, %v2132
      %v2134 = vshll.u32 %v2094, 8
      %v2135 = vmul.u32.u64.compose %v2134, %v2133
      %v2136 = vextract.low.u32 %v2135
      %v2137 = vextract.high.u32 %v2135
      %v2138 = vmul.u32.u64.compose %v2134, %v2129
      %v2139 = vextract.low.u32 %v2138
      %v2140 = vextract.high.u32 %v2138
      %v2141 = vmul.u32 %v2134, %v2125
      %v2142 = vadd.s32 %v2137, %v2139
      %vm2143 = vc.u32 %v2137, %v2139
      %v2144 = vadd.s32 %v2140, 1
      %v2145 = vsel %vm2143, %v2144, %v2140
      %v2146 = vadd.s32 %v2141, %v2145
      %v2147 = vadd.s32 %v2146, 536870912
      %v2148 = vshrl.u32 %v2147, 30
      %v2149 = vshll.u32 %v2148, 30
      %v2150 = vsub.s32 %v2146, %v2149
      %vm2151 = vcmp.lt.s32.totalorder %v2150, 0
      %v2152 = vsub.s32 0, %v2150
      %v2153 = vsel %vm2151, %v2152, %v2150
      %v2154 = vclz %v2153
      %v2155 = vsub.s32 %v2154, 2
      %vm2156 = vcmp.gt.s32.totalorder 0, %v2155
      %v2157 = vsel %vm2156, 0, %v2155
      %v2158 = vsub.s32 32, %v2157
      %v2159 = vshll.u32 %v2150, %v2157
      %v2160 = vshrl.u32 %v2142, %v2158
      %v2161 = vor.u32 %v2159, %v2160
      %v2162 = vsub.s32 4294967266, %v2157
      %v2163 = vadd.s32 %v2162, 127
      %v2164 = vshll.u32 %v2163, 23
      %v2165 = vor.u32 4788187, %v2164
      %v2166 = vand.u32 2147483647, %v2165
      %v2168 = vcvt.s32.f32 %v2161
      %v2169 = vmul.f32 %v2168, %v2166
      %v2170 = vxor.u32 %v2169, 2147483648
      %v2171 = vsel %vm2088, %v2170, %v2169
      %v2172 = vsub.s32 4, %v2148
      %v2173 = vsel %vm2088, %v2172, %v2148
      %v2174 = vsel %vm2087, %v532, %v2171
      %v2175 = vsel %vm2087, 0, %v2173
      %v2176 = vcosq.f32.pop %v2174
      %v2177 = vsinq.f32.pop %v2174
      %vm2178 = vweird.f32 %v532
      %v2179 = vand.u32 %v2175, 3
      %vm2180 = vcmp.lt.s32.totalorder %v2179, 2
      %vm2181 = vcmp.eq.s32.totalorder %v2179, 0
      %v2182 = vxor.u32 %v2177, 2147483648
      %v2183 = vsel %vm2181, %v2176, %v2182
      %vm2184 = vcmp.eq.s32.totalorder %v2179, 2
      %v2185 = vxor.u32 %v2176, 2147483648
      %v2186 = vsel %vm2184, %v2185, %v2177
      %v2187 = vsel %vm2180, %v2183, %v2186
      %v2188 = vsel %vm2178, nan, %v2187
      %vm2197 = vcmask 1043456
      %v2198 = vrot.slane %v1467, 4
      %v2199 = vrot.slane %v1570, 4
      %v2200 = vrot.slane %v1673, 4
      %v2201 = vrot.slane %v1776, 4
      %v2202 = vrot.slane %v1879, 4
      %v2203 = vsel %vm2197, %v2198, %v2202
      %v2204 = vrot.slane %v1982, 4
      %v2205 = vsel %vm2197, %v2199, %v2204
      %v2206 = vrot.slane %v2085, 4
      %v2207 = vsel %vm2197, %v2200, %v2206
      %v2208 = vrot.slane %v2188, 4
      %v2209 = vsel %vm2197, %v2201, %v2208
      %v2218 = vsel %vm2197, %v1052, %v2198
      %v2219 = vsel %vm2197, %v1156, %v2199
      %v2220 = vsel %vm2197, %v1260, %v2200
      %v2221 = vsel %vm2197, %v1364, %v2201
      %v2222 = vpack.c.bf16 %v2218, %v636
      %v2223 = vpack.c.bf16 %v2219, %v740
      %v2224 = vpack.c.bf16 %v2220, %v844
      %v2225 = vpack.c.bf16 %v2221, %v948
      %v2226 = vpack.c.bf16 %v2203, %v2203
      %v2227 = vpack.c.bf16 %v2205, %v2205
      %v2228 = vpack.c.bf16 %v2207, %v2207
      %v2229 = vpack.c.bf16 %v2209, %v2209
      %v2230 = vld [vmem:[%s8] sm:$0xf]
      %v2231 = vld [vmem:[%s8 + $0x4] sm:$0xf]
      %v2232 = vld [vmem:[%s8 + $0x8] sm:$0xf]
      %v2236 = vunpack.c.l.b16 %v2230
      %v2237 = vunpack.c.l.b16 %v2231
      %v2238 = vunpack.c.l.b16 %v2232
      %v2239 = vpack.c.b16 %v2237, %v2236
      %v2240 = vpack.c.b16 %v2238, %v2238
      %vm2241 = vcmask 195584
      %v2243 = vsel %vm2241, %v2239, 0
      %v2246 = vsel %vm2241, %v2240, 0
      %v2249 = vsel %vm2197, %v2226, 0
      %v2252 = vsel %vm2197, %v2227, 0
      %v2255 = vsel %vm2197, %v2228, 0
      %v2258 = vsel %vm2197, %v2229, 0
      %2260 = vmatprep.subr.bf16.mxu0 %v2223
      %2261 = vmatpush1.bf16.msra.mxu0 %v2222
      %2262 = vmatprep.subr.bf16.mxu0 %v2252
      %2263 = vmatpush1.bf16.msra.mxu0 %v2249
      %2264 = vmatprep.subr.bf16.mxu0 0
      %2265 = vmatpush1.bf16.msra.mxu0 0
      %2266 = vmatprep.subr.bf16.mxu0 0
      %2267 = vmatpush1.bf16.msra.mxu0 0
      %2268 = vmatprep.subr.bf16.mxu0 0
      %2269 = vmatpush1.bf16.msra.mxu0 0
      %2270 = vmatprep.subr.bf16.mxu0 0
      %2271 = vmatpush1.bf16.msra.mxu0 0
      %2272 = vmatprep.subr.bf16.mxu0 0
      %2273 = vmatpush1.bf16.msra.mxu0 0
      %2274 = vmatprep.subr.bf16.mxu0 0
      %2275 = vmatpush1.bf16.msra.mxu0 0
      %2276 = vmatprep.subr.bf16.mxu0 0
      %2277 = vmatpush1.bf16.msra.mxu0 0
      %2278 = vmatprep.subr.bf16.mxu0 0
      %2279 = vmatpush1.bf16.msra.mxu0 0
      %2280 = vmatprep.subr.bf16.mxu0 0
      %2281 = vmatpush1.bf16.msra.mxu0 0
      %2282 = vmatprep.subr.bf16.mxu0 0
      %2283 = vmatpush1.bf16.msra.mxu0 0
      %2284 = vmatprep.subr.bf16.mxu0 0
      %2285 = vmatpush1.bf16.msra.mxu0 0
      %2286 = vmatprep.subr.bf16.mxu0 0
      %2287 = vmatpush1.bf16.msra.mxu0 0
      %2288 = vmatprep.subr.bf16.mxu0 0
      %2289 = vmatpush1.bf16.msra.mxu0 0
      %2290 = vmatprep.subr.bf16.mxu0 0
      %2291 = vmatpush1.bf16.msra.mxu0 0
      %2292 = vmatprep.mubr.bf16.mxu0 0
      %2293 = vmatmul.mubr.bf16.gmra.mrb[0].mxu0 %v2243
      %v2294 = vpop.f32.mrb[0].mxu0
      %v2295 = vadd.f32 0.0, %v2294
      %v2296 = vpop.f32.mrb[0].mxu0
      %v2297 = vadd.f32 0.0, %v2296
      %v2298 = vpop.f32.mrb[0].mxu0
      %v2299 = vadd.f32 0.0, %v2298
      %v2300 = vpop.f32.mrb[0].mxu0
      %v2301 = vadd.f32 0.0, %v2300
      %2302 = vmatprep.mubr.bf16.mxu0 0
      %2303 = vmatmul.mubr.bf16.gmra.mrb[0].mxu0 %v2246
      %v2304 = vpop.f32.mrb[0].mxu0
      %v2305 = vadd.f32 0.0, %v2304
      %v2306 = vpop.f32.mrb[0].mxu0
      %v2307 = vadd.f32 0.0, %v2306
      %v2308 = vpop.f32.mrb[0].mxu0
      %v2309 = vpop.f32.mrb[0].mxu0
      %2310 = vdwg.mxu0
      %2311 = vmatprep.subr.bf16.mxu0 %v2225
      %2312 = vmatpush1.bf16.msra.mxu0 %v2224
      %2313 = vmatprep.subr.bf16.mxu0 %v2258
      %2314 = vmatpush1.bf16.msra.mxu0 %v2255
      %2315 = vmatprep.subr.bf16.mxu0 0
      %2316 = vmatpush1.bf16.msra.mxu0 0
      %2317 = vmatprep.subr.bf16.mxu0 0
      %2318 = vmatpush1.bf16.msra.mxu0 0
      %2319 = vmatprep.subr.bf16.mxu0 0
      %2320 = vmatpush1.bf16.msra.mxu0 0
      %2321 = vmatprep.subr.bf16.mxu0 0
      %2322 = vmatpush1.bf16.msra.mxu0 0
      %2323 = vmatprep.subr.bf16.mxu0 0
      %2324 = vmatpush1.bf16.msra.mxu0 0
      %2325 = vmatprep.subr.bf16.mxu0 0
      %2326 = vmatpush1.bf16.msra.mxu0 0
      %2327 = vmatprep.subr.bf16.mxu0 0
      %2328 = vmatpush1.bf16.msra.mxu0 0
      %2329 = vmatprep.subr.bf16.mxu0 0
      %2330 = vmatpush1.bf16.msra.mxu0 0
      %2331 = vmatprep.subr.bf16.mxu0 0
      %2332 = vmatpush1.bf16.msra.mxu0 0
      %2333 = vmatprep.subr.bf16.mxu0 0
      %2334 = vmatpush1.bf16.msra.mxu0 0
      %2335 = vmatprep.subr.bf16.mxu0 0
      %2336 = vmatpush1.bf16.msra.mxu0 0
      %2337 = vmatprep.subr.bf16.mxu0 0
      %2338 = vmatpush1.bf16.msra.mxu0 0
      %2339 = vmatprep.subr.bf16.mxu0 0
      %2340 = vmatpush1.bf16.msra.mxu0 0
      %2341 = vmatprep.subr.bf16.mxu0 0
      %2342 = vmatpush1.bf16.msra.mxu0 0
      %2343 = vmatprep.mubr.bf16.mxu0 0
      %2344 = vmatmul.mubr.bf16.gmra.mrb[0].mxu0 %v2243
      %v2345 = vpop.f32.mrb[0].mxu0
      %v2346 = vadd.f32 0.0, %v2345
      %v2347 = vpop.f32.mrb[0].mxu0
      %v2348 = vadd.f32 0.0, %v2347
      %v2349 = vpop.f32.mrb[0].mxu0
      %v2350 = vadd.f32 0.0, %v2349
      %v2351 = vpop.f32.mrb[0].mxu0
      %v2352 = vadd.f32 0.0, %v2351
      %2353 = vmatprep.mubr.bf16.mxu0 0
      %2354 = vmatmul.mubr.bf16.gmra.mrb[0].mxu0 %v2246
      %v2355 = vpop.f32.mrb[0].mxu0
      %v2356 = vadd.f32 0.0, %v2355
      %v2357 = vpop.f32.mrb[0].mxu0
      %v2358 = vadd.f32 0.0, %v2357
      %v2359 = vpop.f32.mrb[0].mxu0
      %v2360 = vpop.f32.mrb[0].mxu0
      %2361 = vdwg.mxu0
      %v2362 = vsub.f32 0.0, %v467
      %v2364 = vlaneseq
      %v2365 = vshrl.u32 %v2364, 7
      %v2366 = vsub.s32 0, %v2365
      %v2367 = vrot.slane %v2362, %v2366
      %v2368 = vlaneseq
      %v2369 = vshrl.u32 %v2368, 7
      %v2370 = vsub.s32 1, %v2369
      %v2371 = vrot.slane %v2362, %v2370
      %v2372 = vlaneseq
      %v2373 = vshrl.u32 %v2372, 7
      %v2374 = vsub.s32 2, %v2373
      %v2375 = vrot.slane %v2362, %v2374
      %v2376 = vlaneseq
      %v2377 = vshrl.u32 %v2376, 7
      %v2378 = vsub.s32 3, %v2377
      %v2379 = vrot.slane %v2362, %v2378
      %v2384 = vmul.f32 %v2367, %v460
      %v2385 = vmul.f32 %v2371, %v461
      %v2386 = vmul.f32 %v2375, %v462
      %v2387 = vmul.f32 %v2379, %v463
      %v2388 = vmul.f32 %v2384, 1.442695
      %v2389 = vpow.pop %v2388
      %v2390 = vmul.f32 %v2385, 1.442695
      %v2391 = vpow.pop %v2390
      %v2392 = vmul.f32 %v2386, 1.442695
      %v2393 = vpow.pop %v2392
      %v2394 = vmul.f32 %v2387, 1.442695
      %v2395 = vpow.pop %v2394
      %v2397 = vlaneseq
      %v2398 = vshrl.u32 %v2397, 7
      %v2399 = vsub.s32 0, %v2398
      %v2400 = vrot.slane %v467, %v2399
      %v2401 = vlaneseq
      %v2402 = vshrl.u32 %v2401, 7
      %v2403 = vsub.s32 1, %v2402
      %v2404 = vrot.slane %v467, %v2403
      %v2405 = vlaneseq
      %v2406 = vshrl.u32 %v2405, 7
      %v2407 = vsub.s32 2, %v2406
      %v2408 = vrot.slane %v467, %v2407
      %v2409 = vlaneseq
      %v2410 = vshrl.u32 %v2409, 7
      %v2411 = vsub.s32 3, %v2410
      %v2412 = vrot.slane %v467, %v2411
      %v2417 = vmul.f32 %v2400, %v2389
      %v2418 = vmul.f32 %v2404, %v2391
      %v2419 = vmul.f32 %v2408, %v2393
      %v2420 = vmul.f32 %v2412, %v2395
      %v2421 = vrot.slane %v2417, 4
      %v2422 = vmax.f32 %v2417, %v2421
      %v2423 = vrot.slane %v2422, 2
      %v2424 = vmax.f32 %v2422, %v2423
      %v2425 = vrot.slane %v2424, 1
      %v2426 = vmax.f32 %v2424, %v2425
      %v2427 = vrot.slane %v2418, 4
      %v2428 = vmax.f32 %v2418, %v2427
      %v2429 = vrot.slane %v2428, 2
      %v2430 = vmax.f32 %v2428, %v2429
      %v2431 = vrot.slane %v2430, 1
      %v2432 = vmax.f32 %v2430, %v2431
      %v2433 = vrot.slane %v2419, 4
      %v2434 = vmax.f32 %v2419, %v2433
      %v2435 = vrot.slane %v2434, 2
      %v2436 = vmax.f32 %v2434, %v2435
      %v2437 = vrot.slane %v2436, 1
      %v2438 = vmax.f32 %v2436, %v2437
      %v2439 = vrot.slane %v2420, 4
      %v2440 = vmax.f32 %v2420, %v2439
      %v2441 = vrot.slane %v2440, 2
      %v2442 = vmax.f32 %v2440, %v2441
      %v2443 = vrot.slane %v2442, 1
      %v2444 = vmax.f32 %v2442, %v2443
      %v2445 = vsub.f32 %v2417, %v2426
      %v2446 = vsub.f32 %v2418, %v2432
      %v2447 = vsub.f32 %v2419, %v2438
      %v2448 = vsub.f32 %v2420, %v2444
      %v2449 = vmul.f32 %v2445, 1.442695
      %v2450 = vpow.pop %v2449
      %v2451 = vmul.f32 %v2446, 1.442695
      %v2452 = vpow.pop %v2451
      %v2453 = vmul.f32 %v2447, 1.442695
      %v2454 = vpow.pop %v2453
      %v2455 = vmul.f32 %v2448, 1.442695
      %v2456 = vpow.pop %v2455
      %v2457 = vrot.slane %v2450, 4
      %v2458 = vadd.f32 %v2450, %v2457
      %v2459 = vrot.slane %v2458, 2
      %v2460 = vadd.f32 %v2458, %v2459
      %v2461 = vrot.slane %v2460, 1
      %v2462 = vadd.f32 %v2460, %v2461
      %v2463 = vrot.slane %v2452, 4
      %v2464 = vadd.f32 %v2452, %v2463
      %v2465 = vrot.slane %v2464, 2
      %v2466 = vadd.f32 %v2464, %v2465
      %v2467 = vrot.slane %v2466, 1
      %v2468 = vadd.f32 %v2466, %v2467
      %v2469 = vrot.slane %v2454, 4
      %v2470 = vadd.f32 %v2454, %v2469
      %v2471 = vrot.slane %v2470, 2
      %v2472 = vadd.f32 %v2470, %v2471
      %v2473 = vrot.slane %v2472, 1
      %v2474 = vadd.f32 %v2472, %v2473
      %v2475 = vrot.slane %v2456, 4
      %v2476 = vadd.f32 %v2456, %v2475
      %v2477 = vrot.slane %v2476, 2
      %v2478 = vadd.f32 %v2476, %v2477
      %v2479 = vrot.slane %v2478, 1
      %v2480 = vadd.f32 %v2478, %v2479
      %v2481 = vrcp.pop %v2462
      %v2482 = vrcp.pop %v2468
      %v2483 = vrcp.pop %v2474
      %v2484 = vrcp.pop %v2480
      %v2485 = vmul.f32 %v2450, %v2481
      %v2486 = vmul.f32 %v2452, %v2482
      %v2487 = vmul.f32 %v2454, %v2483
      %v2488 = vmul.f32 %v2456, %v2484
      %v2489 = vlaneseq
      %v2490 = vshrl.u32 %v2489, 7
      %v2491 = vlaneseq
      %v2492 = vshrl.u32 %v2491, 7
      %v2493 = vsub.s32 0, %v2492
      %v2494 = vrot.slane %v464, %v2493
      %v2495 = vlaneseq
      %v2496 = vshrl.u32 %v2495, 7
      %v2497 = vsub.s32 4, %v2496
      %v2498 = vrot.slane %v464, %v2497
      %v2499 = vlaneseq
      %v2500 = vshrl.u32 %v2499, 7
      %v2501 = vsub.s32 0, %v2500
      %v2502 = vrot.slane %v465, %v2501
      %v2503 = vlaneseq
      %v2504 = vshrl.u32 %v2503, 7
      %v2505 = vsub.s32 4, %v2504
      %v2506 = vrot.slane %v465, %v2505
      %v2507 = vlaneseq
      %v2508 = vshrl.u32 %v2507, 7
      %v2509 = vsub.s32 0, %v2508
      %v2510 = vrot.slane %v2494, %v2509
      %v2511 = vlaneseq
      %v2512 = vshrl.u32 %v2511, 7
      %v2513 = vsub.s32 0, %v2512
      %v2514 = vrot.slane %v2498, %v2513
      %v2515 = vlaneseq
      %v2516 = vshrl.u32 %v2515, 7
      %v2517 = vsub.s32 0, %v2516
      %v2518 = vrot.slane %v2502, %v2517
      %v2519 = vlaneseq
      %v2520 = vshrl.u32 %v2519, 7
      %v2521 = vsub.s32 0, %v2520
      %v2522 = vrot.slane %v2506, %v2521
      %vm2523 = vcmp.eq.s32.totalorder %v2490, %v2510
      %vm2524 = vcmp.eq.s32.totalorder %v2490, %v2514
      %vm2525 = vcmp.eq.s32.totalorder %v2490, %v2518
      %vm2526 = vcmp.eq.s32.totalorder %v2490, %v2522
      %v2527 = vlaneseq
      %v2528 = vshrl.u32 %v2527, 7
      %v2529 = vsub.s32 0, %v2528
      %v2530 = vrot.slane %v2485, %v2529
      %v2531 = vlaneseq
      %v2532 = vshrl.u32 %v2531, 7
      %v2533 = vsub.s32 0, %v2532
      %v2534 = vrot.slane %v2486, %v2533
      %v2535 = vlaneseq
      %v2536 = vshrl.u32 %v2535, 7
      %v2537 = vsub.s32 0, %v2536
      %v2538 = vrot.slane %v2487, %v2537
      %v2539 = vlaneseq
      %v2540 = vshrl.u32 %v2539, 7
      %v2541 = vsub.s32 0, %v2540
      %v2542 = vrot.slane %v2488, %v2541
      %v2543 = vsel %vm2523, %v2530, 0.0
      %v2544 = vsel %vm2524, %v2534, 0.0
      %v2545 = vsel %vm2525, %v2538, 0.0
      %v2546 = vsel %vm2526, %v2542, 0.0
      %v2547 = vadd.f32 %v2543, 0.0
      %v2548 = vadd.f32 %v2544, 0.0
      %v2549 = vadd.f32 %v2545, 0.0
      %v2550 = vadd.f32 %v2546, 0.0
      %v2551 = vlaneseq
      %v2552 = vshrl.u32 %v2551, 7
      %v2553 = vsub.s32 1, %v2552
      %v2554 = vrot.slane %v464, %v2553
      %v2555 = vlaneseq
      %v2556 = vshrl.u32 %v2555, 7
      %v2557 = vsub.s32 5, %v2556
      %v2558 = vrot.slane %v464, %v2557
      %v2559 = vlaneseq
      %v2560 = vshrl.u32 %v2559, 7
      %v2561 = vsub.s32 1, %v2560
      %v2562 = vrot.slane %v465, %v2561
      %v2563 = vlaneseq
      %v2564 = vshrl.u32 %v2563, 7
      %v2565 = vsub.s32 5, %v2564
      %v2566 = vrot.slane %v465, %v2565
      %v2567 = vlaneseq
      %v2568 = vshrl.u32 %v2567, 7
      %v2569 = vsub.s32 1, %v2568
      %v2570 = vrot.slane %v2554, %v2569
      %v2571 = vlaneseq
      %v2572 = vshrl.u32 %v2571, 7
      %v2573 = vsub.s32 1, %v2572
      %v2574 = vrot.slane %v2558, %v2573
      %v2575 = vlaneseq
      %v2576 = vshrl.u32 %v2575, 7
      %v2577 = vsub.s32 1, %v2576
      %v2578 = vrot.slane %v2562, %v2577
      %v2579 = vlaneseq
      %v2580 = vshrl.u32 %v2579, 7
      %v2581 = vsub.s32 1, %v2580
      %v2582 = vrot.slane %v2566, %v2581
      %vm2583 = vcmp.eq.s32.totalorder %v2490, %v2570
      %vm2584 = vcmp.eq.s32.totalorder %v2490, %v2574
      %vm2585 = vcmp.eq.s32.totalorder %v2490, %v2578
      %vm2586 = vcmp.eq.s32.totalorder %v2490, %v2582
      %v2587 = vlaneseq
      %v2588 = vshrl.u32 %v2587, 7
      %v2589 = vsub.s32 1, %v2588
      %v2590 = vrot.slane %v2485, %v2589
      %v2591 = vlaneseq
      %v2592 = vshrl.u32 %v2591, 7
      %v2593 = vsub.s32 1, %v2592
      %v2594 = vrot.slane %v2486, %v2593
      %v2595 = vlaneseq
      %v2596 = vshrl.u32 %v2595, 7
      %v2597 = vsub.s32 1, %v2596
      %v2598 = vrot.slane %v2487, %v2597
      %v2599 = vlaneseq
      %v2600 = vshrl.u32 %v2599, 7
      %v2601 = vsub.s32 1, %v2600
      %v2602 = vrot.slane %v2488, %v2601
      %v2603 = vsel %vm2583, %v2590, 0.0
      %v2604 = vsel %vm2584, %v2594, 0.0
      %v2605 = vsel %vm2585, %v2598, 0.0
      %v2606 = vsel %vm2586, %v2602, 0.0
      %v2607 = vadd.f32 %v2547, %v2603
      %v2608 = vadd.f32 %v2548, %v2604
      %v2609 = vadd.f32 %v2549, %v2605
      %v2610 = vadd.f32 %v2550, %v2606
      %v2611 = vlaneseq
      %v2612 = vshrl.u32 %v2611, 7
      %v2613 = vsub.s32 2, %v2612
      %v2614 = vrot.slane %v464, %v2613
      %v2615 = vlaneseq
      %v2616 = vshrl.u32 %v2615, 7
      %v2617 = vsub.s32 6, %v2616
      %v2618 = vrot.slane %v464, %v2617
      %v2619 = vlaneseq
      %v2620 = vshrl.u32 %v2619, 7
      %v2621 = vsub.s32 2, %v2620
      %v2622 = vrot.slane %v465, %v2621
      %v2623 = vlaneseq
      %v2624 = vshrl.u32 %v2623, 7
      %v2625 = vsub.s32 6, %v2624
      %v2626 = vrot.slane %v465, %v2625
      %v2627 = vlaneseq
      %v2628 = vshrl.u32 %v2627, 7
      %v2629 = vsub.s32 2, %v2628
      %v2630 = vrot.slane %v2614, %v2629
      %v2631 = vlaneseq
      %v2632 = vshrl.u32 %v2631, 7
      %v2633 = vsub.s32 2, %v2632
      %v2634 = vrot.slane %v2618, %v2633
      %v2635 = vlaneseq
      %v2636 = vshrl.u32 %v2635, 7
      %v2637 = vsub.s32 2, %v2636
      %v2638 = vrot.slane %v2622, %v2637
      %v2639 = vlaneseq
      %v2640 = vshrl.u32 %v2639, 7
      %v2641 = vsub.s32 2, %v2640
      %v2642 = vrot.slane %v2626, %v2641
      %vm2643 = vcmp.eq.s32.totalorder %v2490, %v2630
      %vm2644 = vcmp.eq.s32.totalorder %v2490, %v2634
      %vm2645 = vcmp.eq.s32.totalorder %v2490, %v2638
      %vm2646 = vcmp.eq.s32.totalorder %v2490, %v2642
      %v2647 = vlaneseq
      %v2648 = vshrl.u32 %v2647, 7
      %v2649 = vsub.s32 2, %v2648
      %v2650 = vrot.slane %v2485, %v2649
      %v2651 = vlaneseq
      %v2652 = vshrl.u32 %v2651, 7
      %v2653 = vsub.s32 2, %v2652
      %v2654 = vrot.slane %v2486, %v2653
      %v2655 = vlaneseq
      %v2656 = vshrl.u32 %v2655, 7
      %v2657 = vsub.s32 2, %v2656
      %v2658 = vrot.slane %v2487, %v2657
      %v2659 = vlaneseq
      %v2660 = vshrl.u32 %v2659, 7
      %v2661 = vsub.s32 2, %v2660
      %v2662 = vrot.slane %v2488, %v2661
      %v2663 = vsel %vm2643, %v2650, 0.0
      %v2664 = vsel %vm2644, %v2654, 0.0
      %v2665 = vsel %vm2645, %v2658, 0.0
      %v2666 = vsel %vm2646, %v2662, 0.0
      %v2667 = vadd.f32 %v2607, %v2663
      %v2668 = vadd.f32 %v2608, %v2664
      %v2669 = vadd.f32 %v2609, %v2665
      %v2670 = vadd.f32 %v2610, %v2666
      %v2671 = vmul.f32 %v2667, %v2295
      %v2672 = vmul.f32 %v2668, %v2297
      %v2673 = vmul.f32 %v2669, %v2346
      %v2674 = vmul.f32 %v2670, %v2348
      %v2675 = vrot.slane %v2671, 4
      %v2676 = vadd.f32 %v2671, %v2675
      %v2677 = vrot.slane %v2676, 2
      %v2678 = vadd.f32 %v2676, %v2677
      %v2679 = vrot.slane %v2678, 1
      %v2680 = vadd.f32 %v2678, %v2679
      %v2681 = vrot.slane %v2672, 4
      %v2682 = vadd.f32 %v2672, %v2681
      %v2683 = vrot.slane %v2682, 2
      %v2684 = vadd.f32 %v2682, %v2683
      %v2685 = vrot.slane %v2684, 1
      %v2686 = vadd.f32 %v2684, %v2685
      %v2687 = vrot.slane %v2673, 4
      %v2688 = vadd.f32 %v2673, %v2687
      %v2689 = vrot.slane %v2688, 2
      %v2690 = vadd.f32 %v2688, %v2689
      %v2691 = vrot.slane %v2690, 1
      %v2692 = vadd.f32 %v2690, %v2691
      %v2693 = vrot.slane %v2674, 4
      %v2694 = vadd.f32 %v2674, %v2693
      %v2695 = vrot.slane %v2694, 2
      %v2696 = vadd.f32 %v2694, %v2695
      %v2697 = vrot.slane %v2696, 1
      %v2698 = vadd.f32 %v2696, %v2697
      %v2699 = vmul.f32 %v2667, %v2299
      %v2700 = vmul.f32 %v2668, %v2301
      %v2701 = vmul.f32 %v2669, %v2350
      %v2702 = vmul.f32 %v2670, %v2352
      %v2703 = vrot.slane %v2699, 4
      %v2704 = vadd.f32 %v2699, %v2703
      %v2705 = vrot.slane %v2704, 2
      %v2706 = vadd.f32 %v2704, %v2705
      %v2707 = vrot.slane %v2706, 1
      %v2708 = vadd.f32 %v2706, %v2707
      %v2709 = vrot.slane %v2700, 4
      %v2710 = vadd.f32 %v2700, %v2709
      %v2711 = vrot.slane %v2710, 2
      %v2712 = vadd.f32 %v2710, %v2711
      %v2713 = vrot.slane %v2712, 1
      %v2714 = vadd.f32 %v2712, %v2713
      %v2715 = vrot.slane %v2701, 4
      %v2716 = vadd.f32 %v2701, %v2715
      %v2717 = vrot.slane %v2716, 2
      %v2718 = vadd.f32 %v2716, %v2717
      %v2719 = vrot.slane %v2718, 1
      %v2720 = vadd.f32 %v2718, %v2719
      %v2721 = vrot.slane %v2702, 4
      %v2722 = vadd.f32 %v2702, %v2721
      %v2723 = vrot.slane %v2722, 2
      %v2724 = vadd.f32 %v2722, %v2723
      %v2725 = vrot.slane %v2724, 1
      %v2726 = vadd.f32 %v2724, %v2725
      %v2727 = vmul.f32 %v2667, %v2305
      %v2728 = vmul.f32 %v2668, %v2307
      %v2729 = vmul.f32 %v2669, %v2356
      %v2730 = vmul.f32 %v2670, %v2358
      %v2731 = vrot.slane %v2727, 4
      %v2732 = vadd.f32 %v2727, %v2731
      %v2733 = vrot.slane %v2732, 2
      %v2734 = vadd.f32 %v2732, %v2733
      %v2735 = vrot.slane %v2734, 1
      %v2736 = vadd.f32 %v2734, %v2735
      %v2737 = vrot.slane %v2728, 4
      %v2738 = vadd.f32 %v2728, %v2737
      %v2739 = vrot.slane %v2738, 2
      %v2740 = vadd.f32 %v2738, %v2739
      %v2741 = vrot.slane %v2740, 1
      %v2742 = vadd.f32 %v2740, %v2741
      %v2743 = vrot.slane %v2729, 4
      %v2744 = vadd.f32 %v2729, %v2743
      %v2745 = vrot.slane %v2744, 2
      %v2746 = vadd.f32 %v2744, %v2745
      %v2747 = vrot.slane %v2746, 1
      %v2748 = vadd.f32 %v2746, %v2747
      %v2749 = vrot.slane %v2730, 4
      %v2750 = vadd.f32 %v2730, %v2749
      %v2751 = vrot.slane %v2750, 2
      %v2752 = vadd.f32 %v2750, %v2751
      %v2753 = vrot.slane %v2752, 1
      %v2754 = vadd.f32 %v2752, %v2753
      %v2755 = vsel %vm510, %v2680, %v2708
      %v2756 = vsel %vm510, %v2686, %v2714
      %v2757 = vsel %vm510, %v2692, %v2720
      %v2758 = vsel %vm510, %v2698, %v2726
      %vm2759 = vcmask 1041408
      %v2760 = vsel %vm2759, %v2755, %v2736
      %v2761 = vsel %vm2759, %v2756, %v2742
      %v2762 = vsel %vm2759, %v2757, %v2748
      %v2763 = vsel %vm2759, %v2758, %v2754
      %vm2764 = vcmp.eq.f32.partialorder %v458, -1.0
      %vm2765 = vcmp.eq.f32.partialorder %v459, -1.0
      %v2766 = vsel %vm2764, 1, 0
      %v2767 = vsel %vm2765, 1, 0
      %v2768 = vrot.slane %v2766, 5
      %v2769 = vrot.slane %v2768, 4
      %v2770 = vrot.slane %v2767, 5
      %v2771 = vrot.slane %v2770, 4
      %vm2772 = vcmp.ne.s32.totalorder %v2769, 0
      %vm2773 = vcmp.ne.s32.totalorder %v2771, 0
      %vm2774 = vmand %vm2764, %vm2772
      %vm2775 = vmand %vm2765, %vm2773
      %v2776 = vrot.slane %v2766, 6
      %v2777 = vrot.slane %v2776, 4
      %v2778 = vrot.slane %v2767, 6
      %v2779 = vrot.slane %v2778, 4
      %vm2780 = vcmp.ne.s32.totalorder %v2777, 0
      %vm2781 = vcmp.ne.s32.totalorder %v2779, 0
      %vm2782 = vmand %vm2774, %vm2780
      %vm2783 = vmand %vm2775, %vm2781
      %vm2784 = vmxor %vm2782, 1
      %vm2785 = vmxor %vm2783, 1
      %v2794 = vrot.slane %v636, 5
      %v2795 = vrot.slane %v740, 5
      %v2796 = vrot.slane %v844, 5
      %v2797 = vrot.slane %v948, 5
      %v2798 = vrot.slane %v2218, 5
      %v2799 = vsel %vm500, %v2794, %v2798
      %v2800 = vrot.slane %v2219, 5
      %v2801 = vsel %vm500, %v2795, %v2800
      %v2802 = vrot.slane %v2220, 5
      %v2803 = vsel %vm500, %v2796, %v2802
      %v2804 = vrot.slane %v2221, 5
      %v2805 = vsel %vm500, %v2797, %v2804
      %v2806 = vrot.slane %v2203, 5
      %v2807 = vsel %vm500, %v2798, %v2806
      %v2808 = vrot.slane %v2205, 5
      %v2809 = vsel %vm500, %v2800, %v2808
      %v2810 = vrot.slane %v2207, 5
      %v2811 = vsel %vm500, %v2802, %v2810
      %v2812 = vrot.slane %v2209, 5
      %v2813 = vsel %vm500, %v2804, %v2812
      %v2830 = vsel %vm500, %v2760, %v2794
      %v2831 = vsel %vm500, %v2761, %v2795
      %v2832 = vsel %vm500, %v2762, %v2796
      %v2833 = vsel %vm500, %v2763, %v2797
      %v2834 = vpack.c.bf16 %v2799, %v2830
      %v2835 = vpack.c.bf16 %v2801, %v2831
      %v2836 = vpack.c.bf16 %v2803, %v2832
      %v2837 = vpack.c.bf16 %v2805, %v2833
      %v2838 = vpack.c.bf16 %v2806, %v2807
      %v2839 = vpack.c.bf16 %v2808, %v2809
      %v2840 = vpack.c.bf16 %v2810, %v2811
      %v2841 = vpack.c.bf16 %v2812, %v2813
      %2842 = vst [vmem:[%s455] sm:$0x77] 0.0
      %2843 = vst [vmem:[%s455 + $0x8] sm:$0x77] 0.0
      %s2844 = sld [smem:[#allocation3 + %s33]]
      %s2845 = sld [smem:[#allocation4 + %s33]]
      %s2846 = sadd.s32 %s2845, 1
      // While loop
      $region61: #{clusterised_linear_network_forward.1} parent=59 // loop_pre_header
        _
      $region62: #{clusterised_linear_network_forward.1} parent=59 // loop_header
        %s2848 = sphi %s2844, %s2850
        %p2849 = scmp.ge.s32.totalorder %s2848, %s2846
      $region63: #{clusterised_linear_network_forward.1} parent=59 // loop_header_branch
        %2852 = sbr.rel (%p2849) target = $region67
      $region64: #{clusterised_linear_network_forward.1} parent=59 // loop_body
        %s2853 = smul.u32 %s2848, 32
        %s2854 = smul.addr %s2853, 4
        %s2855 = scalar_lea.vmem %s9, %s2854
        %v2856 = vld [vmem:[%s2855] sm:$0xf]
        %v2857 = vld [vmem:[%s2855 + $0x4] sm:$0xf]
        %v2858 = vld [vmem:[%s2855 + $0x8] sm:$0xf]
        %v2859 = vld [vmem:[%s2855 + $0xc] sm:$0xf]
        %v2860 = vld [vmem:[%s2855 + $0x10] sm:$0xf]
        %v2861 = vld [vmem:[%s2855 + $0x14] sm:$0xf]
        %v2862 = vld [vmem:[%s2855 + $0x18] sm:$0xf]
        %v2863 = vld [vmem:[%s2855 + $0x1c] sm:$0xf]
        %v2864 = vld [vmem:[%s2855 + $0x20] sm:$0xf]
        %v2865 = vld [vmem:[%s2855 + $0x24] sm:$0xf]
        %v2866 = vld [vmem:[%s2855 + $0x28] sm:$0xf]
        %v2867 = vld [vmem:[%s2855 + $0x2c] sm:$0xf]
        %v2868 = vld [vmem:[%s2855 + $0x30] sm:$0xf]
        %v2869 = vld [vmem:[%s2855 + $0x34] sm:$0xf]
        %v2870 = vld [vmem:[%s2855 + $0x38] sm:$0xf]
        %v2871 = vld [vmem:[%s2855 + $0x3c] sm:$0xf]
        %v2872 = vld [vmem:[%s2855 + $0x40] sm:$0xf]
        %v2873 = vld [vmem:[%s2855 + $0x44] sm:$0xf]
        %v2874 = vld [vmem:[%s2855 + $0x48] sm:$0xf]
        %v2875 = vld [vmem:[%s2855 + $0x4c] sm:$0xf]
        %v2876 = vld [vmem:[%s2855 + $0x50] sm:$0xf]
        %v2877 = vld [vmem:[%s2855 + $0x54] sm:$0xf]
        %v2878 = vld [vmem:[%s2855 + $0x58] sm:$0xf]
        %v2879 = vld [vmem:[%s2855 + $0x5c] sm:$0xf]
        %v2880 = vld [vmem:[%s2855 + $0x60] sm:$0xf]
        %v2881 = vld [vmem:[%s2855 + $0x64] sm:$0xf]
        %v2882 = vld [vmem:[%s2855 + $0x68] sm:$0xf]
        %v2883 = vld [vmem:[%s2855 + $0x6c] sm:$0xf]
        %v2884 = vld [vmem:[%s2855 + $0x70] sm:$0xf]
        %v2885 = vld [vmem:[%s2855 + $0x74] sm:$0xf]
        %v2886 = vld [vmem:[%s2855 + $0x78] sm:$0xf]
        %v2887 = vld [vmem:[%s2855 + $0x7c] sm:$0xf]
        %v2920 = vunpack.c.l.b16 %v2856
        %v2921 = vunpack.c.l.b16 %v2857
        %v2922 = vunpack.c.l.b16 %v2858
        %v2923 = vunpack.c.l.b16 %v2859
        %v2924 = vunpack.c.l.b16 %v2860
        %v2925 = vunpack.c.l.b16 %v2861
        %v2926 = vunpack.c.l.b16 %v2862
        %v2927 = vunpack.c.l.b16 %v2863
        %v2928 = vunpack.c.l.b16 %v2864
        %v2929 = vunpack.c.l.b16 %v2865
        %v2930 = vunpack.c.l.b16 %v2866
        %v2931 = vunpack.c.l.b16 %v2867
        %v2932 = vunpack.c.l.b16 %v2868
        %v2933 = vunpack.c.l.b16 %v2869
        %v2934 = vunpack.c.l.b16 %v2870
        %v2935 = vunpack.c.l.b16 %v2871
        %v2936 = vunpack.c.l.b16 %v2872
        %v2937 = vunpack.c.l.b16 %v2873
        %v2938 = vunpack.c.l.b16 %v2874
        %v2939 = vunpack.c.l.b16 %v2875
        %v2940 = vunpack.c.l.b16 %v2876
        %v2941 = vunpack.c.l.b16 %v2877
        %v2942 = vunpack.c.l.b16 %v2878
        %v2943 = vunpack.c.l.b16 %v2879
        %v2944 = vunpack.c.l.b16 %v2880
        %v2945 = vunpack.c.l.b16 %v2881
        %v2946 = vunpack.c.l.b16 %v2882
        %v2947 = vunpack.c.l.b16 %v2883
        %v2948 = vunpack.c.l.b16 %v2884
        %v2949 = vunpack.c.l.b16 %v2885
        %v2950 = vunpack.c.l.b16 %v2886
        %v2951 = vunpack.c.l.b16 %v2887
        %v2952 = vpack.c.b16 %v2921, %v2920
        %v2953 = vpack.c.b16 %v2923, %v2922
        %v2954 = vpack.c.b16 %v2925, %v2924
        %v2955 = vpack.c.b16 %v2927, %v2926
        %v2956 = vpack.c.b16 %v2929, %v2928
        %v2957 = vpack.c.b16 %v2931, %v2930
        %v2958 = vpack.c.b16 %v2933, %v2932
        %v2959 = vpack.c.b16 %v2935, %v2934
        %v2960 = vpack.c.b16 %v2937, %v2936
        %v2961 = vpack.c.b16 %v2939, %v2938
        %v2962 = vpack.c.b16 %v2941, %v2940
        %v2963 = vpack.c.b16 %v2943, %v2942
        %v2964 = vpack.c.b16 %v2945, %v2944
        %v2965 = vpack.c.b16 %v2947, %v2946
        %v2966 = vpack.c.b16 %v2949, %v2948
        %v2967 = vpack.c.b16 %v2951, %v2950
        %vm2968 = vcmask 220160
        %v2970 = vsel %vm2968, %v2952, 0
        %v2973 = vsel %vm2968, %v2953, 0
        %v2976 = vsel %vm2968, %v2954, 0
        %v2979 = vsel %vm2968, %v2955, 0
        %v2982 = vsel %vm2968, %v2956, 0
        %v2985 = vsel %vm2968, %v2957, 0
        %v2988 = vsel %vm2968, %v2958, 0
        %v2991 = vsel %vm2968, %v2959, 0
        %v2994 = vsel %vm2968, %v2960, 0
        %v2997 = vsel %vm2968, %v2961, 0
        %v3000 = vsel %vm2968, %v2962, 0
        %v3003 = vsel %vm2968, %v2963, 0
        %v3006 = vsel %vm2968, %v2964, 0
        %v3009 = vsel %vm2968, %v2965, 0
        %v3012 = vsel %vm2968, %v2966, 0
        %v3015 = vsel %vm2968, %v2967, 0
        %vm3017 = vcmask 1044480
        %v3018 = vsel %vm3017, 4294967295, 65535
        %v3019 = vsel %vm505, %v3018, 0
        %v3021 = vand.u32 %v2838, %v3019
        %v3024 = vand.u32 %v2839, %v3019
        %v3027 = vand.u32 %v2840, %v3019
        %v3030 = vand.u32 %v2841, %v3019
        %3032 = vmatprep.subr.bf16.mxu0 %v2835
        %3033 = vmatpush1.bf16.msra.mxu0 %v2834
        %3034 = vmatprep.subr.bf16.mxu0 %v3024
        %3035 = vmatpush1.bf16.msra.mxu0 %v3021
        %3036 = vmatprep.subr.bf16.mxu0 0
        %3037 = vmatpush1.bf16.msra.mxu0 0
        %3038 = vmatprep.subr.bf16.mxu0 0
        %3039 = vmatpush1.bf16.msra.mxu0 0
        %3040 = vmatprep.subr.bf16.mxu0 0
        %3041 = vmatpush1.bf16.msra.mxu0 0
        %3042 = vmatprep.subr.bf16.mxu0 0
        %3043 = vmatpush1.bf16.msra.mxu0 0
        %3044 = vmatprep.subr.bf16.mxu0 0
        %3045 = vmatpush1.bf16.msra.mxu0 0
        %3046 = vmatprep.subr.bf16.mxu0 0
        %3047 = vmatpush1.bf16.msra.mxu0 0
        %3048 = vmatprep.subr.bf16.mxu0 0
        %3049 = vmatpush1.bf16.msra.mxu0 0
        %3050 = vmatprep.subr.bf16.mxu0 0
        %3051 = vmatpush1.bf16.msra.mxu0 0
        %3052 = vmatprep.subr.bf16.mxu0 0
        %3053 = vmatpush1.bf16.msra.mxu0 0
        %3054 = vmatprep.subr.bf16.mxu0 0
        %3055 = vmatpush1.bf16.msra.mxu0 0
        %3056 = vmatprep.subr.bf16.mxu0 0
        %3057 = vmatpush1.bf16.msra.mxu0 0
        %3058 = vmatprep.subr.bf16.mxu0 0
        %3059 = vmatpush1.bf16.msra.mxu0 0
        %3060 = vmatprep.subr.bf16.mxu0 0
        %3061 = vmatpush1.bf16.msra.mxu0 0
        %3062 = vmatprep.subr.bf16.mxu0 0
        %3063 = vmatpush1.bf16.msra.mxu0 0
        %3064 = vmatprep.mubr.bf16.mxu0 0
        %3065 = vmatmul.mubr.bf16.gmra.mrb[0].mxu0 %v2970
        %v3066 = vpop.f32.mrb[0].mxu0
        %v3067 = vadd.f32 0.0, %v3066
        %v3068 = vpop.f32.mrb[0].mxu0
        %v3069 = vadd.f32 0.0, %v3068
        %v3070 = vpop.f32.mrb[0].mxu0
        %v3071 = vadd.f32 0.0, %v3070
        %v3072 = vpop.f32.mrb[0].mxu0
        %v3073 = vadd.f32 0.0, %v3072
        %3074 = vmatprep.mubr.bf16.mxu0 0
        %3075 = vmatmul.mubr.bf16.gmra.mrb[0].mxu0 %v2973
        %v3076 = vpop.f32.mrb[0].mxu0
        %v3077 = vadd.f32 0.0, %v3076
        %v3078 = vpop.f32.mrb[0].mxu0
        %v3079 = vadd.f32 0.0, %v3078
        %v3080 = vpop.f32.mrb[0].mxu0
        %v3081 = vadd.f32 0.0, %v3080
        %v3082 = vpop.f32.mrb[0].mxu0
        %v3083 = vadd.f32 0.0, %v3082
        %3084 = vmatprep.mubr.bf16.mxu0 0
        %3085 = vmatmul.mubr.bf16.gmra.mrb[0].mxu0 %v2976
        %v3086 = vpop.f32.mrb[0].mxu0
        %v3087 = vadd.f32 0.0, %v3086
        %v3088 = vpop.f32.mrb[0].mxu0
        %v3089 = vadd.f32 0.0, %v3088
        %v3090 = vpop.f32.mrb[0].mxu0
        %v3091 = vadd.f32 0.0, %v3090
        %v3092 = vpop.f32.mrb[0].mxu0
        %v3093 = vadd.f32 0.0, %v3092
        %3094 = vmatprep.mubr.bf16.mxu0 0
        %3095 = vmatmul.mubr.bf16.gmra.mrb[0].mxu0 %v2979
        %v3096 = vpop.f32.mrb[0].mxu0
        %v3097 = vadd.f32 0.0, %v3096
        %v3098 = vpop.f32.mrb[0].mxu0
        %v3099 = vadd.f32 0.0, %v3098
        %v3100 = vpop.f32.mrb[0].mxu0
        %v3101 = vadd.f32 0.0, %v3100
        %v3102 = vpop.f32.mrb[0].mxu0
        %v3103 = vadd.f32 0.0, %v3102
        %3104 = vmatprep.mubr.bf16.mxu0 0
        %3105 = vmatmul.mubr.bf16.gmra.mrb[0].mxu0 %v2982
        %v3106 = vpop.f32.mrb[0].mxu0
        %v3107 = vadd.f32 0.0, %v3106
        %v3108 = vpop.f32.mrb[0].mxu0
        %v3109 = vadd.f32 0.0, %v3108
        %v3110 = vpop.f32.mrb[0].mxu0
        %v3111 = vadd.f32 0.0, %v3110
        %v3112 = vpop.f32.mrb[0].mxu0
        %v3113 = vadd.f32 0.0, %v3112
        %3114 = vmatprep.mubr.bf16.mxu0 0
        %3115 = vmatmul.mubr.bf16.gmra.mrb[0].mxu0 %v2985
        %v3116 = vpop.f32.mrb[0].mxu0
        %v3117 = vadd.f32 0.0, %v3116
        %v3118 = vpop.f32.mrb[0].mxu0
        %v3119 = vadd.f32 0.0, %v3118
        %v3120 = vpop.f32.mrb[0].mxu0
        %v3121 = vadd.f32 0.0, %v3120
        %v3122 = vpop.f32.mrb[0].mxu0
        %v3123 = vadd.f32 0.0, %v3122
        %3124 = vmatprep.mubr.bf16.mxu0 0
        %3125 = vmatmul.mubr.bf16.gmra.mrb[0].mxu0 %v2988
        %v3126 = vpop.f32.mrb[0].mxu0
        %v3127 = vadd.f32 0.0, %v3126
        %v3128 = vpop.f32.mrb[0].mxu0
        %v3129 = vadd.f32 0.0, %v3128
        %v3130 = vpop.f32.mrb[0].mxu0
        %v3131 = vadd.f32 0.0, %v3130
        %v3132 = vpop.f32.mrb[0].mxu0
        %v3133 = vadd.f32 0.0, %v3132
        %3134 = vmatprep.mubr.bf16.mxu0 0
        %3135 = vmatmul.mubr.bf16.gmra.mrb[0].mxu0 %v2991
        %v3136 = vpop.f32.mrb[0].mxu0
        %v3137 = vadd.f32 0.0, %v3136
        %v3138 = vpop.f32.mrb[0].mxu0
        %v3139 = vadd.f32 0.0, %v3138
        %v3140 = vpop.f32.mrb[0].mxu0
        %v3141 = vadd.f32 0.0, %v3140
        %v3142 = vpop.f32.mrb[0].mxu0
        %v3143 = vadd.f32 0.0, %v3142
        %3144 = vmatprep.mubr.bf16.mxu0 0
        %3145 = vmatmul.mubr.bf16.gmra.mrb[0].mxu0 %v2994
        %v3146 = vpop.f32.mrb[0].mxu0
        %v3147 = vadd.f32 0.0, %v3146
        %v3148 = vpop.f32.mrb[0].mxu0
        %v3149 = vadd.f32 0.0, %v3148
        %v3150 = vpop.f32.mrb[0].mxu0
        %v3151 = vadd.f32 0.0, %v3150
        %v3152 = vpop.f32.mrb[0].mxu0
        %v3153 = vadd.f32 0.0, %v3152
        %3154 = vmatprep.mubr.bf16.mxu0 0
        %3155 = vmatmul.mubr.bf16.gmra.mrb[0].mxu0 %v2997
        %v3156 = vpop.f32.mrb[0].mxu0
        %v3157 = vadd.f32 0.0, %v3156
        %v3158 = vpop.f32.mrb[0].mxu0
        %v3159 = vadd.f32 0.0, %v3158
        %v3160 = vpop.f32.mrb[0].mxu0
        %v3161 = vadd.f32 0.0, %v3160
        %v3162 = vpop.f32.mrb[0].mxu0
        %v3163 = vadd.f32 0.0, %v3162
        %3164 = vmatprep.mubr.bf16.mxu0 0
        %3165 = vmatmul.mubr.bf16.gmra.mrb[0].mxu0 %v3000
        %v3166 = vpop.f32.mrb[0].mxu0
        %v3167 = vadd.f32 0.0, %v3166
        %v3168 = vpop.f32.mrb[0].mxu0
        %v3169 = vadd.f32 0.0, %v3168
        %v3170 = vpop.f32.mrb[0].mxu0
        %v3171 = vadd.f32 0.0, %v3170
        %v3172 = vpop.f32.mrb[0].mxu0
        %v3173 = vadd.f32 0.0, %v3172
        %3174 = vmatprep.mubr.bf16.mxu0 0
        %3175 = vmatmul.mubr.bf16.gmra.mrb[0].mxu0 %v3003
        %v3176 = vpop.f32.mrb[0].mxu0
        %v3177 = vadd.f32 0.0, %v3176
        %v3178 = vpop.f32.mrb[0].mxu0
        %v3179 = vadd.f32 0.0, %v3178
        %v3180 = vpop.f32.mrb[0].mxu0
        %v3181 = vadd.f32 0.0, %v3180
        %v3182 = vpop.f32.mrb[0].mxu0
        %v3183 = vadd.f32 0.0, %v3182
        %3184 = vmatprep.mubr.bf16.mxu0 0
        %3185 = vmatmul.mubr.bf16.gmra.mrb[0].mxu0 %v3006
        %v3186 = vpop.f32.mrb[0].mxu0
        %v3187 = vadd.f32 0.0, %v3186
        %v3188 = vpop.f32.mrb[0].mxu0
        %v3189 = vadd.f32 0.0, %v3188
        %v3190 = vpop.f32.mrb[0].mxu0
        %v3191 = vadd.f32 0.0, %v3190
        %v3192 = vpop.f32.mrb[0].mxu0
        %v3193 = vadd.f32 0.0, %v3192
        %3194 = vmatprep.mubr.bf16.mxu0 0
        %3195 = vmatmul.mubr.bf16.gmra.mrb[0].mxu0 %v3009
        %v3196 = vpop.f32.mrb[0].mxu0
        %v3197 = vadd.f32 0.0, %v3196
        %v3198 = vpop.f32.mrb[0].mxu0
        %v3199 = vadd.f32 0.0, %v3198
        %v3200 = vpop.f32.mrb[0].mxu0
        %v3201 = vadd.f32 0.0, %v3200
        %v3202 = vpop.f32.mrb[0].mxu0
        %v3203 = vadd.f32 0.0, %v3202
        %3204 = vmatprep.mubr.bf16.mxu0 0
        %3205 = vmatmul.mubr.bf16.gmra.mrb[0].mxu0 %v3012
        %v3206 = vpop.f32.mrb[0].mxu0
        %v3207 = vadd.f32 0.0, %v3206
        %v3208 = vpop.f32.mrb[0].mxu0
        %v3209 = vadd.f32 0.0, %v3208
        %v3210 = vpop.f32.mrb[0].mxu0
        %v3211 = vadd.f32 0.0, %v3210
        %v3212 = vpop.f32.mrb[0].mxu0
        %v3213 = vadd.f32 0.0, %v3212
        %3214 = vmatprep.mubr.bf16.mxu0 0
        %3215 = vmatmul.mubr.bf16.gmra.mrb[0].mxu0 %v3015
        %v3216 = vpop.f32.mrb[0].mxu0
        %v3217 = vadd.f32 0.0, %v3216
        %v3218 = vpop.f32.mrb[0].mxu0
        %v3219 = vadd.f32 0.0, %v3218
        %v3220 = vpop.f32.mrb[0].mxu0
        %v3221 = vadd.f32 0.0, %v3220
        %v3222 = vpop.f32.mrb[0].mxu0
        %v3223 = vadd.f32 0.0, %v3222
        %3224 = vdwg.mxu0
        %3225 = vmatprep.subr.bf16.mxu0 %v2837
        %3226 = vmatpush1.bf16.msra.mxu0 %v2836
        %3227 = vmatprep.subr.bf16.mxu0 %v3030
        %3228 = vmatpush1.bf16.msra.mxu0 %v3027
        %3229 = vmatprep.subr.bf16.mxu0 0
        %3230 = vmatpush1.bf16.msra.mxu0 0
        %3231 = vmatprep.subr.bf16.mxu0 0
        %3232 = vmatpush1.bf16.msra.mxu0 0
        %3233 = vmatprep.subr.bf16.mxu0 0
        %3234 = vmatpush1.bf16.msra.mxu0 0
        %3235 = vmatprep.subr.bf16.mxu0 0
        %3236 = vmatpush1.bf16.msra.mxu0 0
        %3237 = vmatprep.subr.bf16.mxu0 0
        %3238 = vmatpush1.bf16.msra.mxu0 0
        %3239 = vmatprep.subr.bf16.mxu0 0
        %3240 = vmatpush1.bf16.msra.mxu0 0
        %3241 = vmatprep.subr.bf16.mxu0 0
        %3242 = vmatpush1.bf16.msra.mxu0 0
        %3243 = vmatprep.subr.bf16.mxu0 0
        %3244 = vmatpush1.bf16.msra.mxu0 0
        %3245 = vmatprep.subr.bf16.mxu0 0
        %3246 = vmatpush1.bf16.msra.mxu0 0
        %3247 = vmatprep.subr.bf16.mxu0 0
        %3248 = vmatpush1.bf16.msra.mxu0 0
        %3249 = vmatprep.subr.bf16.mxu0 0
        %3250 = vmatpush1.bf16.msra.mxu0 0
        %3251 = vmatprep.subr.bf16.mxu0 0
        %3252 = vmatpush1.bf16.msra.mxu0 0
        %3253 = vmatprep.subr.bf16.mxu0 0
        %3254 = vmatpush1.bf16.msra.mxu0 0
        %3255 = vmatprep.subr.bf16.mxu0 0
        %3256 = vmatpush1.bf16.msra.mxu0 0
        %3257 = vmatprep.mubr.bf16.mxu0 0
        %3258 = vmatmul.mubr.bf16.gmra.mrb[0].mxu0 %v2970
        %v3259 = vpop.f32.mrb[0].mxu0
        %v3260 = vadd.f32 0.0, %v3259
        %v3261 = vpop.f32.mrb[0].mxu0
        %v3262 = vadd.f32 0.0, %v3261
        %v3263 = vpop.f32.mrb[0].mxu0
        %v3264 = vadd.f32 0.0, %v3263
        %v3265 = vpop.f32.mrb[0].mxu0
        %v3266 = vadd.f32 0.0, %v3265
        %3267 = vmatprep.mubr.bf16.mxu0 0
        %3268 = vmatmul.mubr.bf16.gmra.mrb[0].mxu0 %v2973
        %v3269 = vpop.f32.mrb[0].mxu0
        %v3270 = vadd.f32 0.0, %v3269
        %v3271 = vpop.f32.mrb[0].mxu0
        %v3272 = vadd.f32 0.0, %v3271
        %v3273 = vpop.f32.mrb[0].mxu0
        %v3274 = vadd.f32 0.0, %v3273
        %v3275 = vpop.f32.mrb[0].mxu0
        %v3276 = vadd.f32 0.0, %v3275
        %3277 = vmatprep.mubr.bf16.mxu0 0
        %3278 = vmatmul.mubr.bf16.gmra.mrb[0].mxu0 %v2976
        %v3279 = vpop.f32.mrb[0].mxu0
        %v3280 = vadd.f32 0.0, %v3279
        %v3281 = vpop.f32.mrb[0].mxu0
        %v3282 = vadd.f32 0.0, %v3281
        %v3283 = vpop.f32.mrb[0].mxu0
        %v3284 = vadd.f32 0.0, %v3283
        %v3285 = vpop.f32.mrb[0].mxu0
        %v3286 = vadd.f32 0.0, %v3285
        %3287 = vmatprep.mubr.bf16.mxu0 0
        %3288 = vmatmul.mubr.bf16.gmra.mrb[0].mxu0 %v2979
        %v3289 = vpop.f32.mrb[0].mxu0
        %v3290 = vadd.f32 0.0, %v3289
        %v3291 = vpop.f32.mrb[0].mxu0
        %v3292 = vadd.f32 0.0, %v3291
        %v3293 = vpop.f32.mrb[0].mxu0
        %v3294 = vadd.f32 0.0, %v3293
        %v3295 = vpop.f32.mrb[0].mxu0
        %v3296 = vadd.f32 0.0, %v3295
        %3297 = vmatprep.mubr.bf16.mxu0 0
        %3298 = vmatmul.mubr.bf16.gmra.mrb[0].mxu0 %v2982
        %v3299 = vpop.f32.mrb[0].mxu0
        %v3300 = vadd.f32 0.0, %v3299
        %v3301 = vpop.f32.mrb[0].mxu0
        %v3302 = vadd.f32 0.0, %v3301
        %v3303 = vpop.f32.mrb[0].mxu0
        %v3304 = vadd.f32 0.0, %v3303
        %v3305 = vpop.f32.mrb[0].mxu0
        %v3306 = vadd.f32 0.0, %v3305
        %3307 = vmatprep.mubr.bf16.mxu0 0
        %3308 = vmatmul.mubr.bf16.gmra.mrb[0].mxu0 %v2985
        %v3309 = vpop.f32.mrb[0].mxu0
        %v3310 = vadd.f32 0.0, %v3309
        %v3311 = vpop.f32.mrb[0].mxu0
        %v3312 = vadd.f32 0.0, %v3311
        %v3313 = vpop.f32.mrb[0].mxu0
        %v3314 = vadd.f32 0.0, %v3313
        %v3315 = vpop.f32.mrb[0].mxu0
        %v3316 = vadd.f32 0.0, %v3315
        %3317 = vmatprep.mubr.bf16.mxu0 0
        %3318 = vmatmul.mubr.bf16.gmra.mrb[0].mxu0 %v2988
        %v3319 = vpop.f32.mrb[0].mxu0
        %v3320 = vadd.f32 0.0, %v3319
        %v3321 = vpop.f32.mrb[0].mxu0
        %v3322 = vadd.f32 0.0, %v3321
        %v3323 = vpop.f32.mrb[0].mxu0
        %v3324 = vadd.f32 0.0, %v3323
        %v3325 = vpop.f32.mrb[0].mxu0
        %v3326 = vadd.f32 0.0, %v3325
        %3327 = vmatprep.mubr.bf16.mxu0 0
        %3328 = vmatmul.mubr.bf16.gmra.mrb[0].mxu0 %v2991
        %v3329 = vpop.f32.mrb[0].mxu0
        %v3330 = vadd.f32 0.0, %v3329
        %v3331 = vpop.f32.mrb[0].mxu0
        %v3332 = vadd.f32 0.0, %v3331
        %v3333 = vpop.f32.mrb[0].mxu0
        %v3334 = vadd.f32 0.0, %v3333
        %v3335 = vpop.f32.mrb[0].mxu0
        %v3336 = vadd.f32 0.0, %v3335
        %3337 = vmatprep.mubr.bf16.mxu0 0
        %3338 = vmatmul.mubr.bf16.gmra.mrb[0].mxu0 %v2994
        %v3339 = vpop.f32.mrb[0].mxu0
        %v3340 = vadd.f32 0.0, %v3339
        %v3341 = vpop.f32.mrb[0].mxu0
        %v3342 = vadd.f32 0.0, %v3341
        %v3343 = vpop.f32.mrb[0].mxu0
        %v3344 = vadd.f32 0.0, %v3343
        %v3345 = vpop.f32.mrb[0].mxu0
        %v3346 = vadd.f32 0.0, %v3345
        %3347 = vmatprep.mubr.bf16.mxu0 0
        %3348 = vmatmul.mubr.bf16.gmra.mrb[0].mxu0 %v2997
        %v3349 = vpop.f32.mrb[0].mxu0
        %v3350 = vadd.f32 0.0, %v3349
        %v3351 = vpop.f32.mrb[0].mxu0
        %v3352 = vadd.f32 0.0, %v3351
        %v3353 = vpop.f32.mrb[0].mxu0
        %v3354 = vadd.f32 0.0, %v3353
        %v3355 = vpop.f32.mrb[0].mxu0
        %v3356 = vadd.f32 0.0, %v3355
        %3357 = vmatprep.mubr.bf16.mxu0 0
        %3358 = vmatmul.mubr.bf16.gmra.mrb[0].mxu0 %v3000
        %v3359 = vpop.f32.mrb[0].mxu0
        %v3360 = vadd.f32 0.0, %v3359
        %v3361 = vpop.f32.mrb[0].mxu0
        %v3362 = vadd.f32 0.0, %v3361
        %v3363 = vpop.f32.mrb[0].mxu0
        %v3364 = vadd.f32 0.0, %v3363
        %v3365 = vpop.f32.mrb[0].mxu0
        %v3366 = vadd.f32 0.0, %v3365
        %3367 = vmatprep.mubr.bf16.mxu0 0
        %3368 = vmatmul.mubr.bf16.gmra.mrb[0].mxu0 %v3003
        %v3369 = vpop.f32.mrb[0].mxu0
        %v3370 = vadd.f32 0.0, %v3369
        %v3371 = vpop.f32.mrb[0].mxu0
        %v3372 = vadd.f32 0.0, %v3371
        %v3373 = vpop.f32.mrb[0].mxu0
        %v3374 = vadd.f32 0.0, %v3373
        %v3375 = vpop.f32.mrb[0].mxu0
        %v3376 = vadd.f32 0.0, %v3375
        %3377 = vmatprep.mubr.bf16.mxu0 0
        %3378 = vmatmul.mubr.bf16.gmra.mrb[0].mxu0 %v3006
        %v3379 = vpop.f32.mrb[0].mxu0
        %v3380 = vadd.f32 0.0, %v3379
        %v3381 = vpop.f32.mrb[0].mxu0
        %v3382 = vadd.f32 0.0, %v3381
        %v3383 = vpop.f32.mrb[0].mxu0
        %v3384 = vadd.f32 0.0, %v3383
        %v3385 = vpop.f32.mrb[0].mxu0
        %v3386 = vadd.f32 0.0, %v3385
        %3387 = vmatprep.mubr.bf16.mxu0 0
        %3388 = vmatmul.mubr.bf16.gmra.mrb[0].mxu0 %v3009
        %v3389 = vpop.f32.mrb[0].mxu0
        %v3390 = vadd.f32 0.0, %v3389
        %v3391 = vpop.f32.mrb[0].mxu0
        %v3392 = vadd.f32 0.0, %v3391
        %v3393 = vpop.f32.mrb[0].mxu0
        %v3394 = vadd.f32 0.0, %v3393
        %v3395 = vpop.f32.mrb[0].mxu0
        %v3396 = vadd.f32 0.0, %v3395
        %3397 = vmatprep.mubr.bf16.mxu0 0
        %3398 = vmatmul.mubr.bf16.gmra.mrb[0].mxu0 %v3012
        %v3399 = vpop.f32.mrb[0].mxu0
        %v3400 = vadd.f32 0.0, %v3399
        %v3401 = vpop.f32.mrb[0].mxu0
        %v3402 = vadd.f32 0.0, %v3401
        %v3403 = vpop.f32.mrb[0].mxu0
        %v3404 = vadd.f32 0.0, %v3403
        %v3405 = vpop.f32.mrb[0].mxu0
        %v3406 = vadd.f32 0.0, %v3405
        %3407 = vmatprep.mubr.bf16.mxu0 0
        %3408 = vmatmul.mubr.bf16.gmra.mrb[0].mxu0 %v3015
        %v3409 = vpop.f32.mrb[0].mxu0
        %v3410 = vadd.f32 0.0, %v3409
        %v3411 = vpop.f32.mrb[0].mxu0
        %v3412 = vadd.f32 0.0, %v3411
        %v3413 = vpop.f32.mrb[0].mxu0
        %v3414 = vadd.f32 0.0, %v3413
        %v3415 = vpop.f32.mrb[0].mxu0
        %v3416 = vadd.f32 0.0, %v3415
        %3417 = vdwg.mxu0
        %v3418 = vmax.f32 %v3067, 0.0
        %v3419 = vmax.f32 %v3069, 0.0
        %v3420 = vmax.f32 %v3260, 0.0
        %v3421 = vmax.f32 %v3262, 0.0
        %v3422 = vmax.f32 %v3071, 0.0
        %v3423 = vmax.f32 %v3073, 0.0
        %v3424 = vmax.f32 %v3264, 0.0
        %v3425 = vmax.f32 %v3266, 0.0
        %v3426 = vmax.f32 %v3077, 0.0
        %v3427 = vmax.f32 %v3079, 0.0
        %v3428 = vmax.f32 %v3270, 0.0
        %v3429 = vmax.f32 %v3272, 0.0
        %v3430 = vmax.f32 %v3081, 0.0
        %v3431 = vmax.f32 %v3083, 0.0
        %v3432 = vmax.f32 %v3274, 0.0
        %v3433 = vmax.f32 %v3276, 0.0
        %v3434 = vmax.f32 %v3087, 0.0
        %v3435 = vmax.f32 %v3089, 0.0
        %v3436 = vmax.f32 %v3280, 0.0
        %v3437 = vmax.f32 %v3282, 0.0
        %v3438 = vmax.f32 %v3091, 0.0
        %v3439 = vmax.f32 %v3093, 0.0
        %v3440 = vmax.f32 %v3284, 0.0
        %v3441 = vmax.f32 %v3286, 0.0
        %v3442 = vmax.f32 %v3097, 0.0
        %v3443 = vmax.f32 %v3099, 0.0
        %v3444 = vmax.f32 %v3290, 0.0
        %v3445 = vmax.f32 %v3292, 0.0
        %v3446 = vmax.f32 %v3101, 0.0
        %v3447 = vmax.f32 %v3103, 0.0
        %v3448 = vmax.f32 %v3294, 0.0
        %v3449 = vmax.f32 %v3296, 0.0
        %v3450 = vmax.f32 %v3107, 0.0
        %v3451 = vmax.f32 %v3109, 0.0
        %v3452 = vmax.f32 %v3300, 0.0
        %v3453 = vmax.f32 %v3302, 0.0
        %v3454 = vmax.f32 %v3111, 0.0
        %v3455 = vmax.f32 %v3113, 0.0
        %v3456 = vmax.f32 %v3304, 0.0
        %v3457 = vmax.f32 %v3306, 0.0
        %v3458 = vmax.f32 %v3117, 0.0
        %v3459 = vmax.f32 %v3119, 0.0
        %v3460 = vmax.f32 %v3310, 0.0
        %v3461 = vmax.f32 %v3312, 0.0
        %v3462 = vmax.f32 %v3121, 0.0
        %v3463 = vmax.f32 %v3123, 0.0
        %v3464 = vmax.f32 %v3314, 0.0
        %v3465 = vmax.f32 %v3316, 0.0
        %v3466 = vmax.f32 %v3127, 0.0
        %v3467 = vmax.f32 %v3129, 0.0
        %v3468 = vmax.f32 %v3320, 0.0
        %v3469 = vmax.f32 %v3322, 0.0
        %v3470 = vmax.f32 %v3131, 0.0
        %v3471 = vmax.f32 %v3133, 0.0
        %v3472 = vmax.f32 %v3324, 0.0
        %v3473 = vmax.f32 %v3326, 0.0
        %v3474 = vmax.f32 %v3137, 0.0
        %v3475 = vmax.f32 %v3139, 0.0
        %v3476 = vmax.f32 %v3330, 0.0
        %v3477 = vmax.f32 %v3332, 0.0
        %v3478 = vmax.f32 %v3141, 0.0
        %v3479 = vmax.f32 %v3143, 0.0
        %v3480 = vmax.f32 %v3334, 0.0
        %v3481 = vmax.f32 %v3336, 0.0
        %v3482 = vmax.f32 %v3147, 0.0
        %v3483 = vmax.f32 %v3149, 0.0
        %v3484 = vmax.f32 %v3340, 0.0
        %v3485 = vmax.f32 %v3342, 0.0
        %v3486 = vmax.f32 %v3151, 0.0
        %v3487 = vmax.f32 %v3153, 0.0
        %v3488 = vmax.f32 %v3344, 0.0
        %v3489 = vmax.f32 %v3346, 0.0
        %v3490 = vmax.f32 %v3157, 0.0
        %v3491 = vmax.f32 %v3159, 0.0
        %v3492 = vmax.f32 %v3350, 0.0
        %v3493 = vmax.f32 %v3352, 0.0
        %v3494 = vmax.f32 %v3161, 0.0
        %v3495 = vmax.f32 %v3163, 0.0
        %v3496 = vmax.f32 %v3354, 0.0
        %v3497 = vmax.f32 %v3356, 0.0
        %v3498 = vmax.f32 %v3167, 0.0
        %v3499 = vmax.f32 %v3169, 0.0
        %v3500 = vmax.f32 %v3360, 0.0
        %v3501 = vmax.f32 %v3362, 0.0
        %v3502 = vmax.f32 %v3171, 0.0
        %v3503 = vmax.f32 %v3173, 0.0
        %v3504 = vmax.f32 %v3364, 0.0
        %v3505 = vmax.f32 %v3366, 0.0
        %v3506 = vmax.f32 %v3177, 0.0
        %v3507 = vmax.f32 %v3179, 0.0
        %v3508 = vmax.f32 %v3370, 0.0
        %v3509 = vmax.f32 %v3372, 0.0
        %v3510 = vmax.f32 %v3181, 0.0
        %v3511 = vmax.f32 %v3183, 0.0
        %v3512 = vmax.f32 %v3374, 0.0
        %v3513 = vmax.f32 %v3376, 0.0
        %v3514 = vmax.f32 %v3187, 0.0
        %v3515 = vmax.f32 %v3189, 0.0
        %v3516 = vmax.f32 %v3380, 0.0
        %v3517 = vmax.f32 %v3382, 0.0
        %v3518 = vmax.f32 %v3191, 0.0
        %v3519 = vmax.f32 %v3193, 0.0
        %v3520 = vmax.f32 %v3384, 0.0
        %v3521 = vmax.f32 %v3386, 0.0
        %v3522 = vmax.f32 %v3197, 0.0
        %v3523 = vmax.f32 %v3199, 0.0
        %v3524 = vmax.f32 %v3390, 0.0
        %v3525 = vmax.f32 %v3392, 0.0
        %v3526 = vmax.f32 %v3201, 0.0
        %v3527 = vmax.f32 %v3203, 0.0
        %v3528 = vmax.f32 %v3394, 0.0
        %v3529 = vmax.f32 %v3396, 0.0
        %v3530 = vmax.f32 %v3207, 0.0
        %v3531 = vmax.f32 %v3209, 0.0
        %v3532 = vmax.f32 %v3400, 0.0
        %v3533 = vmax.f32 %v3402, 0.0
        %v3534 = vmax.f32 %v3211, 0.0
        %v3535 = vmax.f32 %v3213, 0.0
        %v3536 = vmax.f32 %v3404, 0.0
        %v3537 = vmax.f32 %v3406, 0.0
        %v3538 = vmax.f32 %v3217, 0.0
        %v3539 = vmax.f32 %v3219, 0.0
        %v3540 = vmax.f32 %v3410, 0.0
        %v3541 = vmax.f32 %v3412, 0.0
        %v3542 = vmax.f32 %v3221, 0.0
        %v3543 = vmax.f32 %v3223, 0.0
        %v3544 = vmax.f32 %v3414, 0.0
        %v3545 = vmax.f32 %v3416, 0.0
        %v3546 = vpack.c.bf16 %v3422, %v3418
        %v3547 = vpack.c.bf16 %v3423, %v3419
        %v3548 = vpack.c.bf16 %v3424, %v3420
        %v3549 = vpack.c.bf16 %v3425, %v3421
        %v3550 = vpack.c.bf16 %v3430, %v3426
        %v3551 = vpack.c.bf16 %v3431, %v3427
        %v3552 = vpack.c.bf16 %v3432, %v3428
        %v3553 = vpack.c.bf16 %v3433, %v3429
        %v3554 = vpack.c.bf16 %v3438, %v3434
        %v3555 = vpack.c.bf16 %v3439, %v3435
        %v3556 = vpack.c.bf16 %v3440, %v3436
        %v3557 = vpack.c.bf16 %v3441, %v3437
        %v3558 = vpack.c.bf16 %v3446, %v3442
        %v3559 = vpack.c.bf16 %v3447, %v3443
        %v3560 = vpack.c.bf16 %v3448, %v3444
        %v3561 = vpack.c.bf16 %v3449, %v3445
        %v3562 = vpack.c.bf16 %v3454, %v3450
        %v3563 = vpack.c.bf16 %v3455, %v3451
        %v3564 = vpack.c.bf16 %v3456, %v3452
        %v3565 = vpack.c.bf16 %v3457, %v3453
        %v3566 = vpack.c.bf16 %v3462, %v3458
        %v3567 = vpack.c.bf16 %v3463, %v3459
        %v3568 = vpack.c.bf16 %v3464, %v3460
        %v3569 = vpack.c.bf16 %v3465, %v3461
        %v3570 = vpack.c.bf16 %v3470, %v3466
        %v3571 = vpack.c.bf16 %v3471, %v3467
        %v3572 = vpack.c.bf16 %v3472, %v3468
        %v3573 = vpack.c.bf16 %v3473, %v3469
        %v3574 = vpack.c.bf16 %v3478, %v3474
        %v3575 = vpack.c.bf16 %v3479, %v3475
        %v3576 = vpack.c.bf16 %v3480, %v3476
        %v3577 = vpack.c.bf16 %v3481, %v3477
        %v3578 = vpack.c.bf16 %v3486, %v3482
        %v3579 = vpack.c.bf16 %v3487, %v3483
        %v3580 = vpack.c.bf16 %v3488, %v3484
        %v3581 = vpack.c.bf16 %v3489, %v3485
        %v3582 = vpack.c.bf16 %v3494, %v3490
        %v3583 = vpack.c.bf16 %v3495, %v3491
        %v3584 = vpack.c.bf16 %v3496, %v3492
        %v3585 = vpack.c.bf16 %v3497, %v3493
        %v3586 = vpack.c.bf16 %v3502, %v3498
        %v3587 = vpack.c.bf16 %v3503, %v3499
        %v3588 = vpack.c.bf16 %v3504, %v3500
        %v3589 = vpack.c.bf16 %v3505, %v3501
        %v3590 = vpack.c.bf16 %v3510, %v3506
        %v3591 = vpack.c.bf16 %v3511, %v3507
        %v3592 = vpack.c.bf16 %v3512, %v3508
        %v3593 = vpack.c.bf16 %v3513, %v3509
        %v3594 = vpack.c.bf16 %v3518, %v3514
        %v3595 = vpack.c.bf16 %v3519, %v3515
        %v3596 = vpack.c.bf16 %v3520, %v3516
        %v3597 = vpack.c.bf16 %v3521, %v3517
        %v3598 = vpack.c.bf16 %v3526, %v3522
        %v3599 = vpack.c.bf16 %v3527, %v3523
        %v3600 = vpack.c.bf16 %v3528, %v3524
        %v3601 = vpack.c.bf16 %v3529, %v3525
        %v3602 = vpack.c.bf16 %v3534, %v3530
        %v3603 = vpack.c.bf16 %v3535, %v3531
        %v3604 = vpack.c.bf16 %v3536, %v3532
        %v3605 = vpack.c.bf16 %v3537, %v3533
        %v3606 = vpack.c.bf16 %v3542, %v3538
        %v3607 = vpack.c.bf16 %v3543, %v3539
        %v3608 = vpack.c.bf16 %v3544, %v3540
        %v3609 = vpack.c.bf16 %v3545, %v3541
        %s3610 = smul.u32 %s2848, 64
        %s3611 = smul.addr %s3610, 4
        %s3612 = scalar_lea.vmem %s10, %s3611
        %v3613 = vld [vmem:[%s3612] sm:$0xff]
        %v3614 = vld [vmem:[%s3612 + $0x8] sm:$0xff]
        %v3615 = vld [vmem:[%s3612 + $0x10] sm:$0xff]
        %v3616 = vld [vmem:[%s3612 + $0x18] sm:$0xff]
        %v3617 = vld [vmem:[%s3612 + $0x20] sm:$0xff]
        %v3618 = vld [vmem:[%s3612 + $0x28] sm:$0xff]
        %v3619 = vld [vmem:[%s3612 + $0x30] sm:$0xff]
        %v3620 = vld [vmem:[%s3612 + $0x38] sm:$0xff]
        %v3621 = vld [vmem:[%s3612 + $0x40] sm:$0xff]
        %v3622 = vld [vmem:[%s3612 + $0x48] sm:$0xff]
        %v3623 = vld [vmem:[%s3612 + $0x50] sm:$0xff]
        %v3624 = vld [vmem:[%s3612 + $0x58] sm:$0xff]
        %v3625 = vld [vmem:[%s3612 + $0x60] sm:$0xff]
        %v3626 = vld [vmem:[%s3612 + $0x68] sm:$0xff]
        %v3627 = vld [vmem:[%s3612 + $0x70] sm:$0xff]
        %v3628 = vld [vmem:[%s3612 + $0x78] sm:$0xff]
        %v3629 = vld [vmem:[%s3612 + $0x80] sm:$0xff]
        %v3630 = vld [vmem:[%s3612 + $0x88] sm:$0xff]
        %v3631 = vld [vmem:[%s3612 + $0x90] sm:$0xff]
        %v3632 = vld [vmem:[%s3612 + $0x98] sm:$0xff]
        %v3633 = vld [vmem:[%s3612 + $0xa0] sm:$0xff]
        %v3634 = vld [vmem:[%s3612 + $0xa8] sm:$0xff]
        %v3635 = vld [vmem:[%s3612 + $0xb0] sm:$0xff]
        %v3636 = vld [vmem:[%s3612 + $0xb8] sm:$0xff]
        %v3637 = vld [vmem:[%s3612 + $0xc0] sm:$0xff]
        %v3638 = vld [vmem:[%s3612 + $0xc8] sm:$0xff]
        %v3639 = vld [vmem:[%s3612 + $0xd0] sm:$0xff]
        %v3640 = vld [vmem:[%s3612 + $0xd8] sm:$0xff]
        %v3641 = vld [vmem:[%s3612 + $0xe0] sm:$0xff]
        %v3642 = vld [vmem:[%s3612 + $0xe8] sm:$0xff]
        %v3643 = vld [vmem:[%s3612 + $0xf0] sm:$0xff]
        %v3644 = vld [vmem:[%s3612 + $0xf8] sm:$0xff]
        %v3677 = vunpack.c.l.b16 %v3613
        %v3678 = vunpack.c.h.b16 %v3613
        %v3679 = vunpack.c.l.b16 %v3614
        %v3680 = vunpack.c.h.b16 %v3614
        %v3681 = vunpack.c.l.b16 %v3615
        %v3682 = vunpack.c.h.b16 %v3615
        %v3683 = vunpack.c.l.b16 %v3616
        %v3684 = vunpack.c.h.b16 %v3616
        %v3685 = vunpack.c.l.b16 %v3617
        %v3686 = vunpack.c.h.b16 %v3617
        %v3687 = vunpack.c.l.b16 %v3618
        %v3688 = vunpack.c.h.b16 %v3618
        %v3689 = vunpack.c.l.b16 %v3619
        %v3690 = vunpack.c.h.b16 %v3619
        %v3691 = vunpack.c.l.b16 %v3620
        %v3692 = vunpack.c.h.b16 %v3620
        %v3693 = vunpack.c.l.b16 %v3621
        %v3694 = vunpack.c.h.b16 %v3621
        %v3695 = vunpack.c.l.b16 %v3622
        %v3696 = vunpack.c.h.b16 %v3622
        %v3697 = vunpack.c.l.b16 %v3623
        %v3698 = vunpack.c.h.b16 %v3623
        %v3699 = vunpack.c.l.b16 %v3624
        %v3700 = vunpack.c.h.b16 %v3624
        %v3701 = vunpack.c.l.b16 %v3625
        %v3702 = vunpack.c.h.b16 %v3625
        %v3703 = vunpack.c.l.b16 %v3626
        %v3704 = vunpack.c.h.b16 %v3626
        %v3705 = vunpack.c.l.b16 %v3627
        %v3706 = vunpack.c.h.b16 %v3627
        %v3707 = vunpack.c.l.b16 %v3628
        %v3708 = vunpack.c.h.b16 %v3628
        %v3709 = vunpack.c.l.b16 %v3629
        %v3710 = vunpack.c.h.b16 %v3629
        %v3711 = vunpack.c.l.b16 %v3630
        %v3712 = vunpack.c.h.b16 %v3630
        %v3713 = vunpack.c.l.b16 %v3631
        %v3714 = vunpack.c.h.b16 %v3631
        %v3715 = vunpack.c.l.b16 %v3632
        %v3716 = vunpack.c.h.b16 %v3632
        %v3717 = vunpack.c.l.b16 %v3633
        %v3718 = vunpack.c.h.b16 %v3633
        %v3719 = vunpack.c.l.b16 %v3634
        %v3720 = vunpack.c.h.b16 %v3634
        %v3721 = vunpack.c.l.b16 %v3635
        %v3722 = vunpack.c.h.b16 %v3635
        %v3723 = vunpack.c.l.b16 %v3636
        %v3724 = vunpack.c.h.b16 %v3636
        %v3725 = vunpack.c.l.b16 %v3637
        %v3726 = vunpack.c.h.b16 %v3637
        %v3727 = vunpack.c.l.b16 %v3638
        %v3728 = vunpack.c.h.b16 %v3638
        %v3729 = vunpack.c.l.b16 %v3639
        %v3730 = vunpack.c.h.b16 %v3639
        %v3731 = vunpack.c.l.b16 %v3640
        %v3732 = vunpack.c.h.b16 %v3640
        %v3733 = vunpack.c.l.b16 %v3641
        %v3734 = vunpack.c.h.b16 %v3641
        %v3735 = vunpack.c.l.b16 %v3642
        %v3736 = vunpack.c.h.b16 %v3642
        %v3737 = vunpack.c.l.b16 %v3643
        %v3738 = vunpack.c.h.b16 %v3643
        %v3739 = vunpack.c.l.b16 %v3644
        %v3740 = vunpack.c.h.b16 %v3644
        %v3741 = vpack.c.b16 %v3679, %v3677
        %v3742 = vpack.c.b16 %v3680, %v3678
        %v3743 = vpack.c.b16 %v3683, %v3681
        %v3744 = vpack.c.b16 %v3684, %v3682
        %v3745 = vpack.c.b16 %v3687, %v3685
        %v3746 = vpack.c.b16 %v3688, %v3686
        %v3747 = vpack.c.b16 %v3691, %v3689
        %v3748 = vpack.c.b16 %v3692, %v3690
        %v3749 = vpack.c.b16 %v3695, %v3693
        %v3750 = vpack.c.b16 %v3696, %v3694
        %v3751 = vpack.c.b16 %v3699, %v3697
        %v3752 = vpack.c.b16 %v3700, %v3698
        %v3753 = vpack.c.b16 %v3703, %v3701
        %v3754 = vpack.c.b16 %v3704, %v3702
        %v3755 = vpack.c.b16 %v3707, %v3705
        %v3756 = vpack.c.b16 %v3708, %v3706
        %v3757 = vpack.c.b16 %v3711, %v3709
        %v3758 = vpack.c.b16 %v3712, %v3710
        %v3759 = vpack.c.b16 %v3715, %v3713
        %v3760 = vpack.c.b16 %v3716, %v3714
        %v3761 = vpack.c.b16 %v3719, %v3717
        %v3762 = vpack.c.b16 %v3720, %v3718
        %v3763 = vpack.c.b16 %v3723, %v3721
        %v3764 = vpack.c.b16 %v3724, %v3722
        %v3765 = vpack.c.b16 %v3727, %v3725
        %v3766 = vpack.c.b16 %v3728, %v3726
        %v3767 = vpack.c.b16 %v3731, %v3729
        %v3768 = vpack.c.b16 %v3732, %v3730
        %v3769 = vpack.c.b16 %v3735, %v3733
        %v3770 = vpack.c.b16 %v3736, %v3734
        %v3771 = vpack.c.b16 %v3739, %v3737
        %v3772 = vpack.c.b16 %v3740, %v3738
        %3805 = vmatprep.subr.bf16.mxu0 %v3547
        %3806 = vmatpush1.bf16.msra.mxu0 %v3546
        %3807 = vmatprep.subr.bf16.mxu0 %v3551
        %3808 = vmatpush1.bf16.msra.mxu0 %v3550
        %3809 = vmatprep.subr.bf16.mxu0 %v3555
        %3810 = vmatpush1.bf16.msra.mxu0 %v3554
        %3811 = vmatprep.subr.bf16.mxu0 %v3559
        %3812 = vmatpush1.bf16.msra.mxu0 %v3558
        %3813 = vmatprep.subr.bf16.mxu0 %v3563
        %3814 = vmatpush1.bf16.msra.mxu0 %v3562
        %3815 = vmatprep.subr.bf16.mxu0 %v3567
        %3816 = vmatpush1.bf16.msra.mxu0 %v3566
        %3817 = vmatprep.subr.bf16.mxu0 %v3571
        %3818 = vmatpush1.bf16.msra.mxu0 %v3570
        %3819 = vmatprep.subr.bf16.mxu0 %v3575
        %3820 = vmatpush1.bf16.msra.mxu0 %v3574
        %3821 = vmatprep.subr.bf16.mxu0 %v3579
        %3822 = vmatpush1.bf16.msra.mxu0 %v3578
        %3823 = vmatprep.subr.bf16.mxu0 %v3583
        %3824 = vmatpush1.bf16.msra.mxu0 %v3582
        %3825 = vmatprep.subr.bf16.mxu0 %v3587
        %3826 = vmatpush1.bf16.msra.mxu0 %v3586
        %3827 = vmatprep.subr.bf16.mxu0 %v3591
        %3828 = vmatpush1.bf16.msra.mxu0 %v3590
        %3829 = vmatprep.subr.bf16.mxu0 %v3595
        %3830 = vmatpush1.bf16.msra.mxu0 %v3594
        %3831 = vmatprep.subr.bf16.mxu0 %v3599
        %3832 = vmatpush1.bf16.msra.mxu0 %v3598
        %3833 = vmatprep.subr.bf16.mxu0 %v3603
        %3834 = vmatpush1.bf16.msra.mxu0 %v3602
        %3835 = vmatprep.subr.bf16.mxu0 %v3607
        %3836 = vmatpush1.bf16.msra.mxu0 %v3606
        %3837 = vmatprep.mubr.bf16.mxu0 %v3742
        %3838 = vmatmul.mubr.bf16.gmra.mrb[0].mxu0 %v3741
        %v3839 = vpop.f32.mrb[0].mxu0
        %v3840 = vadd.f32 0.0, %v3839
        %v3841 = vpop.f32.mrb[0].mxu0
        %v3842 = vadd.f32 0.0, %v3841
        %v3843 = vpop.f32.mrb[0].mxu0
        %v3844 = vadd.f32 0.0, %v3843
        %v3845 = vpop.f32.mrb[0].mxu0
        %v3846 = vadd.f32 0.0, %v3845
        %3847 = vmatprep.mubr.bf16.mxu0 %v3744
        %3848 = vmatmul.mubr.bf16.gmra.mrb[0].mxu0 %v3743
        %v3849 = vpop.f32.mrb[0].mxu0
        %v3850 = vadd.f32 0.0, %v3849
        %v3851 = vpop.f32.mrb[0].mxu0
        %v3852 = vadd.f32 0.0, %v3851
        %v3853 = vpop.f32.mrb[0].mxu0
        %v3854 = vadd.f32 0.0, %v3853
        %v3855 = vpop.f32.mrb[0].mxu0
        %v3856 = vadd.f32 0.0, %v3855
        %3857 = vmatprep.mubr.bf16.mxu0 %v3746
        %3858 = vmatmul.mubr.bf16.gmra.mrb[0].mxu0 %v3745
        %v3859 = vpop.f32.mrb[0].mxu0
        %v3860 = vadd.f32 0.0, %v3859
        %v3861 = vpop.f32.mrb[0].mxu0
        %v3862 = vadd.f32 0.0, %v3861
        %v3863 = vpop.f32.mrb[0].mxu0
        %v3864 = vadd.f32 0.0, %v3863
        %v3865 = vpop.f32.mrb[0].mxu0
        %v3866 = vadd.f32 0.0, %v3865
        %3867 = vmatprep.mubr.bf16.mxu0 %v3748
        %3868 = vmatmul.mubr.bf16.gmra.mrb[0].mxu0 %v3747
        %v3869 = vpop.f32.mrb[0].mxu0
        %v3870 = vadd.f32 0.0, %v3869
        %v3871 = vpop.f32.mrb[0].mxu0
        %v3872 = vadd.f32 0.0, %v3871
        %v3873 = vpop.f32.mrb[0].mxu0
        %v3874 = vadd.f32 0.0, %v3873
        %v3875 = vpop.f32.mrb[0].mxu0
        %v3876 = vadd.f32 0.0, %v3875
        %3877 = vmatprep.mubr.bf16.mxu0 %v3750
        %3878 = vmatmul.mubr.bf16.gmra.mrb[0].mxu0 %v3749
        %v3879 = vpop.f32.mrb[0].mxu0
        %v3880 = vadd.f32 0.0, %v3879
        %v3881 = vpop.f32.mrb[0].mxu0
        %v3882 = vadd.f32 0.0, %v3881
        %v3883 = vpop.f32.mrb[0].mxu0
        %v3884 = vadd.f32 0.0, %v3883
        %v3885 = vpop.f32.mrb[0].mxu0
        %v3886 = vadd.f32 0.0, %v3885
        %3887 = vmatprep.mubr.bf16.mxu0 %v3752
        %3888 = vmatmul.mubr.bf16.gmra.mrb[0].mxu0 %v3751
        %v3889 = vpop.f32.mrb[0].mxu0
        %v3890 = vadd.f32 0.0, %v3889
        %v3891 = vpop.f32.mrb[0].mxu0
        %v3892 = vadd.f32 0.0, %v3891
        %v3893 = vpop.f32.mrb[0].mxu0
        %v3894 = vadd.f32 0.0, %v3893
        %v3895 = vpop.f32.mrb[0].mxu0
        %v3896 = vadd.f32 0.0, %v3895
        %3897 = vmatprep.mubr.bf16.mxu0 %v3754
        %3898 = vmatmul.mubr.bf16.gmra.mrb[0].mxu0 %v3753
        %v3899 = vpop.f32.mrb[0].mxu0
        %v3900 = vadd.f32 0.0, %v3899
        %v3901 = vpop.f32.mrb[0].mxu0
        %v3902 = vadd.f32 0.0, %v3901
        %v3903 = vpop.f32.mrb[0].mxu0
        %v3904 = vadd.f32 0.0, %v3903
        %v3905 = vpop.f32.mrb[0].mxu0
        %v3906 = vadd.f32 0.0, %v3905
        %3907 = vmatprep.mubr.bf16.mxu0 %v3756
        %3908 = vmatmul.mubr.bf16.gmra.mrb[0].mxu0 %v3755
        %v3909 = vpop.f32.mrb[0].mxu0
        %v3910 = vadd.f32 0.0, %v3909
        %v3911 = vpop.f32.mrb[0].mxu0
        %v3912 = vadd.f32 0.0, %v3911
        %v3913 = vpop.f32.mrb[0].mxu0
        %v3914 = vadd.f32 0.0, %v3913
        %v3915 = vpop.f32.mrb[0].mxu0
        %v3916 = vadd.f32 0.0, %v3915
        %3917 = vmatprep.mubr.bf16.mxu0 %v3758
        %3918 = vmatmul.mubr.bf16.gmra.mrb[0].mxu0 %v3757
        %v3919 = vpop.f32.mrb[0].mxu0
        %v3920 = vadd.f32 0.0, %v3919
        %v3921 = vpop.f32.mrb[0].mxu0
        %v3922 = vadd.f32 0.0, %v3921
        %v3923 = vpop.f32.mrb[0].mxu0
        %v3924 = vadd.f32 0.0, %v3923
        %v3925 = vpop.f32.mrb[0].mxu0
        %v3926 = vadd.f32 0.0, %v3925
        %3927 = vmatprep.mubr.bf16.mxu0 %v3760
        %3928 = vmatmul.mubr.bf16.gmra.mrb[0].mxu0 %v3759
        %v3929 = vpop.f32.mrb[0].mxu0
        %v3930 = vadd.f32 0.0, %v3929
        %v3931 = vpop.f32.mrb[0].mxu0
        %v3932 = vadd.f32 0.0, %v3931
        %v3933 = vpop.f32.mrb[0].mxu0
        %v3934 = vadd.f32 0.0, %v3933
        %v3935 = vpop.f32.mrb[0].mxu0
        %v3936 = vadd.f32 0.0, %v3935
        %3937 = vmatprep.mubr.bf16.mxu0 %v3762
        %3938 = vmatmul.mubr.bf16.gmra.mrb[0].mxu0 %v3761
        %v3939 = vpop.f32.mrb[0].mxu0
        %v3940 = vadd.f32 0.0, %v3939
        %v3941 = vpop.f32.mrb[0].mxu0
        %v3942 = vadd.f32 0.0, %v3941
        %v3943 = vpop.f32.mrb[0].mxu0
        %v3944 = vadd.f32 0.0, %v3943
        %v3945 = vpop.f32.mrb[0].mxu0
        %v3946 = vadd.f32 0.0, %v3945
        %3947 = vmatprep.mubr.bf16.mxu0 %v3764
        %3948 = vmatmul.mubr.bf16.gmra.mrb[0].mxu0 %v3763
        %v3949 = vpop.f32.mrb[0].mxu0
        %v3950 = vadd.f32 0.0, %v3949
        %v3951 = vpop.f32.mrb[0].mxu0
        %v3952 = vadd.f32 0.0, %v3951
        %v3953 = vpop.f32.mrb[0].mxu0
        %v3954 = vadd.f32 0.0, %v3953
        %v3955 = vpop.f32.mrb[0].mxu0
        %v3956 = vadd.f32 0.0, %v3955
        %3957 = vmatprep.mubr.bf16.mxu0 %v3766
        %3958 = vmatmul.mubr.bf16.gmra.mrb[0].mxu0 %v3765
        %v3959 = vpop.f32.mrb[0].mxu0
        %v3960 = vadd.f32 0.0, %v3959
        %v3961 = vpop.f32.mrb[0].mxu0
        %v3962 = vadd.f32 0.0, %v3961
        %v3963 = vpop.f32.mrb[0].mxu0
        %v3964 = vadd.f32 0.0, %v3963
        %v3965 = vpop.f32.mrb[0].mxu0
        %v3966 = vadd.f32 0.0, %v3965
        %3967 = vmatprep.mubr.bf16.mxu0 %v3768
        %3968 = vmatmul.mubr.bf16.gmra.mrb[0].mxu0 %v3767
        %v3969 = vpop.f32.mrb[0].mxu0
        %v3970 = vadd.f32 0.0, %v3969
        %v3971 = vpop.f32.mrb[0].mxu0
        %v3972 = vadd.f32 0.0, %v3971
        %v3973 = vpop.f32.mrb[0].mxu0
        %v3974 = vadd.f32 0.0, %v3973
        %v3975 = vpop.f32.mrb[0].mxu0
        %v3976 = vadd.f32 0.0, %v3975
        %3977 = vmatprep.mubr.bf16.mxu0 %v3770
        %3978 = vmatmul.mubr.bf16.gmra.mrb[0].mxu0 %v3769
        %v3979 = vpop.f32.mrb[0].mxu0
        %v3980 = vadd.f32 0.0, %v3979
        %v3981 = vpop.f32.mrb[0].mxu0
        %v3982 = vadd.f32 0.0, %v3981
        %v3983 = vpop.f32.mrb[0].mxu0
        %v3984 = vadd.f32 0.0, %v3983
        %v3985 = vpop.f32.mrb[0].mxu0
        %v3986 = vadd.f32 0.0, %v3985
        %3987 = vmatprep.mubr.bf16.mxu0 %v3772
        %3988 = vmatmul.mubr.bf16.gmra.mrb[0].mxu0 %v3771
        %v3989 = vpop.f32.mrb[0].mxu0
        %v3990 = vadd.f32 0.0, %v3989
        %v3991 = vpop.f32.mrb[0].mxu0
        %v3992 = vadd.f32 0.0, %v3991
        %v3993 = vpop.f32.mrb[0].mxu0
        %v3994 = vadd.f32 0.0, %v3993
        %v3995 = vpop.f32.mrb[0].mxu0
        %v3996 = vadd.f32 0.0, %v3995
        %3997 = vdwg.mxu0
        %3998 = vmatprep.subr.bf16.mxu0 %v3549
        %3999 = vmatpush1.bf16.msra.mxu0 %v3548
        %4000 = vmatprep.subr.bf16.mxu0 %v3553
        %4001 = vmatpush1.bf16.msra.mxu0 %v3552
        %4002 = vmatprep.subr.bf16.mxu0 %v3557
        %4003 = vmatpush1.bf16.msra.mxu0 %v3556
        %4004 = vmatprep.subr.bf16.mxu0 %v3561
        %4005 = vmatpush1.bf16.msra.mxu0 %v3560
        %4006 = vmatprep.subr.bf16.mxu0 %v3565
        %4007 = vmatpush1.bf16.msra.mxu0 %v3564
        %4008 = vmatprep.subr.bf16.mxu0 %v3569
        %4009 = vmatpush1.bf16.msra.mxu0 %v3568
        %4010 = vmatprep.subr.bf16.mxu0 %v3573
        %4011 = vmatpush1.bf16.msra.mxu0 %v3572
        %4012 = vmatprep.subr.bf16.mxu0 %v3577
        %4013 = vmatpush1.bf16.msra.mxu0 %v3576
        %4014 = vmatprep.subr.bf16.mxu0 %v3581
        %4015 = vmatpush1.bf16.msra.mxu0 %v3580
        %4016 = vmatprep.subr.bf16.mxu0 %v3585
        %4017 = vmatpush1.bf16.msra.mxu0 %v3584
        %4018 = vmatprep.subr.bf16.mxu0 %v3589
        %4019 = vmatpush1.bf16.msra.mxu0 %v3588
        %4020 = vmatprep.subr.bf16.mxu0 %v3593
        %4021 = vmatpush1.bf16.msra.mxu0 %v3592
        %4022 = vmatprep.subr.bf16.mxu0 %v3597
        %4023 = vmatpush1.bf16.msra.mxu0 %v3596
        %4024 = vmatprep.subr.bf16.mxu0 %v3601
        %4025 = vmatpush1.bf16.msra.mxu0 %v3600
        %4026 = vmatprep.subr.bf16.mxu0 %v3605
        %4027 = vmatpush1.bf16.msra.mxu0 %v3604
        %4028 = vmatprep.subr.bf16.mxu0 %v3609
        %4029 = vmatpush1.bf16.msra.mxu0 %v3608
        %4030 = vmatprep.mubr.bf16.mxu0 %v3742
        %4031 = vmatmul.mubr.bf16.gmra.mrb[0].mxu0 %v3741
        %v4032 = vpop.f32.mrb[0].mxu0
        %v4033 = vadd.f32 0.0, %v4032
        %v4034 = vpop.f32.mrb[0].mxu0
        %v4035 = vadd.f32 0.0, %v4034
        %v4036 = vpop.f32.mrb[0].mxu0
        %v4037 = vadd.f32 0.0, %v4036
        %v4038 = vpop.f32.mrb[0].mxu0
        %v4039 = vadd.f32 0.0, %v4038
        %4040 = vmatprep.mubr.bf16.mxu0 %v3744
        %4041 = vmatmul.mubr.bf16.gmra.mrb[0].mxu0 %v3743
        %v4042 = vpop.f32.mrb[0].mxu0
        %v4043 = vadd.f32 0.0, %v4042
        %v4044 = vpop.f32.mrb[0].mxu0
        %v4045 = vadd.f32 0.0, %v4044
        %v4046 = vpop.f32.mrb[0].mxu0
        %v4047 = vadd.f32 0.0, %v4046
        %v4048 = vpop.f32.mrb[0].mxu0
        %v4049 = vadd.f32 0.0, %v4048
        %4050 = vmatprep.mubr.bf16.mxu0 %v3746
        %4051 = vmatmul.mubr.bf16.gmra.mrb[0].mxu0 %v3745
        %v4052 = vpop.f32.mrb[0].mxu0
        %v4053 = vadd.f32 0.0, %v4052
        %v4054 = vpop.f32.mrb[0].mxu0
        %v4055 = vadd.f32 0.0, %v4054
        %v4056 = vpop.f32.mrb[0].mxu0
        %v4057 = vadd.f32 0.0, %v4056
        %v4058 = vpop.f32.mrb[0].mxu0
        %v4059 = vadd.f32 0.0, %v4058
        %4060 = vmatprep.mubr.bf16.mxu0 %v3748
        %4061 = vmatmul.mubr.bf16.gmra.mrb[0].mxu0 %v3747
        %v4062 = vpop.f32.mrb[0].mxu0
        %v4063 = vadd.f32 0.0, %v4062
        %v4064 = vpop.f32.mrb[0].mxu0
        %v4065 = vadd.f32 0.0, %v4064
        %v4066 = vpop.f32.mrb[0].mxu0
        %v4067 = vadd.f32 0.0, %v4066
        %v4068 = vpop.f32.mrb[0].mxu0
        %v4069 = vadd.f32 0.0, %v4068
        %4070 = vmatprep.mubr.bf16.mxu0 %v3750
        %4071 = vmatmul.mubr.bf16.gmra.mrb[0].mxu0 %v3749
        %v4072 = vpop.f32.mrb[0].mxu0
        %v4073 = vadd.f32 0.0, %v4072
        %v4074 = vpop.f32.mrb[0].mxu0
        %v4075 = vadd.f32 0.0, %v4074
        %v4076 = vpop.f32.mrb[0].mxu0
        %v4077 = vadd.f32 0.0, %v4076
        %v4078 = vpop.f32.mrb[0].mxu0
        %v4079 = vadd.f32 0.0, %v4078
        %4080 = vmatprep.mubr.bf16.mxu0 %v3752
        %4081 = vmatmul.mubr.bf16.gmra.mrb[0].mxu0 %v3751
        %v4082 = vpop.f32.mrb[0].mxu0
        %v4083 = vadd.f32 0.0, %v4082
        %v4084 = vpop.f32.mrb[0].mxu0
        %v4085 = vadd.f32 0.0, %v4084
        %v4086 = vpop.f32.mrb[0].mxu0
        %v4087 = vadd.f32 0.0, %v4086
        %v4088 = vpop.f32.mrb[0].mxu0
        %v4089 = vadd.f32 0.0, %v4088
        %4090 = vmatprep.mubr.bf16.mxu0 %v3754
        %4091 = vmatmul.mubr.bf16.gmra.mrb[0].mxu0 %v3753
        %v4092 = vpop.f32.mrb[0].mxu0
        %v4093 = vadd.f32 0.0, %v4092
        %v4094 = vpop.f32.mrb[0].mxu0
        %v4095 = vadd.f32 0.0, %v4094
        %v4096 = vpop.f32.mrb[0].mxu0
        %v4097 = vadd.f32 0.0, %v4096
        %v4098 = vpop.f32.mrb[0].mxu0
        %v4099 = vadd.f32 0.0, %v4098
        %4100 = vmatprep.mubr.bf16.mxu0 %v3756
        %4101 = vmatmul.mubr.bf16.gmra.mrb[0].mxu0 %v3755
        %v4102 = vpop.f32.mrb[0].mxu0
        %v4103 = vadd.f32 0.0, %v4102
        %v4104 = vpop.f32.mrb[0].mxu0
        %v4105 = vadd.f32 0.0, %v4104
        %v4106 = vpop.f32.mrb[0].mxu0
        %v4107 = vadd.f32 0.0, %v4106
        %v4108 = vpop.f32.mrb[0].mxu0
        %v4109 = vadd.f32 0.0, %v4108
        %4110 = vmatprep.mubr.bf16.mxu0 %v3758
        %4111 = vmatmul.mubr.bf16.gmra.mrb[0].mxu0 %v3757
        %v4112 = vpop.f32.mrb[0].mxu0
        %v4113 = vadd.f32 0.0, %v4112
        %v4114 = vpop.f32.mrb[0].mxu0
        %v4115 = vadd.f32 0.0, %v4114
        %v4116 = vpop.f32.mrb[0].mxu0
        %v4117 = vadd.f32 0.0, %v4116
        %v4118 = vpop.f32.mrb[0].mxu0
        %v4119 = vadd.f32 0.0, %v4118
        %4120 = vmatprep.mubr.bf16.mxu0 %v3760
        %4121 = vmatmul.mubr.bf16.gmra.mrb[0].mxu0 %v3759
        %v4122 = vpop.f32.mrb[0].mxu0
        %v4123 = vadd.f32 0.0, %v4122
        %v4124 = vpop.f32.mrb[0].mxu0
        %v4125 = vadd.f32 0.0, %v4124
        %v4126 = vpop.f32.mrb[0].mxu0
        %v4127 = vadd.f32 0.0, %v4126
        %v4128 = vpop.f32.mrb[0].mxu0
        %v4129 = vadd.f32 0.0, %v4128
        %4130 = vmatprep.mubr.bf16.mxu0 %v3762
        %4131 = vmatmul.mubr.bf16.gmra.mrb[0].mxu0 %v3761
        %v4132 = vpop.f32.mrb[0].mxu0
        %v4133 = vadd.f32 0.0, %v4132
        %v4134 = vpop.f32.mrb[0].mxu0
        %v4135 = vadd.f32 0.0, %v4134
        %v4136 = vpop.f32.mrb[0].mxu0
        %v4137 = vadd.f32 0.0, %v4136
        %v4138 = vpop.f32.mrb[0].mxu0
        %v4139 = vadd.f32 0.0, %v4138
        %4140 = vmatprep.mubr.bf16.mxu0 %v3764
        %4141 = vmatmul.mubr.bf16.gmra.mrb[0].mxu0 %v3763
        %v4142 = vpop.f32.mrb[0].mxu0
        %v4143 = vadd.f32 0.0, %v4142
        %v4144 = vpop.f32.mrb[0].mxu0
        %v4145 = vadd.f32 0.0, %v4144
        %v4146 = vpop.f32.mrb[0].mxu0
        %v4147 = vadd.f32 0.0, %v4146
        %v4148 = vpop.f32.mrb[0].mxu0
        %v4149 = vadd.f32 0.0, %v4148
        %4150 = vmatprep.mubr.bf16.mxu0 %v3766
        %4151 = vmatmul.mubr.bf16.gmra.mrb[0].mxu0 %v3765
        %v4152 = vpop.f32.mrb[0].mxu0
        %v4153 = vadd.f32 0.0, %v4152
        %v4154 = vpop.f32.mrb[0].mxu0
        %v4155 = vadd.f32 0.0, %v4154
        %v4156 = vpop.f32.mrb[0].mxu0
        %v4157 = vadd.f32 0.0, %v4156
        %v4158 = vpop.f32.mrb[0].mxu0
        %v4159 = vadd.f32 0.0, %v4158
        %4160 = vmatprep.mubr.bf16.mxu0 %v3768
        %4161 = vmatmul.mubr.bf16.gmra.mrb[0].mxu0 %v3767
        %v4162 = vpop.f32.mrb[0].mxu0
        %v4163 = vadd.f32 0.0, %v4162
        %v4164 = vpop.f32.mrb[0].mxu0
        %v4165 = vadd.f32 0.0, %v4164
        %v4166 = vpop.f32.mrb[0].mxu0
        %v4167 = vadd.f32 0.0, %v4166
        %v4168 = vpop.f32.mrb[0].mxu0
        %v4169 = vadd.f32 0.0, %v4168
        %4170 = vmatprep.mubr.bf16.mxu0 %v3770
        %4171 = vmatmul.mubr.bf16.gmra.mrb[0].mxu0 %v3769
        %v4172 = vpop.f32.mrb[0].mxu0
        %v4173 = vadd.f32 0.0, %v4172
        %v4174 = vpop.f32.mrb[0].mxu0
        %v4175 = vadd.f32 0.0, %v4174
        %v4176 = vpop.f32.mrb[0].mxu0
        %v4177 = vadd.f32 0.0, %v4176
        %v4178 = vpop.f32.mrb[0].mxu0
        %v4179 = vadd.f32 0.0, %v4178
        %4180 = vmatprep.mubr.bf16.mxu0 %v3772
        %4181 = vmatmul.mubr.bf16.gmra.mrb[0].mxu0 %v3771
        %v4182 = vpop.f32.mrb[0].mxu0
        %v4183 = vadd.f32 0.0, %v4182
        %v4184 = vpop.f32.mrb[0].mxu0
        %v4185 = vadd.f32 0.0, %v4184
        %v4186 = vpop.f32.mrb[0].mxu0
        %v4187 = vadd.f32 0.0, %v4186
        %v4188 = vpop.f32.mrb[0].mxu0
        %v4189 = vadd.f32 0.0, %v4188
        %4190 = vdwg.mxu0
        %v4191 = vmax.f32 %v3840, 0.0
        %v4192 = vmax.f32 %v3842, 0.0
        %v4193 = vmax.f32 %v4033, 0.0
        %v4194 = vmax.f32 %v4035, 0.0
        %v4195 = vmax.f32 %v3844, 0.0
        %v4196 = vmax.f32 %v3846, 0.0
        %v4197 = vmax.f32 %v4037, 0.0
        %v4198 = vmax.f32 %v4039, 0.0
        %v4199 = vmax.f32 %v3850, 0.0
        %v4200 = vmax.f32 %v3852, 0.0
        %v4201 = vmax.f32 %v4043, 0.0
        %v4202 = vmax.f32 %v4045, 0.0
        %v4203 = vmax.f32 %v3854, 0.0
        %v4204 = vmax.f32 %v3856, 0.0
        %v4205 = vmax.f32 %v4047, 0.0
        %v4206 = vmax.f32 %v4049, 0.0
        %v4207 = vmax.f32 %v3860, 0.0
        %v4208 = vmax.f32 %v3862, 0.0
        %v4209 = vmax.f32 %v4053, 0.0
        %v4210 = vmax.f32 %v4055, 0.0
        %v4211 = vmax.f32 %v3864, 0.0
        %v4212 = vmax.f32 %v3866, 0.0
        %v4213 = vmax.f32 %v4057, 0.0
        %v4214 = vmax.f32 %v4059, 0.0
        %v4215 = vmax.f32 %v3870, 0.0
        %v4216 = vmax.f32 %v3872, 0.0
        %v4217 = vmax.f32 %v4063, 0.0
        %v4218 = vmax.f32 %v4065, 0.0
        %v4219 = vmax.f32 %v3874, 0.0
        %v4220 = vmax.f32 %v3876, 0.0
        %v4221 = vmax.f32 %v4067, 0.0
        %v4222 = vmax.f32 %v4069, 0.0
        %v4223 = vmax.f32 %v3880, 0.0
        %v4224 = vmax.f32 %v3882, 0.0
        %v4225 = vmax.f32 %v4073, 0.0
        %v4226 = vmax.f32 %v4075, 0.0
        %v4227 = vmax.f32 %v3884, 0.0
        %v4228 = vmax.f32 %v3886, 0.0
        %v4229 = vmax.f32 %v4077, 0.0
        %v4230 = vmax.f32 %v4079, 0.0
        %v4231 = vmax.f32 %v3890, 0.0
        %v4232 = vmax.f32 %v3892, 0.0
        %v4233 = vmax.f32 %v4083, 0.0
        %v4234 = vmax.f32 %v4085, 0.0
        %v4235 = vmax.f32 %v3894, 0.0
        %v4236 = vmax.f32 %v3896, 0.0
        %v4237 = vmax.f32 %v4087, 0.0
        %v4238 = vmax.f32 %v4089, 0.0
        %v4239 = vmax.f32 %v3900, 0.0
        %v4240 = vmax.f32 %v3902, 0.0
        %v4241 = vmax.f32 %v4093, 0.0
        %v4242 = vmax.f32 %v4095, 0.0
        %v4243 = vmax.f32 %v3904, 0.0
        %v4244 = vmax.f32 %v3906, 0.0
        %v4245 = vmax.f32 %v4097, 0.0
        %v4246 = vmax.f32 %v4099, 0.0
        %v4247 = vmax.f32 %v3910, 0.0
        %v4248 = vmax.f32 %v3912, 0.0
        %v4249 = vmax.f32 %v4103, 0.0
        %v4250 = vmax.f32 %v4105, 0.0
        %v4251 = vmax.f32 %v3914, 0.0
        %v4252 = vmax.f32 %v3916, 0.0
        %v4253 = vmax.f32 %v4107, 0.0
        %v4254 = vmax.f32 %v4109, 0.0
        %v4255 = vmax.f32 %v3920, 0.0
        %v4256 = vmax.f32 %v3922, 0.0
        %v4257 = vmax.f32 %v4113, 0.0
        %v4258 = vmax.f32 %v4115, 0.0
        %v4259 = vmax.f32 %v3924, 0.0
        %v4260 = vmax.f32 %v3926, 0.0
        %v4261 = vmax.f32 %v4117, 0.0
        %v4262 = vmax.f32 %v4119, 0.0
        %v4263 = vmax.f32 %v3930, 0.0
        %v4264 = vmax.f32 %v3932, 0.0
        %v4265 = vmax.f32 %v4123, 0.0
        %v4266 = vmax.f32 %v4125, 0.0
        %v4267 = vmax.f32 %v3934, 0.0
        %v4268 = vmax.f32 %v3936, 0.0
        %v4269 = vmax.f32 %v4127, 0.0
        %v4270 = vmax.f32 %v4129, 0.0
        %v4271 = vmax.f32 %v3940, 0.0
        %v4272 = vmax.f32 %v3942, 0.0
        %v4273 = vmax.f32 %v4133, 0.0
        %v4274 = vmax.f32 %v4135, 0.0
        %v4275 = vmax.f32 %v3944, 0.0
        %v4276 = vmax.f32 %v3946, 0.0
        %v4277 = vmax.f32 %v4137, 0.0
        %v4278 = vmax.f32 %v4139, 0.0
        %v4279 = vmax.f32 %v3950, 0.0
        %v4280 = vmax.f32 %v3952, 0.0
        %v4281 = vmax.f32 %v4143, 0.0
        %v4282 = vmax.f32 %v4145, 0.0
        %v4283 = vmax.f32 %v3954, 0.0
        %v4284 = vmax.f32 %v3956, 0.0
        %v4285 = vmax.f32 %v4147, 0.0
        %v4286 = vmax.f32 %v4149, 0.0
        %v4287 = vmax.f32 %v3960, 0.0
        %v4288 = vmax.f32 %v3962, 0.0
        %v4289 = vmax.f32 %v4153, 0.0
        %v4290 = vmax.f32 %v4155, 0.0
        %v4291 = vmax.f32 %v3964, 0.0
        %v4292 = vmax.f32 %v3966, 0.0
        %v4293 = vmax.f32 %v4157, 0.0
        %v4294 = vmax.f32 %v4159, 0.0
        %v4295 = vmax.f32 %v3970, 0.0
        %v4296 = vmax.f32 %v3972, 0.0
        %v4297 = vmax.f32 %v4163, 0.0
        %v4298 = vmax.f32 %v4165, 0.0
        %v4299 = vmax.f32 %v3974, 0.0
        %v4300 = vmax.f32 %v3976, 0.0
        %v4301 = vmax.f32 %v4167, 0.0
        %v4302 = vmax.f32 %v4169, 0.0
        %v4303 = vmax.f32 %v3980, 0.0
        %v4304 = vmax.f32 %v3982, 0.0
        %v4305 = vmax.f32 %v4173, 0.0
        %v4306 = vmax.f32 %v4175, 0.0
        %v4307 = vmax.f32 %v3984, 0.0
        %v4308 = vmax.f32 %v3986, 0.0
        %v4309 = vmax.f32 %v4177, 0.0
        %v4310 = vmax.f32 %v4179, 0.0
        %v4311 = vmax.f32 %v3990, 0.0
        %v4312 = vmax.f32 %v3992, 0.0
        %v4313 = vmax.f32 %v4183, 0.0
        %v4314 = vmax.f32 %v4185, 0.0
        %v4315 = vmax.f32 %v3994, 0.0
        %v4316 = vmax.f32 %v3996, 0.0
        %v4317 = vmax.f32 %v4187, 0.0
        %v4318 = vmax.f32 %v4189, 0.0
        %v4319 = vpack.c.bf16 %v4195, %v4191
        %v4320 = vpack.c.bf16 %v4196, %v4192
        %v4321 = vpack.c.bf16 %v4197, %v4193
        %v4322 = vpack.c.bf16 %v4198, %v4194
        %v4323 = vpack.c.bf16 %v4203, %v4199
        %v4324 = vpack.c.bf16 %v4204, %v4200
        %v4325 = vpack.c.bf16 %v4205, %v4201
        %v4326 = vpack.c.bf16 %v4206, %v4202
        %v4327 = vpack.c.bf16 %v4211, %v4207
        %v4328 = vpack.c.bf16 %v4212, %v4208
        %v4329 = vpack.c.bf16 %v4213, %v4209
        %v4330 = vpack.c.bf16 %v4214, %v4210
        %v4331 = vpack.c.bf16 %v4219, %v4215
        %v4332 = vpack.c.bf16 %v4220, %v4216
        %v4333 = vpack.c.bf16 %v4221, %v4217
        %v4334 = vpack.c.bf16 %v4222, %v4218
        %v4335 = vpack.c.bf16 %v4227, %v4223
        %v4336 = vpack.c.bf16 %v4228, %v4224
        %v4337 = vpack.c.bf16 %v4229, %v4225
        %v4338 = vpack.c.bf16 %v4230, %v4226
        %v4339 = vpack.c.bf16 %v4235, %v4231
        %v4340 = vpack.c.bf16 %v4236, %v4232
        %v4341 = vpack.c.bf16 %v4237, %v4233
        %v4342 = vpack.c.bf16 %v4238, %v4234
        %v4343 = vpack.c.bf16 %v4243, %v4239
        %v4344 = vpack.c.bf16 %v4244, %v4240
        %v4345 = vpack.c.bf16 %v4245, %v4241
        %v4346 = vpack.c.bf16 %v4246, %v4242
        %v4347 = vpack.c.bf16 %v4251, %v4247
        %v4348 = vpack.c.bf16 %v4252, %v4248
        %v4349 = vpack.c.bf16 %v4253, %v4249
        %v4350 = vpack.c.bf16 %v4254, %v4250
        %v4351 = vpack.c.bf16 %v4259, %v4255
        %v4352 = vpack.c.bf16 %v4260, %v4256
        %v4353 = vpack.c.bf16 %v4261, %v4257
        %v4354 = vpack.c.bf16 %v4262, %v4258
        %v4355 = vpack.c.bf16 %v4267, %v4263
        %v4356 = vpack.c.bf16 %v4268, %v4264
        %v4357 = vpack.c.bf16 %v4269, %v4265
        %v4358 = vpack.c.bf16 %v4270, %v4266
        %v4359 = vpack.c.bf16 %v4275, %v4271
        %v4360 = vpack.c.bf16 %v4276, %v4272
        %v4361 = vpack.c.bf16 %v4277, %v4273
        %v4362 = vpack.c.bf16 %v4278, %v4274
        %v4363 = vpack.c.bf16 %v4283, %v4279
        %v4364 = vpack.c.bf16 %v4284, %v4280
        %v4365 = vpack.c.bf16 %v4285, %v4281
        %v4366 = vpack.c.bf16 %v4286, %v4282
        %v4367 = vpack.c.bf16 %v4291, %v4287
        %v4368 = vpack.c.bf16 %v4292, %v4288
        %v4369 = vpack.c.bf16 %v4293, %v4289
        %v4370 = vpack.c.bf16 %v4294, %v4290
        %v4371 = vpack.c.bf16 %v4299, %v4295
        %v4372 = vpack.c.bf16 %v4300, %v4296
        %v4373 = vpack.c.bf16 %v4301, %v4297
        %v4374 = vpack.c.bf16 %v4302, %v4298
        %v4375 = vpack.c.bf16 %v4307, %v4303
        %v4376 = vpack.c.bf16 %v4308, %v4304
        %v4377 = vpack.c.bf16 %v4309, %v4305
        %v4378 = vpack.c.bf16 %v4310, %v4306
        %v4379 = vpack.c.bf16 %v4315, %v4311
        %v4380 = vpack.c.bf16 %v4316, %v4312
        %v4381 = vpack.c.bf16 %v4317, %v4313
        %v4382 = vpack.c.bf16 %v4318, %v4314
        %s4383 = smul.u32 %s2848, 2
        %s4384 = smul.addr %s4383, 2
        %s4385 = scalar_lea.vmem %s11, %s4384
        %v4386 = vld [vmem:[%s4385] sm:$0xf]
        %v4389 = vunpack.c.l.s4 1983009808
        %v4390 = vunpack.c.0.s8 %v4389
        %v4391 = vlaneseq
        %v4392 = vshrl.u32 %v4391, 7
        %v4393 = vsub.s32 %v4390, %v4392
        %v4394 = vrot.slane %v4386, %v4393
        %v4395 = vcombine.high %v4394, %v4394
        %4398 = vmatprep.subr.bf16.mxu0 %v4320
        %4399 = vmatpush1.bf16.msra.mxu0 %v4319
        %4400 = vmatprep.subr.bf16.mxu0 %v4324
        %4401 = vmatpush1.bf16.msra.mxu0 %v4323
        %4402 = vmatprep.subr.bf16.mxu0 %v4328
        %4403 = vmatpush1.bf16.msra.mxu0 %v4327
        %4404 = vmatprep.subr.bf16.mxu0 %v4332
        %4405 = vmatpush1.bf16.msra.mxu0 %v4331
        %4406 = vmatprep.subr.bf16.mxu0 %v4336
        %4407 = vmatpush1.bf16.msra.mxu0 %v4335
        %4408 = vmatprep.subr.bf16.mxu0 %v4340
        %4409 = vmatpush1.bf16.msra.mxu0 %v4339
        %4410 = vmatprep.subr.bf16.mxu0 %v4344
        %4411 = vmatpush1.bf16.msra.mxu0 %v4343
        %4412 = vmatprep.subr.bf16.mxu0 %v4348
        %4413 = vmatpush1.bf16.msra.mxu0 %v4347
        %4414 = vmatprep.subr.bf16.mxu0 %v4352
        %4415 = vmatpush1.bf16.msra.mxu0 %v4351
        %4416 = vmatprep.subr.bf16.mxu0 %v4356
        %4417 = vmatpush1.bf16.msra.mxu0 %v4355
        %4418 = vmatprep.subr.bf16.mxu0 %v4360
        %4419 = vmatpush1.bf16.msra.mxu0 %v4359
        %4420 = vmatprep.subr.bf16.mxu0 %v4364
        %4421 = vmatpush1.bf16.msra.mxu0 %v4363
        %4422 = vmatprep.subr.bf16.mxu0 %v4368
        %4423 = vmatpush1.bf16.msra.mxu0 %v4367
        %4424 = vmatprep.subr.bf16.mxu0 %v4372
        %4425 = vmatpush1.bf16.msra.mxu0 %v4371
        %4426 = vmatprep.subr.bf16.mxu0 %v4376
        %4427 = vmatpush1.bf16.msra.mxu0 %v4375
        %4428 = vmatprep.subr.bf16.mxu0 %v4380
        %4429 = vmatpush1.bf16.msra.mxu0 %v4379
        %4430 = vmatprep.mubr.bf16.mxu0 %v4395
        %4431 = vmatmul.mubr.bf16.gmra.mrb[0].mxu0 %v4394
        %v4432 = vpop.f32.mrb[0].mxu0
        %v4433 = vadd.f32 0.0, %v4432
        %v4434 = vpop.f32.mrb[0].mxu0
        %v4435 = vadd.f32 0.0, %v4434
        %v4436 = vpop.f32.mrb[0].mxu0
        %v4437 = vpop.f32.mrb[0].mxu0
        %4438 = vdwg.mxu0
        %4439 = vmatprep.subr.bf16.mxu0 %v4322
        %4440 = vmatpush1.bf16.msra.mxu0 %v4321
        %4441 = vmatprep.subr.bf16.mxu0 %v4326
        %4442 = vmatpush1.bf16.msra.mxu0 %v4325
        %4443 = vmatprep.subr.bf16.mxu0 %v4330
        %4444 = vmatpush1.bf16.msra.mxu0 %v4329
        %4445 = vmatprep.subr.bf16.mxu0 %v4334
        %4446 = vmatpush1.bf16.msra.mxu0 %v4333
        %4447 = vmatprep.subr.bf16.mxu0 %v4338
        %4448 = vmatpush1.bf16.msra.mxu0 %v4337
        %4449 = vmatprep.subr.bf16.mxu0 %v4342
        %4450 = vmatpush1.bf16.msra.mxu0 %v4341
        %4451 = vmatprep.subr.bf16.mxu0 %v4346
        %4452 = vmatpush1.bf16.msra.mxu0 %v4345
        %4453 = vmatprep.subr.bf16.mxu0 %v4350
        %4454 = vmatpush1.bf16.msra.mxu0 %v4349
        %4455 = vmatprep.subr.bf16.mxu0 %v4354
        %4456 = vmatpush1.bf16.msra.mxu0 %v4353
        %4457 = vmatprep.subr.bf16.mxu0 %v4358
        %4458 = vmatpush1.bf16.msra.mxu0 %v4357
        %4459 = vmatprep.subr.bf16.mxu0 %v4362
        %4460 = vmatpush1.bf16.msra.mxu0 %v4361
        %4461 = vmatprep.subr.bf16.mxu0 %v4366
        %4462 = vmatpush1.bf16.msra.mxu0 %v4365
        %4463 = vmatprep.subr.bf16.mxu0 %v4370
        %4464 = vmatpush1.bf16.msra.mxu0 %v4369
        %4465 = vmatprep.subr.bf16.mxu0 %v4374
        %4466 = vmatpush1.bf16.msra.mxu0 %v4373
        %4467 = vmatprep.subr.bf16.mxu0 %v4378
        %4468 = vmatpush1.bf16.msra.mxu0 %v4377
        %4469 = vmatprep.subr.bf16.mxu0 %v4382
        %4470 = vmatpush1.bf16.msra.mxu0 %v4381
        %4471 = vmatprep.mubr.bf16.mxu0 %v4395
        %4472 = vmatmul.mubr.bf16.gmra.mrb[0].mxu0 %v4394
        %v4473 = vpop.f32.mrb[0].mxu0
        %v4474 = vadd.f32 0.0, %v4473
        %v4475 = vpop.f32.mrb[0].mxu0
        %v4476 = vadd.f32 0.0, %v4475
        %v4477 = vpop.f32.mrb[0].mxu0
        %v4478 = vpop.f32.mrb[0].mxu0
        %4479 = vdwg.mxu0
        %v4480 = vtanh.pop %v4433
        %v4481 = vtanh.pop %v4435
        %v4482 = vtanh.pop %v4474
        %v4483 = vtanh.pop %v4476
        %v4484 = vstv %s2848
        %vm4485 = vcmp.eq.s32.totalorder %v466, %v4484
        %v4486 = vsel %vm2784, 1, 0
        %v4487 = vsel %vm2785, 1, 0
        %v4489 = vunpack.c.l.s4 1966171168
        %v4490 = vunpack.c.0.s8 %v4489
        %v4491 = vlaneseq
        %v4492 = vshrl.u32 %v4491, 7
        %v4493 = vsub.s32 %v4490, %v4492
        %v4494 = vrot.slane %v4486, %v4493
        %v4496 = vunpack.c.l.s4 1966171168
        %v4497 = vunpack.c.0.s8 %v4496
        %v4498 = vlaneseq
        %v4499 = vshrl.u32 %v4498, 7
        %v4500 = vsub.s32 %v4497, %v4499
        %v4501 = vrot.slane %v4487, %v4500
        %v4502 = vcombine.low %v4494, %v4501
        %v4504 = vunpack.c.l.s4 1966171168
        %v4505 = vunpack.c.0.s8 %v4504
        %v4506 = vlaneseq
        %v4507 = vshrl.u32 %v4506, 7
        %v4508 = vsub.s32 %v4505, %v4507
        %v4509 = vrot.slane %v4502, %v4508
        %vm4510 = vcmp.ne.s32.totalorder %v4509, 0
        %vm4511 = vmand %vm4485, %vm4510
        %v4512 = vld [vmem:[%s455] sm:$0x77]
        %v4513 = vld [vmem:[%s455 + $0x8] sm:$0x77]
        %v4514 = vsel %vm4511, 1, 0
        %v4515 = vlaneseq
        %v4516 = vshrl.u32 %v4515, 7
        %v4517 = vsub.s32 0, %v4516
        %v4518 = vrot.slane %v4514, %v4517
        %v4519 = vlaneseq
        %v4520 = vshrl.u32 %v4519, 7
        %v4521 = vsub.s32 1, %v4520
        %v4522 = vrot.slane %v4514, %v4521
        %v4523 = vlaneseq
        %v4524 = vshrl.u32 %v4523, 7
        %v4525 = vsub.s32 2, %v4524
        %v4526 = vrot.slane %v4514, %v4525
        %v4527 = vlaneseq
        %v4528 = vshrl.u32 %v4527, 7
        %v4529 = vsub.s32 3, %v4528
        %v4530 = vrot.slane %v4514, %v4529
        %vm4531 = vcmp.eq.s32.totalorder %v4518, 1
        %vm4532 = vcmp.eq.s32.totalorder %v4522, 1
        %vm4533 = vcmp.eq.s32.totalorder %v4526, 1
        %vm4534 = vcmp.eq.s32.totalorder %v4530, 1
        %v4537 = vcombine.high %v4512, %v4512
        %v4538 = vcombine.high %v4513, %v4513
        %v4541 = vsel %vm4531, %v4480, %v4512
        %v4542 = vsel %vm4532, %v4481, %v4537
        %v4543 = vsel %vm4533, %v4482, %v4513
        %v4544 = vsel %vm4534, %v4483, %v4538
        %v4549 = vcombine.low %v4541, %v4542
        %v4550 = vcombine.low %v4543, %v4544
        %4553 = vst [vmem:[%s455] sm:$0x77] %v4549
        %4554 = vst [vmem:[%s455 + $0x8] sm:$0x77] %v4550
      $region65: #{clusterised_linear_network_forward.1} parent=59 // loop_footer
        %s2850 = sadd.s32 %s2848, 1
      $region66: #{clusterised_linear_network_forward.1} parent=59 // loop_footer_branch
        %2847 = sbr.rel target = $region62
      $region67: #{clusterised_linear_network_forward.1} parent=59 // loop_exit
        _
      %s4555 = smul.u32 4, %s33
      %p4556 = scmp.lt.s32.totalorder %s4555, 31
      %s4557 = scalar_select %p4556, %s4555, 31
      %s4558 = smul.addr %s4557, 4
      %s4559 = scalar_lea.vmem %s12, %s4558
      // Predicated region
      $region68: #{clusterised_linear_network_forward.1} parent=59 // pred_check
        %p4560 = pneg %p286
      $region69: #{clusterised_linear_network_forward.1} parent=59 // pred_check_branch
        %4562 = sbr.rel (%p4560) target = $region71
      $region70: #{clusterised_linear_network_forward.1} parent=59 // pred_region
        %s4563 = smul.u32 4, %s33
      $region71: #{clusterised_linear_network_forward.1} parent=59 // pred_fallthru
        _
    $region60: #{clusterised_linear_network_forward.1} parent=5 // pred_fallthru
      _
    %p4564 = scmp.le.s32.totalorder 2, %s28
    // Predicated region
    $region72: #{clusterised_linear_network_forward.1} parent=5 // pred_check
      %p4565 = pneg %p4564
    $region73: #{clusterised_linear_network_forward.1} parent=5 // pred_check_branch
      %4567 = sbr.rel (%p4565) target = $region75
    $region74: #{clusterised_linear_network_forward.1} parent=5 // pred_region
      %s4568 = ssub.s32 %s28, 2
      // Predicated region
      $region76: #{clusterised_linear_network_forward.1} parent=74 // pred_check
        %p4569 = pneg %p292
      $region77: #{clusterised_linear_network_forward.1} parent=74 // pred_check_branch
        %4571 = sbr.rel (%p4569) target = $region79
      $region78: #{clusterised_linear_network_forward.1} parent=74 // pred_region
        %s4572 = smul.u32 4, %s34
        %p4573 = scmp.lt.s32.totalorder %s4572, 31
        %s4574 = scalar_select %p4573, %s4572, 31
        %s4575 = smul.addr %s4574, 4
        %s4576 = scalar_lea.vmem %s12, %s4575
      $region79: #{clusterised_linear_network_forward.1} parent=74 // pred_fallthru
        _
    $region75: #{clusterised_linear_network_forward.1} parent=5 // pred_fallthru
      _
  $region6: #{clusterised_linear_network_forward.1} parent=0 // loop_footer
    %s32 = sadd.s32 1, %s28
  $region7: #{clusterised_linear_network_forward.1} parent=0 // loop_footer_branch
    %27 = sbr.rel target = $region3
  $region8: #{clusterised_linear_network_forward.1} parent=0 // loop_exit
    _

</llo_original>
